<compile_context>
chip_gen: v7x
topology: tpu7x:2x2x1
jax: 0.10.0
libtpu: 0.0.40
codegen_flags: <defaults>
</compile_context>

<pallas_src>
import functools

import jax
import jax.numpy as jnp
from jax import lax
from jax.experimental import pallas as pl
from jax.experimental.pallas import tpu as pltpu

# Make the pure-JAX reference use full-accuracy f32 matmuls so it matches the
# in-kernel MXU f32 path.
jax.config.update("jax_default_matmul_precision", "highest")


# ----------------------------------------------------------------------------
# Kernel 1: fc1 -> ReLU -> MultiheadAttention -> fc2 -> ReLU -> LayerNorm(concat)
# ----------------------------------------------------------------------------
def qsacm_embed_kernel(x_ref, wfc1_ref, bfc1_ref,
                       wq_ref, bq_ref, wk_ref, bk_ref, wv_ref, bv_ref,
                       wo_ref, bo_ref, wfc2_ref, bfc2_ref,
                       gamma_ref, beta_ref, out_ref, *, num_heads, ln_eps):
    x = x_ref[...]                                                  # (n, E)

    # fc1 + ReLU
    h = jnp.dot(x, wfc1_ref[...], preferred_element_type=jnp.float32) + bfc1_ref[...]
    h = jnp.maximum(h, 0.0)                                         # (n, A)

    # in-projections of the self-attention
    q = jnp.dot(h, wq_ref[...], preferred_element_type=jnp.float32) + bq_ref[...]
    k = jnp.dot(h, wk_ref[...], preferred_element_type=jnp.float32) + bk_ref[...]
    v = jnp.dot(h, wv_ref[...], preferred_element_type=jnp.float32) + bv_ref[...]

    attn_dim = q.shape[-1]
    head_dim = attn_dim // num_heads
    scale = 1.0 / (head_dim ** 0.5)

    heads = []
    for hi in range(num_heads):                       # static unrolled loop
        lo = hi * head_dim
        qh = q[:, lo:lo + head_dim]                   # (n, hd)
        kh = k[:, lo:lo + head_dim]
        vh = v[:, lo:lo + head_dim]
        # scores = qh @ kh^T  (dot_general avoids an explicit transpose)
        s = lax.dot_general(qh, kh, (((1,), (1,)), ((), ())),
                            preferred_element_type=jnp.float32) * scale   # (n, n)
        s = s - jnp.max(s, axis=-1, keepdims=True)
        e = jnp.exp(s)
        p = e / jnp.sum(e, axis=-1, keepdims=True)
        heads.append(jnp.dot(p, vh, preferred_element_type=jnp.float32))  # (n, hd)

    attn = jnp.concatenate(heads, axis=-1)                                # (n, A)
    attn = jnp.dot(attn, wo_ref[...], preferred_element_type=jnp.float32) + bo_ref[...]

    # fc2 + ReLU
    t = jnp.dot(attn, wfc2_ref[...], preferred_element_type=jnp.float32) + bfc2_ref[...]
    t = jnp.maximum(t, 0.0)                                               # (n, E)

    # LayerNorm(hstack(x, t))   -> lane-dense (n, 2E) output
    z = jnp.concatenate([x, t], axis=-1)                                  # (n, 2E)
    mu = jnp.mean(z, axis=-1, keepdims=True)
    zc = z - mu
    var = jnp.mean(zc * zc, axis=-1, keepdims=True)
    zn = zc * lax.rsqrt(var + ln_eps)
    out_ref[...] = zn * gamma_ref[...] + beta_ref[...]


# ----------------------------------------------------------------------------
# Kernel 2: DKM soft-kmeans (whole iterative loop inside one kernel)
# ----------------------------------------------------------------------------
def dkm_kernel(x_ref, c0_ref, c_out_ref, a_out_ref, *,
               temp, threshold, max_iter, eps):
    X = x_ref[...]                                        # (n, D)
    C0 = c0_ref[...]                                      # (k, D)
    n = X.shape[0]

    # hoisted loop-invariants
    Xe = X[:, None, :]                                    # (n, 1, D)
    ones_col = jnp.ones((n, 1), jnp.float32)

    def dkm_step(C):
        # -cdist(X, C, p=2): exact squared differences (no cancellation)
        diff = Xe - C[None, :, :]                         # (n, k, D)
        d = -jnp.sqrt(jnp.sum(diff * diff, axis=-1))      # (n, k)
        logits = d * (1.0 / temp)
        logits = logits - jnp.max(logits, axis=1, keepdims=True)
        e = jnp.exp(logits)
        a = e / jnp.sum(e, axis=1, keepdims=True)         # softmax over clusters
        # a_sum as a (k, 1) column via dot_general (keeps layout, no relayout)
        a_sum = lax.dot_general(a, ones_col, (((0,), (0,)), ((), ())),
                                preferred_element_type=jnp.float32) + eps   # (k, 1)
        num = lax.dot_general(a, X, (((0,), (0,)), ((), ())),
                              preferred_element_type=jnp.float32)           # (k, D)
        return a, num / a_sum

    a0, C_new0 = dkm_step(C0)
    diff0 = jnp.sum(jnp.abs(C_new0 - C0))

    # torch while-loop emulated by a fixed-trip fori_loop with arithmetic
    # convergence gating (once diff <= threshold the state is frozen).
    def body(_, state):
        C, a, C_new, diff = state
        g = (diff > threshold).astype(jnp.float32)        # 1.0 = keep iterating
        C_cur = g * C_new + (1.0 - g) * C
        a_nxt, C_new_nxt = dkm_step(C_cur)
        diff_nxt = jnp.sum(jnp.abs(C_new_nxt - C_cur))
        return (g * C_cur + (1.0 - g) * C,
                g * a_nxt + (1.0 - g) * a,
                g * C_new_nxt + (1.0 - g) * C_new,
                g * diff_nxt + (1.0 - g) * diff)

    C_f, a_f, _, _ = lax.fori_loop(0, max_iter, body, (C0, a0, C_new0, diff0))
    c_out_ref[...] = C_f
    a_out_ref[...] = a_f


# ----------------------------------------------------------------------------
# Wrappers
# ----------------------------------------------------------------------------
def _vmem_spec():
    return pl.BlockSpec(memory_space=pltpu.MemorySpace.VMEM)


def qsacm_embed(x, params, num_heads):
    n, emb_dim = x.shape
    attn_dim = params["Wfc1"].shape[0]
    assert attn_dim % num_heads == 0
    args = [
        x,
        params["Wfc1"].T, params["bfc1"].reshape(1, attn_dim),
        params["Wq"].T, params["bq"].reshape(1, attn_dim),
        params["Wk"].T, params["bk"].reshape(1, attn_dim),
        params["Wv"].T, params["bv"].reshape(1, attn_dim),
        params["Wo"].T, params["bo"].reshape(1, attn_dim),
        params["Wfc2"].T, params["bfc2"].reshape(1, emb_dim),
        params["gamma"].reshape(1, 2 * emb_dim),
        params["beta"].reshape(1, 2 * emb_dim),
    ]
    kern = functools.partial(qsacm_embed_kernel, num_heads=num_heads, ln_eps=1e-5)
    return pl.pallas_call(
        kern,
        out_shape=jax.ShapeDtypeStruct((n, 2 * emb_dim), jnp.float32),
        in_specs=[_vmem_spec()] * len(args),
        out_specs=_vmem_spec(),
    )(*args)


def dkm_cluster(X, C_init, temp=0.5, threshold=1e-4, max_iter=100, eps=1e-6):
    n, D = X.shape
    k = C_init.shape[0]
    kern = functools.partial(dkm_kernel, temp=temp, threshold=threshold,
                             max_iter=max_iter, eps=eps)
    return pl.pallas_call(
        kern,
        out_shape=(jax.ShapeDtypeStruct((k, D), jnp.float32),
                   jax.ShapeDtypeStruct((n, k), jnp.float32)),
        in_specs=[_vmem_spec(), _vmem_spec()],
        out_specs=(_vmem_spec(), _vmem_spec()),
    )(X, C_init)


def qsacm_forward(qp_orig, params, k_cl, init_key, num_heads):
    """qp_orig: (n, emb_dim) sentence embeddings  ->  (C, a, embeddings)."""
    emb = qsacm_embed(qp_orig, params, num_heads)
    # TODO(synk): random.sample / kmeans_plusplus centroid init is host-side
    # randomness with no Pallas equivalent; deterministic jax.random.choice used.
    idx = jax.random.choice(init_key, emb.shape[0], shape=(k_cl,), replace=False)
    init_c = emb[idx]
    C, a = dkm_cluster(emb, init_c)
    return C, a, emb


# ----------------------------------------------------------------------------
# Pure-JAX reference (mirrors the PyTorch forward) for correctness checking
# ----------------------------------------------------------------------------
def qsacm_embed_ref(x, p, num_heads, ln_eps=1e-5):
    h = jnp.maximum(x @ p["Wfc1"].T + p["bfc1"], 0.0)
    q = h @ p["Wq"].T + p["bq"]
    k = h @ p["Wk"].T + p["bk"]
    v = h @ p["Wv"].T + p["bv"]
    attn_dim = q.shape[-1]
    hd = attn_dim // num_heads
    heads = []
    for hi in range(num_heads):
        sl = slice(hi * hd, (hi + 1) * hd)
        s = (q[:, sl] @ k[:, sl].T) / (hd ** 0.5)
        heads.append(jax.nn.softmax(s, axis=-1) @ v[:, sl])
    attn = jnp.concatenate(heads, axis=-1) @ p["Wo"].T + p["bo"]
    t = jnp.maximum(attn @ p["Wfc2"].T + p["bfc2"], 0.0)
    z = jnp.concatenate([x, t], axis=-1)
    mu = z.mean(-1, keepdims=True)
    var = ((z - mu) ** 2).mean(-1, keepdims=True)
    return (z - mu) / jnp.sqrt(var + ln_eps) * p["gamma"] + p["beta"]


def dkm_ref(X, C_init, temp=0.5, threshold=1e-4, max_iter=100, eps=1e-6):
    @jax.jit
    def step(C):
        d = -jnp.sqrt(jnp.sum((X[:, None, :] - C[None, :, :]) ** 2, axis=-1))
        logits = d / temp
        logits = logits - jnp.max(logits, axis=1, keepdims=True)
        e = jnp.exp(logits)
        a = e / jnp.sum(e, axis=1, keepdims=True)
        a_sum = jnp.sum(a, axis=0) + eps
        C_new = (a.T @ X) / a_sum[:, None]
        return a, C_new

    C = C_init
    a, C_new = step(C)
    diff = float(jnp.sum(jnp.abs(C_new - C)))
    i = 0
    while diff > threshold and i < max_iter:
        C = C_new
        a, C_new = step(C)
        diff = float(jnp.sum(jnp.abs(C_new - C)))
        i += 1
    return C, a


def qsacm_forward_ref(qp_orig, params, k_cl, init_key, num_heads):
    emb = qsacm_embed_ref(qp_orig, params, num_heads)
    idx = jax.random.choice(init_key, emb.shape[0], shape=(k_cl,), replace=False)
    return (*dkm_ref(emb, emb[idx]), emb)


# ----------------------------------------------------------------------------
# Parameter construction (same shapes as the nn.Module; synthetic values)
# ----------------------------------------------------------------------------
def init_params(key, emb_dim, attn_dim):
    ks = jax.random.split(key, 14)

    def lin(kw, kb, fan_in, out_f, in_f):
        s = 1.0 / (fan_in ** 0.5)
        return (jax.random.uniform(kw, (out_f, in_f), jnp.float32, -s, s),
                jax.random.uniform(kb, (out_f,), jnp.float32, -s, s))

    Wfc1, bfc1 = lin(ks[0], ks[1], emb_dim, attn_dim, emb_dim)
    Wq, bq = lin(ks[2], ks[3], attn_dim, attn_dim, attn_dim)
    Wk, bk = lin(ks[4], ks[5], attn_dim, attn_dim, attn_dim)
    Wv, bv = lin(ks[6], ks[7], attn_dim, attn_dim, attn_dim)
    Wo, bo = lin(ks[8], ks[9], attn_dim, attn_dim, attn_dim)
    Wfc2, bfc2 = lin(ks[10], ks[11], attn_dim, emb_dim, attn_dim)
    gamma = 1.0 + 0.1 * jax.random.normal(ks[12], (2 * emb_dim,), jnp.float32)
    beta = 0.1 * jax.random.normal(ks[13], (2 * emb_dim,), jnp.float32)
    return dict(Wfc1=Wfc1, bfc1=bfc1, Wq=Wq, bq=bq, Wk=Wk, bk=bk, Wv=Wv, bv=bv,
                Wo=Wo, bo=bo, Wfc2=Wfc2, bfc2=bfc2, gamma=gamma, beta=beta)


if __name__ == "__main__":
    # TODO(synk): the SentenceTransformer encoder (self.qp_model) is a pretrained
    # HF transformer with no Pallas translation; kernels start from synthetic
    # sentence embeddings qp_orig.
    N = 16          # number of passages (sequence length for self-attention)
    EMB_DIM = 64    # sentence embedding dim
    ATTN_DIM = 64   # attention dim
    HEADS = 2
    K_CL = 3        # number of clusters

    key = jax.random.PRNGKey(0)
    k_emb, k_par, k_init = jax.random.split(key, 3)
    qp_orig = jax.random.normal(k_emb, (N, EMB_DIM), jnp.float32)
    params = init_params(k_par, EMB_DIM, ATTN_DIM)

    C, a, emb = qsacm_forward(qp_orig, params, K_CL, k_init, num_heads=HEADS)
    C, a, emb = jax.block_until_ready((C, a, emb))

    C_ref, a_ref, emb_ref = qsacm_forward_ref(qp_orig, params, K_CL, k_init,
                                              num_heads=HEADS)

    assert emb.shape == (N, 2 * EMB_DIM)
    assert C.shape == (K_CL, 2 * EMB_DIM)
    assert a.shape == (N, K_CL)
    assert jnp.allclose(emb, emb_ref, atol=2e-2, rtol=2e-2), "embedding mismatch"
    assert jnp.allclose(C, C_ref, atol=2e-2, rtol=2e-2), "DKM centroid mismatch"
    assert jnp.allclose(a, a_ref, atol=2e-2, rtol=2e-2), "DKM assignment mismatch"

    print("KERNEL_OK")
</pallas_src>

<mosaic_0001>
module attributes {stable_mosaic.version = 11 : i64} {
  func.func @qsacm_embed_kernel(%arg0: memref<16x64xf32, #tpu.memory_space<vmem>>, %arg1: memref<64x64xf32, #tpu.memory_space<vmem>>, %arg2: memref<1x64xf32, #tpu.memory_space<vmem>>, %arg3: memref<64x64xf32, #tpu.memory_space<vmem>>, %arg4: memref<1x64xf32, #tpu.memory_space<vmem>>, %arg5: memref<64x64xf32, #tpu.memory_space<vmem>>, %arg6: memref<1x64xf32, #tpu.memory_space<vmem>>, %arg7: memref<64x64xf32, #tpu.memory_space<vmem>>, %arg8: memref<1x64xf32, #tpu.memory_space<vmem>>, %arg9: memref<64x64xf32, #tpu.memory_space<vmem>>, %arg10: memref<1x64xf32, #tpu.memory_space<vmem>>, %arg11: memref<64x64xf32, #tpu.memory_space<vmem>>, %arg12: memref<1x64xf32, #tpu.memory_space<vmem>>, %arg13: memref<1x128xf32, #tpu.memory_space<vmem>>, %arg14: memref<1x128xf32, #tpu.memory_space<vmem>>, %arg15: memref<16x128xf32, #tpu.memory_space<vmem>>) attributes {dimension_semantics = [], scalar_prefetch = 0 : i64, scratch_operands = 0 : i64, tpu.core_type = #tpu.core_type<tc>} {
    %c0 = arith.constant 0 : index
    %c0_0 = arith.constant 0 : index
    %0 = vector.load %arg0[%c0, %c0_0] : memref<16x64xf32, #tpu.memory_space<vmem>>, vector<16x64xf32>
    %c0_1 = arith.constant 0 : index
    %c0_2 = arith.constant 0 : index
    %1 = vector.load %arg1[%c0_1, %c0_2] : memref<64x64xf32, #tpu.memory_space<vmem>>, vector<64x64xf32>
    %cst = arith.constant dense<0.000000e+00> : vector<16x64xf32>
    %2 = tpu.matmul %0, %1, %cst {dimension_numbers = #tpu.dot_dimension_numbers<[1], [0], [0], [1], [0, 0, 1, 1], [], []>, precision = #tpu.contract_precision<fp32>} : vector<16x64xf32>, vector<64x64xf32>, vector<16x64xf32> -> vector<16x64xf32>
    %c0_3 = arith.constant 0 : index
    %c0_4 = arith.constant 0 : index
    %3 = vector.load %arg2[%c0_3, %c0_4] : memref<1x64xf32, #tpu.memory_space<vmem>>, vector<1x64xf32>
    %4 = vector.broadcast %3 : vector<1x64xf32> to vector<16x64xf32>
    %5 = arith.addf %2, %4 : vector<16x64xf32>
    %cst_5 = arith.constant 0.000000e+00 : f32
    %6 = vector.broadcast %cst_5 : f32 to vector<16x64xf32>
    %7 = arith.maximumf %5, %6 : vector<16x64xf32>
    %c0_6 = arith.constant 0 : index
    %c0_7 = arith.constant 0 : index
    %8 = vector.load %arg3[%c0_6, %c0_7] : memref<64x64xf32, #tpu.memory_space<vmem>>, vector<64x64xf32>
    %cst_8 = arith.constant dense<0.000000e+00> : vector<16x64xf32>
    %9 = tpu.matmul %7, %8, %cst_8 {dimension_numbers = #tpu.dot_dimension_numbers<[1], [0], [0], [1], [0, 0, 1, 1], [], []>, precision = #tpu.contract_precision<fp32>} : vector<16x64xf32>, vector<64x64xf32>, vector<16x64xf32> -> vector<16x64xf32>
    %c0_9 = arith.constant 0 : index
    %c0_10 = arith.constant 0 : index
    %10 = vector.load %arg4[%c0_9, %c0_10] : memref<1x64xf32, #tpu.memory_space<vmem>>, vector<1x64xf32>
    %11 = vector.broadcast %10 : vector<1x64xf32> to vector<16x64xf32>
    %12 = arith.addf %9, %11 : vector<16x64xf32>
    %c0_11 = arith.constant 0 : index
    %c0_12 = arith.constant 0 : index
    %13 = vector.load %arg5[%c0_11, %c0_12] : memref<64x64xf32, #tpu.memory_space<vmem>>, vector<64x64xf32>
    %cst_13 = arith.constant dense<0.000000e+00> : vector<16x64xf32>
    %14 = tpu.matmul %7, %13, %cst_13 {dimension_numbers = #tpu.dot_dimension_numbers<[1], [0], [0], [1], [0, 0, 1, 1], [], []>, precision = #tpu.contract_precision<fp32>} : vector<16x64xf32>, vector<64x64xf32>, vector<16x64xf32> -> vector<16x64xf32>
    %c0_14 = arith.constant 0 : index
    %c0_15 = arith.constant 0 : index
    %15 = vector.load %arg6[%c0_14, %c0_15] : memref<1x64xf32, #tpu.memory_space<vmem>>, vector<1x64xf32>
    %16 = vector.broadcast %15 : vector<1x64xf32> to vector<16x64xf32>
    %17 = arith.addf %14, %16 : vector<16x64xf32>
    %c0_16 = arith.constant 0 : index
    %c0_17 = arith.constant 0 : index
    %18 = vector.load %arg7[%c0_16, %c0_17] : memref<64x64xf32, #tpu.memory_space<vmem>>, vector<64x64xf32>
    %cst_18 = arith.constant dense<0.000000e+00> : vector<16x64xf32>
    %19 = tpu.matmul %7, %18, %cst_18 {dimension_numbers = #tpu.dot_dimension_numbers<[1], [0], [0], [1], [0, 0, 1, 1], [], []>, precision = #tpu.contract_precision<fp32>} : vector<16x64xf32>, vector<64x64xf32>, vector<16x64xf32> -> vector<16x64xf32>
    %c0_19 = arith.constant 0 : index
    %c0_20 = arith.constant 0 : index
    %20 = vector.load %arg8[%c0_19, %c0_20] : memref<1x64xf32, #tpu.memory_space<vmem>>, vector<1x64xf32>
    %21 = vector.broadcast %20 : vector<1x64xf32> to vector<16x64xf32>
    %22 = arith.addf %19, %21 : vector<16x64xf32>
    %23 = vector.extract_strided_slice %12 {offsets = [0, 0], sizes = [16, 32], strides = [1, 1]} : vector<16x64xf32> to vector<16x32xf32>
    %24 = vector.extract_strided_slice %17 {offsets = [0, 0], sizes = [16, 32], strides = [1, 1]} : vector<16x64xf32> to vector<16x32xf32>
    %25 = vector.extract_strided_slice %22 {offsets = [0, 0], sizes = [16, 32], strides = [1, 1]} : vector<16x64xf32> to vector<16x32xf32>
    %cst_21 = arith.constant dense<0.000000e+00> : vector<16x16xf32>
    %26 = tpu.matmul %23, %24, %cst_21 {dimension_numbers = #tpu.dot_dimension_numbers<[1], [1], [0], [0], [0, 0, 1, 0], [], []>, precision = #tpu.contract_precision<fp32>} : vector<16x32xf32>, vector<16x32xf32>, vector<16x16xf32> -> vector<16x16xf32>
    %cst_22 = arith.constant 0.176776692 : f32
    %27 = vector.broadcast %cst_22 : f32 to vector<16x16xf32>
    %28 = arith.mulf %26, %27 : vector<16x16xf32>
    %cst_23 = arith.constant dense<0xFF800000> : vector<16xf32>
    %29 = vector.multi_reduction <maximumf>, %28, %cst_23 [1] : vector<16x16xf32> to vector<16xf32>
    %30 = vector.shape_cast %29 : vector<16xf32> to vector<16x1xf32>
    %31 = vector.broadcast %30 : vector<16x1xf32> to vector<16x16xf32>
    %32 = arith.subf %28, %31 : vector<16x16xf32>
    %33 = math.exp %32 : vector<16x16xf32>
    %cst_24 = arith.constant dense<0.000000e+00> : vector<16xf32>
    %34 = vector.multi_reduction <add>, %33, %cst_24 [1] : vector<16x16xf32> to vector<16xf32>
    %35 = vector.shape_cast %34 : vector<16xf32> to vector<16x1xf32>
    %36 = vector.broadcast %35 : vector<16x1xf32> to vector<16x16xf32>
    %37 = arith.divf %33, %36 : vector<16x16xf32>
    %cst_25 = arith.constant dense<0.000000e+00> : vector<16x32xf32>
    %38 = tpu.matmul %37, %25, %cst_25 {dimension_numbers = #tpu.dot_dimension_numbers<[1], [0], [0], [1], [0, 0, 1, 1], [], []>, precision = #tpu.contract_precision<fp32>} : vector<16x16xf32>, vector<16x32xf32>, vector<16x32xf32> -> vector<16x32xf32>
    %39 = vector.extract_strided_slice %12 {offsets = [0, 32], sizes = [16, 32], strides = [1, 1]} : vector<16x64xf32> to vector<16x32xf32>
    %40 = vector.extract_strided_slice %17 {offsets = [0, 32], sizes = [16, 32], strides = [1, 1]} : vector<16x64xf32> to vector<16x32xf32>
    %41 = vector.extract_strided_slice %22 {offsets = [0, 32], sizes = [16, 32], strides = [1, 1]} : vector<16x64xf32> to vector<16x32xf32>
    %cst_26 = arith.constant dense<0.000000e+00> : vector<16x16xf32>
    %42 = tpu.matmul %39, %40, %cst_26 {dimension_numbers = #tpu.dot_dimension_numbers<[1], [1], [0], [0], [0, 0, 1, 0], [], []>, precision = #tpu.contract_precision<fp32>} : vector<16x32xf32>, vector<16x32xf32>, vector<16x16xf32> -> vector<16x16xf32>
    %cst_27 = arith.constant 0.176776692 : f32
    %43 = vector.broadcast %cst_27 : f32 to vector<16x16xf32>
    %44 = arith.mulf %42, %43 : vector<16x16xf32>
    %cst_28 = arith.constant dense<0xFF800000> : vector<16xf32>
    %45 = vector.multi_reduction <maximumf>, %44, %cst_28 [1] : vector<16x16xf32> to vector<16xf32>
    %46 = vector.shape_cast %45 : vector<16xf32> to vector<16x1xf32>
    %47 = vector.broadcast %46 : vector<16x1xf32> to vector<16x16xf32>
    %48 = arith.subf %44, %47 : vector<16x16xf32>
    %49 = math.exp %48 : vector<16x16xf32>
    %cst_29 = arith.constant dense<0.000000e+00> : vector<16xf32>
    %50 = vector.multi_reduction <add>, %49, %cst_29 [1] : vector<16x16xf32> to vector<16xf32>
    %51 = vector.shape_cast %50 : vector<16xf32> to vector<16x1xf32>
    %52 = vector.broadcast %51 : vector<16x1xf32> to vector<16x16xf32>
    %53 = arith.divf %49, %52 : vector<16x16xf32>
    %cst_30 = arith.constant dense<0.000000e+00> : vector<16x32xf32>
    %54 = tpu.matmul %53, %41, %cst_30 {dimension_numbers = #tpu.dot_dimension_numbers<[1], [0], [0], [1], [0, 0, 1, 1], [], []>, precision = #tpu.contract_precision<fp32>} : vector<16x16xf32>, vector<16x32xf32>, vector<16x32xf32> -> vector<16x32xf32>
    %55 = tpu.concatenate %38, %54 in 1 : vector<16x32xf32>, vector<16x32xf32> -> vector<16x64xf32>
    %c0_31 = arith.constant 0 : index
    %c0_32 = arith.constant 0 : index
    %56 = vector.load %arg9[%c0_31, %c0_32] : memref<64x64xf32, #tpu.memory_space<vmem>>, vector<64x64xf32>
    %cst_33 = arith.constant dense<0.000000e+00> : vector<16x64xf32>
    %57 = tpu.matmul %55, %56, %cst_33 {dimension_numbers = #tpu.dot_dimension_numbers<[1], [0], [0], [1], [0, 0, 1, 1], [], []>, precision = #tpu.contract_precision<fp32>} : vector<16x64xf32>, vector<64x64xf32>, vector<16x64xf32> -> vector<16x64xf32>
    %c0_34 = arith.constant 0 : index
    %c0_35 = arith.constant 0 : index
    %58 = vector.load %arg10[%c0_34, %c0_35] : memref<1x64xf32, #tpu.memory_space<vmem>>, vector<1x64xf32>
    %59 = vector.broadcast %58 : vector<1x64xf32> to vector<16x64xf32>
    %60 = arith.addf %57, %59 : vector<16x64xf32>
    %c0_36 = arith.constant 0 : index
    %c0_37 = arith.constant 0 : index
    %61 = vector.load %arg11[%c0_36, %c0_37] : memref<64x64xf32, #tpu.memory_space<vmem>>, vector<64x64xf32>
    %cst_38 = arith.constant dense<0.000000e+00> : vector<16x64xf32>
    %62 = tpu.matmul %60, %61, %cst_38 {dimension_numbers = #tpu.dot_dimension_numbers<[1], [0], [0], [1], [0, 0, 1, 1], [], []>, precision = #tpu.contract_precision<fp32>} : vector<16x64xf32>, vector<64x64xf32>, vector<16x64xf32> -> vector<16x64xf32>
    %c0_39 = arith.constant 0 : index
    %c0_40 = arith.constant 0 : index
    %63 = vector.load %arg12[%c0_39, %c0_40] : memref<1x64xf32, #tpu.memory_space<vmem>>, vector<1x64xf32>
    %64 = vector.broadcast %63 : vector<1x64xf32> to vector<16x64xf32>
    %65 = arith.addf %62, %64 : vector<16x64xf32>
    %cst_41 = arith.constant 0.000000e+00 : f32
    %66 = vector.broadcast %cst_41 : f32 to vector<16x64xf32>
    %67 = arith.maximumf %65, %66 : vector<16x64xf32>
    %68 = tpu.concatenate %0, %67 in 1 : vector<16x64xf32>, vector<16x64xf32> -> vector<16x128xf32>
    %cst_42 = arith.constant dense<0.000000e+00> : vector<16xf32>
    %69 = vector.multi_reduction <add>, %68, %cst_42 [1] : vector<16x128xf32> to vector<16xf32>
    %70 = vector.shape_cast %69 : vector<16xf32> to vector<16x1xf32>
    %cst_43 = arith.constant 1.280000e+02 : f32
    %71 = vector.broadcast %cst_43 : f32 to vector<16x1xf32>
    %72 = arith.divf %70, %71 : vector<16x1xf32>
    %73 = vector.broadcast %72 : vector<16x1xf32> to vector<16x128xf32>
    %74 = arith.subf %68, %73 : vector<16x128xf32>
    %75 = arith.mulf %74, %74 : vector<16x128xf32>
    %cst_44 = arith.constant dense<0.000000e+00> : vector<16xf32>
    %76 = vector.multi_reduction <add>, %75, %cst_44 [1] : vector<16x128xf32> to vector<16xf32>
    %77 = vector.shape_cast %76 : vector<16xf32> to vector<16x1xf32>
    %cst_45 = arith.constant 1.280000e+02 : f32
    %78 = vector.broadcast %cst_45 : f32 to vector<16x1xf32>
    %79 = arith.divf %77, %78 : vector<16x1xf32>
    %cst_46 = arith.constant 9.99999974E-6 : f32
    %80 = vector.broadcast %cst_46 : f32 to vector<16x1xf32>
    %81 = arith.addf %79, %80 : vector<16x1xf32>
    %82 = math.rsqrt %81 : vector<16x1xf32>
    %83 = vector.broadcast %82 : vector<16x1xf32> to vector<16x128xf32>
    %84 = arith.mulf %74, %83 : vector<16x128xf32>
    %c0_47 = arith.constant 0 : index
    %c0_48 = arith.constant 0 : index
    %85 = vector.load %arg13[%c0_47, %c0_48] : memref<1x128xf32, #tpu.memory_space<vmem>>, vector<1x128xf32>
    %86 = vector.broadcast %85 : vector<1x128xf32> to vector<16x128xf32>
    %87 = arith.mulf %84, %86 : vector<16x128xf32>
    %c0_49 = arith.constant 0 : index
    %c0_50 = arith.constant 0 : index
    %88 = vector.load %arg14[%c0_49, %c0_50] : memref<1x128xf32, #tpu.memory_space<vmem>>, vector<1x128xf32>
    %89 = vector.broadcast %88 : vector<1x128xf32> to vector<16x128xf32>
    %90 = arith.addf %87, %89 : vector<16x128xf32>
    %c0_51 = arith.constant 0 : index
    %c0_52 = arith.constant 0 : index
    %91 = vector.load %arg15[%c0_51, %c0_52] : memref<16x128xf32, #tpu.memory_space<vmem>>, vector<16x128xf32>
    tpu.vector_store %arg15[%c0_51, %c0_52], %90 {strides = array<i32>} : memref<16x128xf32, #tpu.memory_space<vmem>>, vector<16x128xf32>,
    return
  }
}

</mosaic_0001>

<llo_original>
// kernel: tpu_custom_call.1
$region0: #{tpu_custom_call.1}
  #allocation0 [shape = 'u32[]', space=smem, size = 0x4, offset = 0x4, fixed_abs, tag = 'smem constant byte address 0x4 - core index']
  #allocation1 [shape = 'u32[144,128]{1,0:T(1,128)}', space=vmem, size = 0x12000, scoped, tag = 'internal scratch']
  %s0 = inlined_call_operand.hbm [shape: f32[16,64], index: 0, kind: input, shape index: {}]
  %s1 = inlined_call_operand.hbm [shape: f32[64,64], index: 1, kind: input, shape index: {}]
  %s2 = inlined_call_operand.vmem [shape: f32[1,64], index: 2, kind: input, shape index: {}]
  %s3 = inlined_call_operand.hbm [shape: f32[64,64], index: 3, kind: input, shape index: {}]
  %s4 = inlined_call_operand.vmem [shape: f32[1,64], index: 4, kind: input, shape index: {}]
  %s5 = inlined_call_operand.hbm [shape: f32[64,64], index: 5, kind: input, shape index: {}]
  %s6 = inlined_call_operand.vmem [shape: f32[1,64], index: 6, kind: input, shape index: {}]
  %s7 = inlined_call_operand.hbm [shape: f32[64,64], index: 7, kind: input, shape index: {}]
  %s8 = inlined_call_operand.vmem [shape: f32[1,64], index: 8, kind: input, shape index: {}]
  %s9 = inlined_call_operand.hbm [shape: f32[64,64], index: 9, kind: input, shape index: {}]
  %s10 = inlined_call_operand.vmem [shape: f32[1,64], index: 10, kind: input, shape index: {}]
  %s11 = inlined_call_operand.hbm [shape: f32[64,64], index: 11, kind: input, shape index: {}]
  %s12 = inlined_call_operand.vmem [shape: f32[1,64], index: 12, kind: input, shape index: {}]
  %s13 = inlined_call_operand.vmem [shape: f32[1,128], index: 13, kind: input, shape index: {}]
  %s14 = inlined_call_operand.vmem [shape: f32[1,128], index: 14, kind: input, shape index: {}]
  %s15 = inlined_call_operand.hbm [shape: f32[16,128], index: 15, kind: output, shape index: {}]
  %s16 = sld [smem:[#allocation0]]
  $region98: #{tpu_custom_call.1} parent=0
    _
  %s18 = ssub.s32 1, %s16
  %s19 = scalar_select 0, %s18, %s16
  $region1: #{tpu_custom_call.1} parent=0
    #allocation2 [shape = 'u8[8192]{0}', space=vmem, size = 0x2000, scoped, tag = 'input window, operand 0, single buffered']
    #allocation3 [shape = 's32[1]{0}', space=sflag, size = 0x4, scoped, tag = 'scoped memory for tpu_custom_call.1']
    #allocation4 [shape = 's32[1]{0}', space=sflag, size = 0x4, scoped, tag = 'scoped memory for tpu_custom_call.1']
    #allocation5 [shape = 'u8[32768]{0}', space=vmem, size = 0x8000, scoped, tag = 'input window, operand 1, single buffered']
    #allocation6 [shape = 's32[1]{0}', space=sflag, size = 0x4, scoped, tag = 'scoped memory for tpu_custom_call.1']
    #allocation7 [shape = 'u8[32768]{0}', space=vmem, size = 0x8000, scoped, tag = 'input window, operand 3, single buffered']
    #allocation8 [shape = 'u8[32768]{0}', space=vmem, size = 0x8000, scoped, tag = 'input window, operand 5, single buffered']
    #allocation9 [shape = 's32[1]{0}', space=sflag, size = 0x4, scoped, tag = 'scoped memory for tpu_custom_call.1']
    #allocation10 [shape = 'u8[32768]{0}', space=vmem, size = 0x8000, scoped, tag = 'input window, operand 7, single buffered']
    #allocation11 [shape = 'u8[32768]{0}', space=vmem, size = 0x8000, scoped, tag = 'input window, operand 9, single buffered']
    #allocation12 [shape = 's32[1]{0}', space=sflag, size = 0x4, scoped, tag = 'scoped memory for tpu_custom_call.1']
    #allocation13 [shape = 'u8[32768]{0}', space=vmem, size = 0x8000, scoped, tag = 'input window, operand 11, single buffered']
    #allocation14 [shape = 'u8[8192]{0}', space=vmem, size = 0x2000, scoped, tag = 'output window, operand 0, single buffered']
    %20 = vsyncpa [#allocation3], 0
    %21 = vsyncpa [#allocation6], 0
    %22 = vsyncpa [#allocation9], 0
    %23 = vsyncpa [#allocation12], 0
    %24 = vsyncpa [#allocation4], 0
    // Predicated region
    $region2: #{tpu_custom_call.1} parent=1 // pred_check
      _
    $region3: #{tpu_custom_call.1} parent=1 // pred_check_branch
      %26 = sbr.rel (0) target = $region5
    $region4: #{tpu_custom_call.1} parent=1 // pred_region
      %s28 = ssub.s32 256, 256
      %29 = vsyncadd [#allocation3], %s28
      %s30 = sshll.u32 [#allocation2], 4
      %s31 = int_to_ptr.vmem [resolvable:$true] %s30
      %36 = dma.hbm_to_vmem [thread:$0]  %s0, 256, %s31, [#allocation3], 128, 128, 8
    $region5: #{tpu_custom_call.1} parent=1 // pred_fallthru
      _
    // Predicated region
    $region6: #{tpu_custom_call.1} parent=1 // pred_check
      _
    $region7: #{tpu_custom_call.1} parent=1 // pred_check_branch
      %38 = sbr.rel (0) target = $region9
    $region8: #{tpu_custom_call.1} parent=1 // pred_region
      %s40 = ssub.s32 1024, 1024
      %41 = vsyncadd [#allocation6], %s40
      %s42 = sshll.u32 [#allocation5], 4
      %s43 = int_to_ptr.vmem [resolvable:$true] %s42
      %48 = dma.hbm_to_vmem [thread:$0]  %s1, 1024, %s43, [#allocation6], 128, 128, 8
    $region9: #{tpu_custom_call.1} parent=1 // pred_fallthru
      _
    // Predicated region
    $region10: #{tpu_custom_call.1} parent=1 // pred_check
      _
    $region11: #{tpu_custom_call.1} parent=1 // pred_check_branch
      %50 = sbr.rel (0) target = $region13
    $region12: #{tpu_custom_call.1} parent=1 // pred_region
      _
    $region13: #{tpu_custom_call.1} parent=1 // pred_fallthru
      _
    // Predicated region
    $region14: #{tpu_custom_call.1} parent=1 // pred_check
      _
    $region15: #{tpu_custom_call.1} parent=1 // pred_check_branch
      %52 = sbr.rel (0) target = $region17
    $region16: #{tpu_custom_call.1} parent=1 // pred_region
      %s54 = ssub.s32 1024, 1024
      %55 = vsyncadd [#allocation6], %s54
      %s56 = sshll.u32 [#allocation7], 4
      %s57 = int_to_ptr.vmem [resolvable:$true] %s56
      %62 = dma.hbm_to_vmem [thread:$0]  %s3, 1024, %s57, [#allocation6], 128, 128, 8
    $region17: #{tpu_custom_call.1} parent=1 // pred_fallthru
      _
    // Predicated region
    $region18: #{tpu_custom_call.1} parent=1 // pred_check
      _
    $region19: #{tpu_custom_call.1} parent=1 // pred_check_branch
      %64 = sbr.rel (0) target = $region21
    $region20: #{tpu_custom_call.1} parent=1 // pred_region
      _
    $region21: #{tpu_custom_call.1} parent=1 // pred_fallthru
      _
    // Predicated region
    $region22: #{tpu_custom_call.1} parent=1 // pred_check
      _
    $region23: #{tpu_custom_call.1} parent=1 // pred_check_branch
      %66 = sbr.rel (0) target = $region25
    $region24: #{tpu_custom_call.1} parent=1 // pred_region
      %s68 = ssub.s32 1024, 1024
      %69 = vsyncadd [#allocation9], %s68
      %s70 = sshll.u32 [#allocation8], 4
      %s71 = int_to_ptr.vmem [resolvable:$true] %s70
      %76 = dma.hbm_to_vmem [thread:$0]  %s5, 1024, %s71, [#allocation9], 128, 128, 8
    $region25: #{tpu_custom_call.1} parent=1 // pred_fallthru
      _
    // Predicated region
    $region26: #{tpu_custom_call.1} parent=1 // pred_check
      _
    $region27: #{tpu_custom_call.1} parent=1 // pred_check_branch
      %78 = sbr.rel (0) target = $region29
    $region28: #{tpu_custom_call.1} parent=1 // pred_region
      _
    $region29: #{tpu_custom_call.1} parent=1 // pred_fallthru
      _
    // Predicated region
    $region30: #{tpu_custom_call.1} parent=1 // pred_check
      _
    $region31: #{tpu_custom_call.1} parent=1 // pred_check_branch
      %80 = sbr.rel (0) target = $region33
    $region32: #{tpu_custom_call.1} parent=1 // pred_region
      %s82 = ssub.s32 1024, 1024
      %83 = vsyncadd [#allocation9], %s82
      %s84 = sshll.u32 [#allocation10], 4
      %s85 = int_to_ptr.vmem [resolvable:$true] %s84
      %90 = dma.hbm_to_vmem [thread:$0]  %s7, 1024, %s85, [#allocation9], 128, 128, 8
    $region33: #{tpu_custom_call.1} parent=1 // pred_fallthru
      _
    // Predicated region
    $region34: #{tpu_custom_call.1} parent=1 // pred_check
      _
    $region35: #{tpu_custom_call.1} parent=1 // pred_check_branch
      %92 = sbr.rel (0) target = $region37
    $region36: #{tpu_custom_call.1} parent=1 // pred_region
      _
    $region37: #{tpu_custom_call.1} parent=1 // pred_fallthru
      _
    // Predicated region
    $region38: #{tpu_custom_call.1} parent=1 // pred_check
      _
    $region39: #{tpu_custom_call.1} parent=1 // pred_check_branch
      %94 = sbr.rel (0) target = $region41
    $region40: #{tpu_custom_call.1} parent=1 // pred_region
      %s96 = ssub.s32 1024, 1024
      %97 = vsyncadd [#allocation12], %s96
      %s98 = sshll.u32 [#allocation11], 4
      %s99 = int_to_ptr.vmem [resolvable:$true] %s98
      %104 = dma.hbm_to_vmem [thread:$0]  %s9, 1024, %s99, [#allocation12], 128, 128, 8
    $region41: #{tpu_custom_call.1} parent=1 // pred_fallthru
      _
    // Predicated region
    $region42: #{tpu_custom_call.1} parent=1 // pred_check
      _
    $region43: #{tpu_custom_call.1} parent=1 // pred_check_branch
      %106 = sbr.rel (0) target = $region45
    $region44: #{tpu_custom_call.1} parent=1 // pred_region
      _
    $region45: #{tpu_custom_call.1} parent=1 // pred_fallthru
      _
    // Predicated region
    $region46: #{tpu_custom_call.1} parent=1 // pred_check
      _
    $region47: #{tpu_custom_call.1} parent=1 // pred_check_branch
      %108 = sbr.rel (0) target = $region49
    $region48: #{tpu_custom_call.1} parent=1 // pred_region
      %s110 = ssub.s32 1024, 1024
      %111 = vsyncadd [#allocation12], %s110
      %s112 = sshll.u32 [#allocation13], 4
      %s113 = int_to_ptr.vmem [resolvable:$true] %s112
      %118 = dma.hbm_to_vmem [thread:$0]  %s11, 1024, %s113, [#allocation12], 128, 128, 8
    $region49: #{tpu_custom_call.1} parent=1 // pred_fallthru
      _
    // Predicated region
    $region50: #{tpu_custom_call.1} parent=1 // pred_check
      _
    $region51: #{tpu_custom_call.1} parent=1 // pred_check_branch
      %120 = sbr.rel (0) target = $region53
    $region52: #{tpu_custom_call.1} parent=1 // pred_region
      _
    $region53: #{tpu_custom_call.1} parent=1 // pred_fallthru
      _
    // Predicated region
    $region54: #{tpu_custom_call.1} parent=1 // pred_check
      _
    $region55: #{tpu_custom_call.1} parent=1 // pred_check_branch
      %122 = sbr.rel (0) target = $region57
    $region56: #{tpu_custom_call.1} parent=1 // pred_region
      _
    $region57: #{tpu_custom_call.1} parent=1 // pred_fallthru
      _
    // Predicated region
    $region58: #{tpu_custom_call.1} parent=1 // pred_check
      _
    $region59: #{tpu_custom_call.1} parent=1 // pred_check_branch
      %124 = sbr.rel (0) target = $region61
    $region60: #{tpu_custom_call.1} parent=1 // pred_region
      _
    $region61: #{tpu_custom_call.1} parent=1 // pred_fallthru
      _
    // Predicated region
    $region62: #{tpu_custom_call.1} parent=1 // pred_check
      _
    $region63: #{tpu_custom_call.1} parent=1 // pred_check_branch
      %126 = sbr.rel (0) target = $region65
    $region64: #{tpu_custom_call.1} parent=1 // pred_region
      %127 = dma.done [#allocation3], 256
    $region65: #{tpu_custom_call.1} parent=1 // pred_fallthru
      _
    // Predicated region
    $region66: #{tpu_custom_call.1} parent=1 // pred_check
      _
    $region67: #{tpu_custom_call.1} parent=1 // pred_check_branch
      %129 = sbr.rel (0) target = $region69
    $region68: #{tpu_custom_call.1} parent=1 // pred_region
      %130 = dma.done [#allocation6], 1024
    $region69: #{tpu_custom_call.1} parent=1 // pred_fallthru
      _
    // Predicated region
    $region70: #{tpu_custom_call.1} parent=1 // pred_check
      _
    $region71: #{tpu_custom_call.1} parent=1 // pred_check_branch
      %132 = sbr.rel (0) target = $region73
    $region72: #{tpu_custom_call.1} parent=1 // pred_region
      %133 = dma.done [#allocation6], 1024
    $region73: #{tpu_custom_call.1} parent=1 // pred_fallthru
      _
    // Predicated region
    $region74: #{tpu_custom_call.1} parent=1 // pred_check
      _
    $region75: #{tpu_custom_call.1} parent=1 // pred_check_branch
      %135 = sbr.rel (0) target = $region77
    $region76: #{tpu_custom_call.1} parent=1 // pred_region
      %136 = dma.done [#allocation9], 1024
    $region77: #{tpu_custom_call.1} parent=1 // pred_fallthru
      _
    // Predicated region
    $region78: #{tpu_custom_call.1} parent=1 // pred_check
      _
    $region79: #{tpu_custom_call.1} parent=1 // pred_check_branch
      %138 = sbr.rel (0) target = $region81
    $region80: #{tpu_custom_call.1} parent=1 // pred_region
      %139 = dma.done [#allocation9], 1024
    $region81: #{tpu_custom_call.1} parent=1 // pred_fallthru
      _
    // Predicated region
    $region82: #{tpu_custom_call.1} parent=1 // pred_check
      _
    $region83: #{tpu_custom_call.1} parent=1 // pred_check_branch
      %141 = sbr.rel (0) target = $region85
    $region84: #{tpu_custom_call.1} parent=1 // pred_region
      %142 = dma.done [#allocation12], 1024
    $region85: #{tpu_custom_call.1} parent=1 // pred_fallthru
      _
    // Predicated region
    $region86: #{tpu_custom_call.1} parent=1 // pred_check
      _
    $region87: #{tpu_custom_call.1} parent=1 // pred_check_branch
      %144 = sbr.rel (0) target = $region89
    $region88: #{tpu_custom_call.1} parent=1 // pred_region
      %145 = dma.done [#allocation12], 1024
    $region89: #{tpu_custom_call.1} parent=1 // pred_fallthru
      _
    %v146 = vld [vmem:[#allocation2] sm:$0xff]
    %v147 = vld [vmem:[#allocation2 + $0x8] sm:$0xff]
    %v148 = vld [vmem:[#allocation5] sm:$0xff]
    %v149 = vld [vmem:[#allocation5 + $0x8] sm:$0xff]
    %v150 = vld [vmem:[#allocation5 + $0x10] sm:$0xff]
    %v151 = vld [vmem:[#allocation5 + $0x18] sm:$0xff]
    %v152 = vld [vmem:[#allocation5 + $0x20] sm:$0xff]
    %v153 = vld [vmem:[#allocation5 + $0x28] sm:$0xff]
    %v154 = vld [vmem:[#allocation5 + $0x30] sm:$0xff]
    %v155 = vld [vmem:[#allocation5 + $0x38] sm:$0xff]
    %v156 = vld [vmem:[%s2] sm:$0x1]
    %v158 = vlaneseq
    %v159 = vshrl.u32 %v158, 7
    %v160 = vsub.s32 0, %v159
    %v161 = vrot.slane %v156, %v160
    %vm163 = vcmask 523264
    %v165 = vsel %vm163, %v146, 0
    %v168 = vsel %vm163, %v147, 0
    %170 = vmatprep.subr.mxu0 0.0
    %v171 = vand.u32 %v148, 4294901760
    %172 = vmatpush1.msra.mxu0 %v171
    %173 = vmatprep.subr.mxu0 0.0
    %v174 = vand.u32 %v149, 4294901760
    %175 = vmatpush1.msra.mxu0 %v174
    %176 = vmatprep.subr.mxu0 0.0
    %v177 = vand.u32 %v150, 4294901760
    %178 = vmatpush1.msra.mxu0 %v177
    %179 = vmatprep.subr.mxu0 0.0
    %v180 = vand.u32 %v151, 4294901760
    %181 = vmatpush1.msra.mxu0 %v180
    %182 = vmatprep.subr.mxu0 0.0
    %v183 = vand.u32 %v152, 4294901760
    %184 = vmatpush1.msra.mxu0 %v183
    %185 = vmatprep.subr.mxu0 0.0
    %v186 = vand.u32 %v153, 4294901760
    %187 = vmatpush1.msra.mxu0 %v186
    %188 = vmatprep.subr.mxu0 0.0
    %v189 = vand.u32 %v154, 4294901760
    %190 = vmatpush1.msra.mxu0 %v189
    %191 = vmatprep.subr.mxu0 0.0
    %v192 = vand.u32 %v155, 4294901760
    %193 = vmatpush1.msra.mxu0 %v192
    %194 = vmatprep.subr.mxu0 0.0
    %195 = vmatpush1.msra.mxu0 0.0
    %196 = vmatprep.subr.mxu0 0.0
    %197 = vmatpush1.msra.mxu0 0.0
    %198 = vmatprep.subr.mxu0 0.0
    %199 = vmatpush1.msra.mxu0 0.0
    %200 = vmatprep.subr.mxu0 0.0
    %201 = vmatpush1.msra.mxu0 0.0
    %202 = vmatprep.subr.mxu0 0.0
    %203 = vmatpush1.msra.mxu0 0.0
    %204 = vmatprep.subr.mxu0 0.0
    %205 = vmatpush1.msra.mxu0 0.0
    %206 = vmatprep.subr.mxu0 0.0
    %207 = vmatpush1.msra.mxu0 0.0
    %208 = vmatprep.subr.mxu0 0.0
    %209 = vmatpush1.msra.mxu0 0.0
    %210 = vmatprep.subr.mxu0 0.0
    %211 = vmatpush1.msra.mxu0 0.0
    %212 = vmatprep.subr.mxu0 0.0
    %213 = vmatpush1.msra.mxu0 0.0
    %214 = vmatprep.subr.mxu0 0.0
    %215 = vmatpush1.msra.mxu0 0.0
    %216 = vmatprep.subr.mxu0 0.0
    %217 = vmatpush1.msra.mxu0 0.0
    %218 = vmatprep.subr.mxu0 0.0
    %219 = vmatpush1.msra.mxu0 0.0
    %220 = vmatprep.subr.mxu0 0.0
    %221 = vmatpush1.msra.mxu0 0.0
    %222 = vmatprep.subr.mxu0 0.0
    %223 = vmatpush1.msra.mxu0 0.0
    %224 = vmatprep.subr.mxu0 0.0
    %225 = vmatpush1.msra.mxu0 0.0
    %226 = vmatprep.subr.mxu0 0.0
    %227 = vmatpush1.msra.mxu0 0.0
    %228 = vmatprep.subr.mxu0 0.0
    %229 = vmatpush1.msra.mxu0 0.0
    %230 = vmatprep.subr.mxu0 0.0
    %231 = vmatpush1.msra.mxu0 0.0
    %232 = vmatprep.subr.mxu0 0.0
    %233 = vmatpush1.msra.mxu0 0.0
    %234 = vmatprep.subr.mxu0 0.0
    %235 = vmatpush1.msra.mxu0 0.0
    %236 = vmatprep.subr.mxu0 0.0
    %237 = vmatpush1.msra.mxu0 0.0
    %238 = vmatprep.subr.mxu0 0.0
    %239 = vmatpush1.msra.mxu0 0.0
    %240 = vmatprep.subr.mxu0 0.0
    %241 = vmatpush1.msra.mxu0 0.0
    %242 = vmatprep.mubr.f32.mxu0 0.0
    %v243 = vand.u32 %v165, 4294901760
    %v244 = vsub.f32 %v165, %v243
    %v245 = vand.u32 %v244, 4294901760
    %v246 = vsub.f32 %v244, %v245
    %v247 = vand.u32 %v246, 4294901760
    %248 = vmatmul.mubr.f32.gmra.mrb[0].mxu0 %v247
    %v249 = vpop.f32.mrb[0].mxu0
    %v250 = vadd.f32 %v161, %v249
    %v251 = vpop.f32.mrb[0].mxu0
    %252 = vmatprep.mubr.f32.mxu0 0.0
    %v253 = vand.u32 %v168, 4294901760
    %v254 = vsub.f32 %v168, %v253
    %v255 = vand.u32 %v254, 4294901760
    %v256 = vsub.f32 %v254, %v255
    %v257 = vand.u32 %v256, 4294901760
    %258 = vmatmul.mubr.f32.gmra.mrb[0].mxu0 %v257
    %v259 = vpop.f32.mrb[0].mxu0
    %v260 = vadd.f32 %v161, %v259
    %v261 = vpop.f32.mrb[0].mxu0
    %262 = vdwg.mxu0
    %263 = vmatprep.subr.mxu0 0.0
    %v264 = vand.u32 %v148, 4294901760
    %v265 = vsub.f32 %v148, %v264
    %v266 = vand.u32 %v265, 4294901760
    %v267 = vsub.f32 %v265, %v266
    %v268 = vand.u32 %v267, 4294901760
    %269 = vmatpush1.msra.mxu0 %v268
    %270 = vmatprep.subr.mxu0 0.0
    %v271 = vand.u32 %v149, 4294901760
    %v272 = vsub.f32 %v149, %v271
    %v273 = vand.u32 %v272, 4294901760
    %v274 = vsub.f32 %v272, %v273
    %v275 = vand.u32 %v274, 4294901760
    %276 = vmatpush1.msra.mxu0 %v275
    %277 = vmatprep.subr.mxu0 0.0
    %v278 = vand.u32 %v150, 4294901760
    %v279 = vsub.f32 %v150, %v278
    %v280 = vand.u32 %v279, 4294901760
    %v281 = vsub.f32 %v279, %v280
    %v282 = vand.u32 %v281, 4294901760
    %283 = vmatpush1.msra.mxu0 %v282
    %284 = vmatprep.subr.mxu0 0.0
    %v285 = vand.u32 %v151, 4294901760
    %v286 = vsub.f32 %v151, %v285
    %v287 = vand.u32 %v286, 4294901760
    %v288 = vsub.f32 %v286, %v287
    %v289 = vand.u32 %v288, 4294901760
    %290 = vmatpush1.msra.mxu0 %v289
    %291 = vmatprep.subr.mxu0 0.0
    %v292 = vand.u32 %v152, 4294901760
    %v293 = vsub.f32 %v152, %v292
    %v294 = vand.u32 %v293, 4294901760
    %v295 = vsub.f32 %v293, %v294
    %v296 = vand.u32 %v295, 4294901760
    %297 = vmatpush1.msra.mxu0 %v296
    %298 = vmatprep.subr.mxu0 0.0
    %v299 = vand.u32 %v153, 4294901760
    %v300 = vsub.f32 %v153, %v299
    %v301 = vand.u32 %v300, 4294901760
    %v302 = vsub.f32 %v300, %v301
    %v303 = vand.u32 %v302, 4294901760
    %304 = vmatpush1.msra.mxu0 %v303
    %305 = vmatprep.subr.mxu0 0.0
    %v306 = vand.u32 %v154, 4294901760
    %v307 = vsub.f32 %v154, %v306
    %v308 = vand.u32 %v307, 4294901760
    %v309 = vsub.f32 %v307, %v308
    %v310 = vand.u32 %v309, 4294901760
    %311 = vmatpush1.msra.mxu0 %v310
    %312 = vmatprep.subr.mxu0 0.0
    %v313 = vand.u32 %v155, 4294901760
    %v314 = vsub.f32 %v155, %v313
    %v315 = vand.u32 %v314, 4294901760
    %v316 = vsub.f32 %v314, %v315
    %v317 = vand.u32 %v316, 4294901760
    %318 = vmatpush1.msra.mxu0 %v317
    %319 = vmatprep.subr.mxu0 0.0
    %320 = vmatpush1.msra.mxu0 0.0
    %321 = vmatprep.subr.mxu0 0.0
    %322 = vmatpush1.msra.mxu0 0.0
    %323 = vmatprep.subr.mxu0 0.0
    %324 = vmatpush1.msra.mxu0 0.0
    %325 = vmatprep.subr.mxu0 0.0
    %326 = vmatpush1.msra.mxu0 0.0
    %327 = vmatprep.subr.mxu0 0.0
    %328 = vmatpush1.msra.mxu0 0.0
    %329 = vmatprep.subr.mxu0 0.0
    %330 = vmatpush1.msra.mxu0 0.0
    %331 = vmatprep.subr.mxu0 0.0
    %332 = vmatpush1.msra.mxu0 0.0
    %333 = vmatprep.subr.mxu0 0.0
    %334 = vmatpush1.msra.mxu0 0.0
    %335 = vmatprep.subr.mxu0 0.0
    %336 = vmatpush1.msra.mxu0 0.0
    %337 = vmatprep.subr.mxu0 0.0
    %338 = vmatpush1.msra.mxu0 0.0
    %339 = vmatprep.subr.mxu0 0.0
    %340 = vmatpush1.msra.mxu0 0.0
    %341 = vmatprep.subr.mxu0 0.0
    %342 = vmatpush1.msra.mxu0 0.0
    %343 = vmatprep.subr.mxu0 0.0
    %344 = vmatpush1.msra.mxu0 0.0
    %345 = vmatprep.subr.mxu0 0.0
    %346 = vmatpush1.msra.mxu0 0.0
    %347 = vmatprep.subr.mxu0 0.0
    %348 = vmatpush1.msra.mxu0 0.0
    %349 = vmatprep.subr.mxu0 0.0
    %350 = vmatpush1.msra.mxu0 0.0
    %351 = vmatprep.subr.mxu0 0.0
    %352 = vmatpush1.msra.mxu0 0.0
    %353 = vmatprep.subr.mxu0 0.0
    %354 = vmatpush1.msra.mxu0 0.0
    %355 = vmatprep.subr.mxu0 0.0
    %356 = vmatpush1.msra.mxu0 0.0
    %357 = vmatprep.subr.mxu0 0.0
    %358 = vmatpush1.msra.mxu0 0.0
    %359 = vmatprep.subr.mxu0 0.0
    %360 = vmatpush1.msra.mxu0 0.0
    %361 = vmatprep.subr.mxu0 0.0
    %362 = vmatpush1.msra.mxu0 0.0
    %363 = vmatprep.subr.mxu0 0.0
    %364 = vmatpush1.msra.mxu0 0.0
    %365 = vmatprep.subr.mxu0 0.0
    %366 = vmatpush1.msra.mxu0 0.0
    %367 = vmatprep.mubr.f32.mxu0 0.0
    %v368 = vand.u32 %v165, 4294901760
    %369 = vmatmul.mubr.f32.gmra.mrb[0].mxu0 %v368
    %v370 = vpop.f32.mrb[0].mxu0
    %v371 = vadd.f32 %v250, %v370
    %v372 = vpop.f32.mrb[0].mxu0
    %373 = vmatprep.mubr.f32.mxu0 0.0
    %v374 = vand.u32 %v168, 4294901760
    %375 = vmatmul.mubr.f32.gmra.mrb[0].mxu0 %v374
    %v376 = vpop.f32.mrb[0].mxu0
    %v377 = vadd.f32 %v260, %v376
    %v378 = vpop.f32.mrb[0].mxu0
    %379 = vdwg.mxu0
    %380 = vmatprep.subr.mxu0 0.0
    %v381 = vand.u32 %v148, 4294901760
    %v382 = vsub.f32 %v148, %v381
    %383 = vmatpush1.msra.mxu0 %v382
    %384 = vmatprep.subr.mxu0 0.0
    %v385 = vand.u32 %v149, 4294901760
    %v386 = vsub.f32 %v149, %v385
    %387 = vmatpush1.msra.mxu0 %v386
    %388 = vmatprep.subr.mxu0 0.0
    %v389 = vand.u32 %v150, 4294901760
    %v390 = vsub.f32 %v150, %v389
    %391 = vmatpush1.msra.mxu0 %v390
    %392 = vmatprep.subr.mxu0 0.0
    %v393 = vand.u32 %v151, 4294901760
    %v394 = vsub.f32 %v151, %v393
    %395 = vmatpush1.msra.mxu0 %v394
    %396 = vmatprep.subr.mxu0 0.0
    %v397 = vand.u32 %v152, 4294901760
    %v398 = vsub.f32 %v152, %v397
    %399 = vmatpush1.msra.mxu0 %v398
    %400 = vmatprep.subr.mxu0 0.0
    %v401 = vand.u32 %v153, 4294901760
    %v402 = vsub.f32 %v153, %v401
    %403 = vmatpush1.msra.mxu0 %v402
    %404 = vmatprep.subr.mxu0 0.0
    %v405 = vand.u32 %v154, 4294901760
    %v406 = vsub.f32 %v154, %v405
    %407 = vmatpush1.msra.mxu0 %v406
    %408 = vmatprep.subr.mxu0 0.0
    %v409 = vand.u32 %v155, 4294901760
    %v410 = vsub.f32 %v155, %v409
    %411 = vmatpush1.msra.mxu0 %v410
    %412 = vmatprep.subr.mxu0 0.0
    %413 = vmatpush1.msra.mxu0 0.0
    %414 = vmatprep.subr.mxu0 0.0
    %415 = vmatpush1.msra.mxu0 0.0
    %416 = vmatprep.subr.mxu0 0.0
    %417 = vmatpush1.msra.mxu0 0.0
    %418 = vmatprep.subr.mxu0 0.0
    %419 = vmatpush1.msra.mxu0 0.0
    %420 = vmatprep.subr.mxu0 0.0
    %421 = vmatpush1.msra.mxu0 0.0
    %422 = vmatprep.subr.mxu0 0.0
    %423 = vmatpush1.msra.mxu0 0.0
    %424 = vmatprep.subr.mxu0 0.0
    %425 = vmatpush1.msra.mxu0 0.0
    %426 = vmatprep.subr.mxu0 0.0
    %427 = vmatpush1.msra.mxu0 0.0
    %428 = vmatprep.subr.mxu0 0.0
    %429 = vmatpush1.msra.mxu0 0.0
    %430 = vmatprep.subr.mxu0 0.0
    %431 = vmatpush1.msra.mxu0 0.0
    %432 = vmatprep.subr.mxu0 0.0
    %433 = vmatpush1.msra.mxu0 0.0
    %434 = vmatprep.subr.mxu0 0.0
    %435 = vmatpush1.msra.mxu0 0.0
    %436 = vmatprep.subr.mxu0 0.0
    %437 = vmatpush1.msra.mxu0 0.0
    %438 = vmatprep.subr.mxu0 0.0
    %439 = vmatpush1.msra.mxu0 0.0
    %440 = vmatprep.subr.mxu0 0.0
    %441 = vmatpush1.msra.mxu0 0.0
    %442 = vmatprep.subr.mxu0 0.0
    %443 = vmatpush1.msra.mxu0 0.0
    %444 = vmatprep.subr.mxu0 0.0
    %445 = vmatpush1.msra.mxu0 0.0
    %446 = vmatprep.subr.mxu0 0.0
    %447 = vmatpush1.msra.mxu0 0.0
    %448 = vmatprep.subr.mxu0 0.0
    %449 = vmatpush1.msra.mxu0 0.0
    %450 = vmatprep.subr.mxu0 0.0
    %451 = vmatpush1.msra.mxu0 0.0
    %452 = vmatprep.subr.mxu0 0.0
    %453 = vmatpush1.msra.mxu0 0.0
    %454 = vmatprep.subr.mxu0 0.0
    %455 = vmatpush1.msra.mxu0 0.0
    %456 = vmatprep.subr.mxu0 0.0
    %457 = vmatpush1.msra.mxu0 0.0
    %458 = vmatprep.subr.mxu0 0.0
    %459 = vmatpush1.msra.mxu0 0.0
    %460 = vmatprep.mubr.f32.mxu0 0.0
    %v461 = vand.u32 %v165, 4294901760
    %v462 = vsub.f32 %v165, %v461
    %463 = vmatmul.mubr.f32.gmra.mrb[0].mxu0 %v462
    %v464 = vpop.f32.mrb[0].mxu0
    %v465 = vadd.f32 %v371, %v464
    %v466 = vpop.f32.mrb[0].mxu0
    %467 = vmatprep.mubr.f32.mxu0 0.0
    %v468 = vand.u32 %v168, 4294901760
    %v469 = vsub.f32 %v168, %v468
    %470 = vmatmul.mubr.f32.gmra.mrb[0].mxu0 %v469
    %v471 = vpop.f32.mrb[0].mxu0
    %v472 = vadd.f32 %v377, %v471
    %v473 = vpop.f32.mrb[0].mxu0
    %474 = vdwg.mxu0
    %475 = vmatprep.subr.mxu0 0.0
    %v476 = vand.u32 %v148, 4294901760
    %477 = vmatpush1.msra.mxu0 %v476
    %478 = vmatprep.subr.mxu0 0.0
    %v479 = vand.u32 %v149, 4294901760
    %480 = vmatpush1.msra.mxu0 %v479
    %481 = vmatprep.subr.mxu0 0.0
    %v482 = vand.u32 %v150, 4294901760
    %483 = vmatpush1.msra.mxu0 %v482
    %484 = vmatprep.subr.mxu0 0.0
    %v485 = vand.u32 %v151, 4294901760
    %486 = vmatpush1.msra.mxu0 %v485
    %487 = vmatprep.subr.mxu0 0.0
    %v488 = vand.u32 %v152, 4294901760
    %489 = vmatpush1.msra.mxu0 %v488
    %490 = vmatprep.subr.mxu0 0.0
    %v491 = vand.u32 %v153, 4294901760
    %492 = vmatpush1.msra.mxu0 %v491
    %493 = vmatprep.subr.mxu0 0.0
    %v494 = vand.u32 %v154, 4294901760
    %495 = vmatpush1.msra.mxu0 %v494
    %496 = vmatprep.subr.mxu0 0.0
    %v497 = vand.u32 %v155, 4294901760
    %498 = vmatpush1.msra.mxu0 %v497
    %499 = vmatprep.subr.mxu0 0.0
    %500 = vmatpush1.msra.mxu0 0.0
    %501 = vmatprep.subr.mxu0 0.0
    %502 = vmatpush1.msra.mxu0 0.0
    %503 = vmatprep.subr.mxu0 0.0
    %504 = vmatpush1.msra.mxu0 0.0
    %505 = vmatprep.subr.mxu0 0.0
    %506 = vmatpush1.msra.mxu0 0.0
    %507 = vmatprep.subr.mxu0 0.0
    %508 = vmatpush1.msra.mxu0 0.0
    %509 = vmatprep.subr.mxu0 0.0
    %510 = vmatpush1.msra.mxu0 0.0
    %511 = vmatprep.subr.mxu0 0.0
    %512 = vmatpush1.msra.mxu0 0.0
    %513 = vmatprep.subr.mxu0 0.0
    %514 = vmatpush1.msra.mxu0 0.0
    %515 = vmatprep.subr.mxu0 0.0
    %516 = vmatpush1.msra.mxu0 0.0
    %517 = vmatprep.subr.mxu0 0.0
    %518 = vmatpush1.msra.mxu0 0.0
    %519 = vmatprep.subr.mxu0 0.0
    %520 = vmatpush1.msra.mxu0 0.0
    %521 = vmatprep.subr.mxu0 0.0
    %522 = vmatpush1.msra.mxu0 0.0
    %523 = vmatprep.subr.mxu0 0.0
    %524 = vmatpush1.msra.mxu0 0.0
    %525 = vmatprep.subr.mxu0 0.0
    %526 = vmatpush1.msra.mxu0 0.0
    %527 = vmatprep.subr.mxu0 0.0
    %528 = vmatpush1.msra.mxu0 0.0
    %529 = vmatprep.subr.mxu0 0.0
    %530 = vmatpush1.msra.mxu0 0.0
    %531 = vmatprep.subr.mxu0 0.0
    %532 = vmatpush1.msra.mxu0 0.0
    %533 = vmatprep.subr.mxu0 0.0
    %534 = vmatpush1.msra.mxu0 0.0
    %535 = vmatprep.subr.mxu0 0.0
    %536 = vmatpush1.msra.mxu0 0.0
    %537 = vmatprep.subr.mxu0 0.0
    %538 = vmatpush1.msra.mxu0 0.0
    %539 = vmatprep.subr.mxu0 0.0
    %540 = vmatpush1.msra.mxu0 0.0
    %541 = vmatprep.subr.mxu0 0.0
    %542 = vmatpush1.msra.mxu0 0.0
    %543 = vmatprep.subr.mxu0 0.0
    %544 = vmatpush1.msra.mxu0 0.0
    %545 = vmatprep.subr.mxu0 0.0
    %546 = vmatpush1.msra.mxu0 0.0
    %547 = vmatprep.mubr.f32.mxu0 0.0
    %v548 = vand.u32 %v165, 4294901760
    %v549 = vsub.f32 %v165, %v548
    %v550 = vand.u32 %v549, 4294901760
    %551 = vmatmul.mubr.f32.gmra.mrb[0].mxu0 %v550
    %v552 = vpop.f32.mrb[0].mxu0
    %v553 = vadd.f32 %v465, %v552
    %v554 = vpop.f32.mrb[0].mxu0
    %555 = vmatprep.mubr.f32.mxu0 0.0
    %v556 = vand.u32 %v168, 4294901760
    %v557 = vsub.f32 %v168, %v556
    %v558 = vand.u32 %v557, 4294901760
    %559 = vmatmul.mubr.f32.gmra.mrb[0].mxu0 %v558
    %v560 = vpop.f32.mrb[0].mxu0
    %v561 = vadd.f32 %v472, %v560
    %v562 = vpop.f32.mrb[0].mxu0
    %563 = vdwg.mxu0
    %564 = vmatprep.subr.mxu0 0.0
    %v565 = vand.u32 %v148, 4294901760
    %v566 = vsub.f32 %v148, %v565
    %v567 = vand.u32 %v566, 4294901760
    %568 = vmatpush1.msra.mxu0 %v567
    %569 = vmatprep.subr.mxu0 0.0
    %v570 = vand.u32 %v149, 4294901760
    %v571 = vsub.f32 %v149, %v570
    %v572 = vand.u32 %v571, 4294901760
    %573 = vmatpush1.msra.mxu0 %v572
    %574 = vmatprep.subr.mxu0 0.0
    %v575 = vand.u32 %v150, 4294901760
    %v576 = vsub.f32 %v150, %v575
    %v577 = vand.u32 %v576, 4294901760
    %578 = vmatpush1.msra.mxu0 %v577
    %579 = vmatprep.subr.mxu0 0.0
    %v580 = vand.u32 %v151, 4294901760
    %v581 = vsub.f32 %v151, %v580
    %v582 = vand.u32 %v581, 4294901760
    %583 = vmatpush1.msra.mxu0 %v582
    %584 = vmatprep.subr.mxu0 0.0
    %v585 = vand.u32 %v152, 4294901760
    %v586 = vsub.f32 %v152, %v585
    %v587 = vand.u32 %v586, 4294901760
    %588 = vmatpush1.msra.mxu0 %v587
    %589 = vmatprep.subr.mxu0 0.0
    %v590 = vand.u32 %v153, 4294901760
    %v591 = vsub.f32 %v153, %v590
    %v592 = vand.u32 %v591, 4294901760
    %593 = vmatpush1.msra.mxu0 %v592
    %594 = vmatprep.subr.mxu0 0.0
    %v595 = vand.u32 %v154, 4294901760
    %v596 = vsub.f32 %v154, %v595
    %v597 = vand.u32 %v596, 4294901760
    %598 = vmatpush1.msra.mxu0 %v597
    %599 = vmatprep.subr.mxu0 0.0
    %v600 = vand.u32 %v155, 4294901760
    %v601 = vsub.f32 %v155, %v600
    %v602 = vand.u32 %v601, 4294901760
    %603 = vmatpush1.msra.mxu0 %v602
    %604 = vmatprep.subr.mxu0 0.0
    %605 = vmatpush1.msra.mxu0 0.0
    %606 = vmatprep.subr.mxu0 0.0
    %607 = vmatpush1.msra.mxu0 0.0
    %608 = vmatprep.subr.mxu0 0.0
    %609 = vmatpush1.msra.mxu0 0.0
    %610 = vmatprep.subr.mxu0 0.0
    %611 = vmatpush1.msra.mxu0 0.0
    %612 = vmatprep.subr.mxu0 0.0
    %613 = vmatpush1.msra.mxu0 0.0
    %614 = vmatprep.subr.mxu0 0.0
    %615 = vmatpush1.msra.mxu0 0.0
    %616 = vmatprep.subr.mxu0 0.0
    %617 = vmatpush1.msra.mxu0 0.0
    %618 = vmatprep.subr.mxu0 0.0
    %619 = vmatpush1.msra.mxu0 0.0
    %620 = vmatprep.subr.mxu0 0.0
    %621 = vmatpush1.msra.mxu0 0.0
    %622 = vmatprep.subr.mxu0 0.0
    %623 = vmatpush1.msra.mxu0 0.0
    %624 = vmatprep.subr.mxu0 0.0
    %625 = vmatpush1.msra.mxu0 0.0
    %626 = vmatprep.subr.mxu0 0.0
    %627 = vmatpush1.msra.mxu0 0.0
    %628 = vmatprep.subr.mxu0 0.0
    %629 = vmatpush1.msra.mxu0 0.0
    %630 = vmatprep.subr.mxu0 0.0
    %631 = vmatpush1.msra.mxu0 0.0
    %632 = vmatprep.subr.mxu0 0.0
    %633 = vmatpush1.msra.mxu0 0.0
    %634 = vmatprep.subr.mxu0 0.0
    %635 = vmatpush1.msra.mxu0 0.0
    %636 = vmatprep.subr.mxu0 0.0
    %637 = vmatpush1.msra.mxu0 0.0
    %638 = vmatprep.subr.mxu0 0.0
    %639 = vmatpush1.msra.mxu0 0.0
    %640 = vmatprep.subr.mxu0 0.0
    %641 = vmatpush1.msra.mxu0 0.0
    %642 = vmatprep.subr.mxu0 0.0
    %643 = vmatpush1.msra.mxu0 0.0
    %644 = vmatprep.subr.mxu0 0.0
    %645 = vmatpush1.msra.mxu0 0.0
    %646 = vmatprep.subr.mxu0 0.0
    %647 = vmatpush1.msra.mxu0 0.0
    %648 = vmatprep.subr.mxu0 0.0
    %649 = vmatpush1.msra.mxu0 0.0
    %650 = vmatprep.subr.mxu0 0.0
    %651 = vmatpush1.msra.mxu0 0.0
    %652 = vmatprep.mubr.f32.mxu0 0.0
    %v653 = vand.u32 %v165, 4294901760
    %654 = vmatmul.mubr.f32.gmra.mrb[0].mxu0 %v653
    %v655 = vpop.f32.mrb[0].mxu0
    %v656 = vadd.f32 %v553, %v655
    %v657 = vpop.f32.mrb[0].mxu0
    %658 = vmatprep.mubr.f32.mxu0 0.0
    %v659 = vand.u32 %v168, 4294901760
    %660 = vmatmul.mubr.f32.gmra.mrb[0].mxu0 %v659
    %v661 = vpop.f32.mrb[0].mxu0
    %v662 = vadd.f32 %v561, %v661
    %v663 = vpop.f32.mrb[0].mxu0
    %664 = vdwg.mxu0
    %665 = vmatprep.subr.mxu0 0.0
    %v666 = vand.u32 %v148, 4294901760
    %667 = vmatpush1.msra.mxu0 %v666
    %668 = vmatprep.subr.mxu0 0.0
    %v669 = vand.u32 %v149, 4294901760
    %670 = vmatpush1.msra.mxu0 %v669
    %671 = vmatprep.subr.mxu0 0.0
    %v672 = vand.u32 %v150, 4294901760
    %673 = vmatpush1.msra.mxu0 %v672
    %674 = vmatprep.subr.mxu0 0.0
    %v675 = vand.u32 %v151, 4294901760
    %676 = vmatpush1.msra.mxu0 %v675
    %677 = vmatprep.subr.mxu0 0.0
    %v678 = vand.u32 %v152, 4294901760
    %679 = vmatpush1.msra.mxu0 %v678
    %680 = vmatprep.subr.mxu0 0.0
    %v681 = vand.u32 %v153, 4294901760
    %682 = vmatpush1.msra.mxu0 %v681
    %683 = vmatprep.subr.mxu0 0.0
    %v684 = vand.u32 %v154, 4294901760
    %685 = vmatpush1.msra.mxu0 %v684
    %686 = vmatprep.subr.mxu0 0.0
    %v687 = vand.u32 %v155, 4294901760
    %688 = vmatpush1.msra.mxu0 %v687
    %689 = vmatprep.subr.mxu0 0.0
    %690 = vmatpush1.msra.mxu0 0.0
    %691 = vmatprep.subr.mxu0 0.0
    %692 = vmatpush1.msra.mxu0 0.0
    %693 = vmatprep.subr.mxu0 0.0
    %694 = vmatpush1.msra.mxu0 0.0
    %695 = vmatprep.subr.mxu0 0.0
    %696 = vmatpush1.msra.mxu0 0.0
    %697 = vmatprep.subr.mxu0 0.0
    %698 = vmatpush1.msra.mxu0 0.0
    %699 = vmatprep.subr.mxu0 0.0
    %700 = vmatpush1.msra.mxu0 0.0
    %701 = vmatprep.subr.mxu0 0.0
    %702 = vmatpush1.msra.mxu0 0.0
    %703 = vmatprep.subr.mxu0 0.0
    %704 = vmatpush1.msra.mxu0 0.0
    %705 = vmatprep.subr.mxu0 0.0
    %706 = vmatpush1.msra.mxu0 0.0
    %707 = vmatprep.subr.mxu0 0.0
    %708 = vmatpush1.msra.mxu0 0.0
    %709 = vmatprep.subr.mxu0 0.0
    %710 = vmatpush1.msra.mxu0 0.0
    %711 = vmatprep.subr.mxu0 0.0
    %712 = vmatpush1.msra.mxu0 0.0
    %713 = vmatprep.subr.mxu0 0.0
    %714 = vmatpush1.msra.mxu0 0.0
    %715 = vmatprep.subr.mxu0 0.0
    %716 = vmatpush1.msra.mxu0 0.0
    %717 = vmatprep.subr.mxu0 0.0
    %718 = vmatpush1.msra.mxu0 0.0
    %719 = vmatprep.subr.mxu0 0.0
    %720 = vmatpush1.msra.mxu0 0.0
    %721 = vmatprep.subr.mxu0 0.0
    %722 = vmatpush1.msra.mxu0 0.0
    %723 = vmatprep.subr.mxu0 0.0
    %724 = vmatpush1.msra.mxu0 0.0
    %725 = vmatprep.subr.mxu0 0.0
    %726 = vmatpush1.msra.mxu0 0.0
    %727 = vmatprep.subr.mxu0 0.0
    %728 = vmatpush1.msra.mxu0 0.0
    %729 = vmatprep.subr.mxu0 0.0
    %730 = vmatpush1.msra.mxu0 0.0
    %731 = vmatprep.subr.mxu0 0.0
    %732 = vmatpush1.msra.mxu0 0.0
    %733 = vmatprep.subr.mxu0 0.0
    %734 = vmatpush1.msra.mxu0 0.0
    %735 = vmatprep.subr.mxu0 0.0
    %736 = vmatpush1.msra.mxu0 0.0
    %737 = vmatprep.mubr.f32.mxu0 0.0
    %v738 = vand.u32 %v165, 4294901760
    %739 = vmatmul.mubr.f32.gmra.mrb[0].mxu0 %v738
    %v740 = vpop.f32.mrb[0].mxu0
    %v741 = vadd.f32 %v656, %v740
    %v742 = vpop.f32.mrb[0].mxu0
    %743 = vmatprep.mubr.f32.mxu0 0.0
    %v744 = vand.u32 %v168, 4294901760
    %745 = vmatmul.mubr.f32.gmra.mrb[0].mxu0 %v744
    %v746 = vpop.f32.mrb[0].mxu0
    %v747 = vadd.f32 %v662, %v746
    %v748 = vpop.f32.mrb[0].mxu0
    %749 = vdwg.mxu0
    %v750 = vmax.f32 %v741, 0.0
    %v751 = vmax.f32 %v747, 0.0
    %v752 = vld [vmem:[#allocation7] sm:$0xff]
    %v753 = vld [vmem:[#allocation7 + $0x8] sm:$0xff]
    %v754 = vld [vmem:[#allocation7 + $0x10] sm:$0xff]
    %v755 = vld [vmem:[#allocation7 + $0x18] sm:$0xff]
    %v756 = vld [vmem:[#allocation7 + $0x20] sm:$0xff]
    %v757 = vld [vmem:[#allocation7 + $0x28] sm:$0xff]
    %v758 = vld [vmem:[#allocation7 + $0x30] sm:$0xff]
    %v759 = vld [vmem:[#allocation7 + $0x38] sm:$0xff]
    %v760 = vld [vmem:[%s4] sm:$0x1]
    %v762 = vlaneseq
    %v763 = vshrl.u32 %v762, 7
    %v764 = vsub.s32 0, %v763
    %v765 = vrot.slane %v760, %v764
    %v768 = vsel %vm163, %v750, 0
    %v771 = vsel %vm163, %v751, 0
    %773 = vmatprep.subr.mxu0 0.0
    %v774 = vand.u32 %v752, 4294901760
    %775 = vmatpush1.msra.mxu0 %v774
    %776 = vmatprep.subr.mxu0 0.0
    %v777 = vand.u32 %v753, 4294901760
    %778 = vmatpush1.msra.mxu0 %v777
    %779 = vmatprep.subr.mxu0 0.0
    %v780 = vand.u32 %v754, 4294901760
    %781 = vmatpush1.msra.mxu0 %v780
    %782 = vmatprep.subr.mxu0 0.0
    %v783 = vand.u32 %v755, 4294901760
    %784 = vmatpush1.msra.mxu0 %v783
    %785 = vmatprep.subr.mxu0 0.0
    %v786 = vand.u32 %v756, 4294901760
    %787 = vmatpush1.msra.mxu0 %v786
    %788 = vmatprep.subr.mxu0 0.0
    %v789 = vand.u32 %v757, 4294901760
    %790 = vmatpush1.msra.mxu0 %v789
    %791 = vmatprep.subr.mxu0 0.0
    %v792 = vand.u32 %v758, 4294901760
    %793 = vmatpush1.msra.mxu0 %v792
    %794 = vmatprep.subr.mxu0 0.0
    %v795 = vand.u32 %v759, 4294901760
    %796 = vmatpush1.msra.mxu0 %v795
    %797 = vmatprep.subr.mxu0 0.0
    %798 = vmatpush1.msra.mxu0 0.0
    %799 = vmatprep.subr.mxu0 0.0
    %800 = vmatpush1.msra.mxu0 0.0
    %801 = vmatprep.subr.mxu0 0.0
    %802 = vmatpush1.msra.mxu0 0.0
    %803 = vmatprep.subr.mxu0 0.0
    %804 = vmatpush1.msra.mxu0 0.0
    %805 = vmatprep.subr.mxu0 0.0
    %806 = vmatpush1.msra.mxu0 0.0
    %807 = vmatprep.subr.mxu0 0.0
    %808 = vmatpush1.msra.mxu0 0.0
    %809 = vmatprep.subr.mxu0 0.0
    %810 = vmatpush1.msra.mxu0 0.0
    %811 = vmatprep.subr.mxu0 0.0
    %812 = vmatpush1.msra.mxu0 0.0
    %813 = vmatprep.subr.mxu0 0.0
    %814 = vmatpush1.msra.mxu0 0.0
    %815 = vmatprep.subr.mxu0 0.0
    %816 = vmatpush1.msra.mxu0 0.0
    %817 = vmatprep.subr.mxu0 0.0
    %818 = vmatpush1.msra.mxu0 0.0
    %819 = vmatprep.subr.mxu0 0.0
    %820 = vmatpush1.msra.mxu0 0.0
    %821 = vmatprep.subr.mxu0 0.0
    %822 = vmatpush1.msra.mxu0 0.0
    %823 = vmatprep.subr.mxu0 0.0
    %824 = vmatpush1.msra.mxu0 0.0
    %825 = vmatprep.subr.mxu0 0.0
    %826 = vmatpush1.msra.mxu0 0.0
    %827 = vmatprep.subr.mxu0 0.0
    %828 = vmatpush1.msra.mxu0 0.0
    %829 = vmatprep.subr.mxu0 0.0
    %830 = vmatpush1.msra.mxu0 0.0
    %831 = vmatprep.subr.mxu0 0.0
    %832 = vmatpush1.msra.mxu0 0.0
    %833 = vmatprep.subr.mxu0 0.0
    %834 = vmatpush1.msra.mxu0 0.0
    %835 = vmatprep.subr.mxu0 0.0
    %836 = vmatpush1.msra.mxu0 0.0
    %837 = vmatprep.subr.mxu0 0.0
    %838 = vmatpush1.msra.mxu0 0.0
    %839 = vmatprep.subr.mxu0 0.0
    %840 = vmatpush1.msra.mxu0 0.0
    %841 = vmatprep.subr.mxu0 0.0
    %842 = vmatpush1.msra.mxu0 0.0
    %843 = vmatprep.subr.mxu0 0.0
    %844 = vmatpush1.msra.mxu0 0.0
    %845 = vmatprep.mubr.f32.mxu0 0.0
    %v846 = vand.u32 %v768, 4294901760
    %v847 = vsub.f32 %v768, %v846
    %v848 = vand.u32 %v847, 4294901760
    %v849 = vsub.f32 %v847, %v848
    %v850 = vand.u32 %v849, 4294901760
    %851 = vmatmul.mubr.f32.gmra.mrb[0].mxu0 %v850
    %v852 = vpop.f32.mrb[0].mxu0
    %v853 = vadd.f32 %v765, %v852
    %v854 = vpop.f32.mrb[0].mxu0
    %855 = vmatprep.mubr.f32.mxu0 0.0
    %v856 = vand.u32 %v771, 4294901760
    %v857 = vsub.f32 %v771, %v856
    %v858 = vand.u32 %v857, 4294901760
    %v859 = vsub.f32 %v857, %v858
    %v860 = vand.u32 %v859, 4294901760
    %861 = vmatmul.mubr.f32.gmra.mrb[0].mxu0 %v860
    %v862 = vpop.f32.mrb[0].mxu0
    %v863 = vadd.f32 %v765, %v862
    %v864 = vpop.f32.mrb[0].mxu0
    %865 = vdwg.mxu0
    %866 = vmatprep.subr.mxu0 0.0
    %v867 = vand.u32 %v752, 4294901760
    %v868 = vsub.f32 %v752, %v867
    %v869 = vand.u32 %v868, 4294901760
    %v870 = vsub.f32 %v868, %v869
    %v871 = vand.u32 %v870, 4294901760
    %872 = vmatpush1.msra.mxu0 %v871
    %873 = vmatprep.subr.mxu0 0.0
    %v874 = vand.u32 %v753, 4294901760
    %v875 = vsub.f32 %v753, %v874
    %v876 = vand.u32 %v875, 4294901760
    %v877 = vsub.f32 %v875, %v876
    %v878 = vand.u32 %v877, 4294901760
    %879 = vmatpush1.msra.mxu0 %v878
    %880 = vmatprep.subr.mxu0 0.0
    %v881 = vand.u32 %v754, 4294901760
    %v882 = vsub.f32 %v754, %v881
    %v883 = vand.u32 %v882, 4294901760
    %v884 = vsub.f32 %v882, %v883
    %v885 = vand.u32 %v884, 4294901760
    %886 = vmatpush1.msra.mxu0 %v885
    %887 = vmatprep.subr.mxu0 0.0
    %v888 = vand.u32 %v755, 4294901760
    %v889 = vsub.f32 %v755, %v888
    %v890 = vand.u32 %v889, 4294901760
    %v891 = vsub.f32 %v889, %v890
    %v892 = vand.u32 %v891, 4294901760
    %893 = vmatpush1.msra.mxu0 %v892
    %894 = vmatprep.subr.mxu0 0.0
    %v895 = vand.u32 %v756, 4294901760
    %v896 = vsub.f32 %v756, %v895
    %v897 = vand.u32 %v896, 4294901760
    %v898 = vsub.f32 %v896, %v897
    %v899 = vand.u32 %v898, 4294901760
    %900 = vmatpush1.msra.mxu0 %v899
    %901 = vmatprep.subr.mxu0 0.0
    %v902 = vand.u32 %v757, 4294901760
    %v903 = vsub.f32 %v757, %v902
    %v904 = vand.u32 %v903, 4294901760
    %v905 = vsub.f32 %v903, %v904
    %v906 = vand.u32 %v905, 4294901760
    %907 = vmatpush1.msra.mxu0 %v906
    %908 = vmatprep.subr.mxu0 0.0
    %v909 = vand.u32 %v758, 4294901760
    %v910 = vsub.f32 %v758, %v909
    %v911 = vand.u32 %v910, 4294901760
    %v912 = vsub.f32 %v910, %v911
    %v913 = vand.u32 %v912, 4294901760
    %914 = vmatpush1.msra.mxu0 %v913
    %915 = vmatprep.subr.mxu0 0.0
    %v916 = vand.u32 %v759, 4294901760
    %v917 = vsub.f32 %v759, %v916
    %v918 = vand.u32 %v917, 4294901760
    %v919 = vsub.f32 %v917, %v918
    %v920 = vand.u32 %v919, 4294901760
    %921 = vmatpush1.msra.mxu0 %v920
    %922 = vmatprep.subr.mxu0 0.0
    %923 = vmatpush1.msra.mxu0 0.0
    %924 = vmatprep.subr.mxu0 0.0
    %925 = vmatpush1.msra.mxu0 0.0
    %926 = vmatprep.subr.mxu0 0.0
    %927 = vmatpush1.msra.mxu0 0.0
    %928 = vmatprep.subr.mxu0 0.0
    %929 = vmatpush1.msra.mxu0 0.0
    %930 = vmatprep.subr.mxu0 0.0
    %931 = vmatpush1.msra.mxu0 0.0
    %932 = vmatprep.subr.mxu0 0.0
    %933 = vmatpush1.msra.mxu0 0.0
    %934 = vmatprep.subr.mxu0 0.0
    %935 = vmatpush1.msra.mxu0 0.0
    %936 = vmatprep.subr.mxu0 0.0
    %937 = vmatpush1.msra.mxu0 0.0
    %938 = vmatprep.subr.mxu0 0.0
    %939 = vmatpush1.msra.mxu0 0.0
    %940 = vmatprep.subr.mxu0 0.0
    %941 = vmatpush1.msra.mxu0 0.0
    %942 = vmatprep.subr.mxu0 0.0
    %943 = vmatpush1.msra.mxu0 0.0
    %944 = vmatprep.subr.mxu0 0.0
    %945 = vmatpush1.msra.mxu0 0.0
    %946 = vmatprep.subr.mxu0 0.0
    %947 = vmatpush1.msra.mxu0 0.0
    %948 = vmatprep.subr.mxu0 0.0
    %949 = vmatpush1.msra.mxu0 0.0
    %950 = vmatprep.subr.mxu0 0.0
    %951 = vmatpush1.msra.mxu0 0.0
    %952 = vmatprep.subr.mxu0 0.0
    %953 = vmatpush1.msra.mxu0 0.0
    %954 = vmatprep.subr.mxu0 0.0
    %955 = vmatpush1.msra.mxu0 0.0
    %956 = vmatprep.subr.mxu0 0.0
    %957 = vmatpush1.msra.mxu0 0.0
    %958 = vmatprep.subr.mxu0 0.0
    %959 = vmatpush1.msra.mxu0 0.0
    %960 = vmatprep.subr.mxu0 0.0
    %961 = vmatpush1.msra.mxu0 0.0
    %962 = vmatprep.subr.mxu0 0.0
    %963 = vmatpush1.msra.mxu0 0.0
    %964 = vmatprep.subr.mxu0 0.0
    %965 = vmatpush1.msra.mxu0 0.0
    %966 = vmatprep.subr.mxu0 0.0
    %967 = vmatpush1.msra.mxu0 0.0
    %968 = vmatprep.subr.mxu0 0.0
    %969 = vmatpush1.msra.mxu0 0.0
    %970 = vmatprep.mubr.f32.mxu0 0.0
    %v971 = vand.u32 %v768, 4294901760
    %972 = vmatmul.mubr.f32.gmra.mrb[0].mxu0 %v971
    %v973 = vpop.f32.mrb[0].mxu0
    %v974 = vadd.f32 %v853, %v973
    %v975 = vpop.f32.mrb[0].mxu0
    %976 = vmatprep.mubr.f32.mxu0 0.0
    %v977 = vand.u32 %v771, 4294901760
    %978 = vmatmul.mubr.f32.gmra.mrb[0].mxu0 %v977
    %v979 = vpop.f32.mrb[0].mxu0
    %v980 = vadd.f32 %v863, %v979
    %v981 = vpop.f32.mrb[0].mxu0
    %982 = vdwg.mxu0
    %983 = vmatprep.subr.mxu0 0.0
    %v984 = vand.u32 %v752, 4294901760
    %v985 = vsub.f32 %v752, %v984
    %986 = vmatpush1.msra.mxu0 %v985
    %987 = vmatprep.subr.mxu0 0.0
    %v988 = vand.u32 %v753, 4294901760
    %v989 = vsub.f32 %v753, %v988
    %990 = vmatpush1.msra.mxu0 %v989
    %991 = vmatprep.subr.mxu0 0.0
    %v992 = vand.u32 %v754, 4294901760
    %v993 = vsub.f32 %v754, %v992
    %994 = vmatpush1.msra.mxu0 %v993
    %995 = vmatprep.subr.mxu0 0.0
    %v996 = vand.u32 %v755, 4294901760
    %v997 = vsub.f32 %v755, %v996
    %998 = vmatpush1.msra.mxu0 %v997
    %999 = vmatprep.subr.mxu0 0.0
    %v1000 = vand.u32 %v756, 4294901760
    %v1001 = vsub.f32 %v756, %v1000
    %1002 = vmatpush1.msra.mxu0 %v1001
    %1003 = vmatprep.subr.mxu0 0.0
    %v1004 = vand.u32 %v757, 4294901760
    %v1005 = vsub.f32 %v757, %v1004
    %1006 = vmatpush1.msra.mxu0 %v1005
    %1007 = vmatprep.subr.mxu0 0.0
    %v1008 = vand.u32 %v758, 4294901760
    %v1009 = vsub.f32 %v758, %v1008
    %1010 = vmatpush1.msra.mxu0 %v1009
    %1011 = vmatprep.subr.mxu0 0.0
    %v1012 = vand.u32 %v759, 4294901760
    %v1013 = vsub.f32 %v759, %v1012
    %1014 = vmatpush1.msra.mxu0 %v1013
    %1015 = vmatprep.subr.mxu0 0.0
    %1016 = vmatpush1.msra.mxu0 0.0
    %1017 = vmatprep.subr.mxu0 0.0
    %1018 = vmatpush1.msra.mxu0 0.0
    %1019 = vmatprep.subr.mxu0 0.0
    %1020 = vmatpush1.msra.mxu0 0.0
    %1021 = vmatprep.subr.mxu0 0.0
    %1022 = vmatpush1.msra.mxu0 0.0
    %1023 = vmatprep.subr.mxu0 0.0
    %1024 = vmatpush1.msra.mxu0 0.0
    %1025 = vmatprep.subr.mxu0 0.0
    %1026 = vmatpush1.msra.mxu0 0.0
    %1027 = vmatprep.subr.mxu0 0.0
    %1028 = vmatpush1.msra.mxu0 0.0
    %1029 = vmatprep.subr.mxu0 0.0
    %1030 = vmatpush1.msra.mxu0 0.0
    %1031 = vmatprep.subr.mxu0 0.0
    %1032 = vmatpush1.msra.mxu0 0.0
    %1033 = vmatprep.subr.mxu0 0.0
    %1034 = vmatpush1.msra.mxu0 0.0
    %1035 = vmatprep.subr.mxu0 0.0
    %1036 = vmatpush1.msra.mxu0 0.0
    %1037 = vmatprep.subr.mxu0 0.0
    %1038 = vmatpush1.msra.mxu0 0.0
    %1039 = vmatprep.subr.mxu0 0.0
    %1040 = vmatpush1.msra.mxu0 0.0
    %1041 = vmatprep.subr.mxu0 0.0
    %1042 = vmatpush1.msra.mxu0 0.0
    %1043 = vmatprep.subr.mxu0 0.0
    %1044 = vmatpush1.msra.mxu0 0.0
    %1045 = vmatprep.subr.mxu0 0.0
    %1046 = vmatpush1.msra.mxu0 0.0
    %1047 = vmatprep.subr.mxu0 0.0
    %1048 = vmatpush1.msra.mxu0 0.0
    %1049 = vmatprep.subr.mxu0 0.0
    %1050 = vmatpush1.msra.mxu0 0.0
    %1051 = vmatprep.subr.mxu0 0.0
    %1052 = vmatpush1.msra.mxu0 0.0
    %1053 = vmatprep.subr.mxu0 0.0
    %1054 = vmatpush1.msra.mxu0 0.0
    %1055 = vmatprep.subr.mxu0 0.0
    %1056 = vmatpush1.msra.mxu0 0.0
    %1057 = vmatprep.subr.mxu0 0.0
    %1058 = vmatpush1.msra.mxu0 0.0
    %1059 = vmatprep.subr.mxu0 0.0
    %1060 = vmatpush1.msra.mxu0 0.0
    %1061 = vmatprep.subr.mxu0 0.0
    %1062 = vmatpush1.msra.mxu0 0.0
    %1063 = vmatprep.mubr.f32.mxu0 0.0
    %v1064 = vand.u32 %v768, 4294901760
    %v1065 = vsub.f32 %v768, %v1064
    %1066 = vmatmul.mubr.f32.gmra.mrb[0].mxu0 %v1065
    %v1067 = vpop.f32.mrb[0].mxu0
    %v1068 = vadd.f32 %v974, %v1067
    %v1069 = vpop.f32.mrb[0].mxu0
    %1070 = vmatprep.mubr.f32.mxu0 0.0
    %v1071 = vand.u32 %v771, 4294901760
    %v1072 = vsub.f32 %v771, %v1071
    %1073 = vmatmul.mubr.f32.gmra.mrb[0].mxu0 %v1072
    %v1074 = vpop.f32.mrb[0].mxu0
    %v1075 = vadd.f32 %v980, %v1074
    %v1076 = vpop.f32.mrb[0].mxu0
    %1077 = vdwg.mxu0
    %1078 = vmatprep.subr.mxu0 0.0
    %v1079 = vand.u32 %v752, 4294901760
    %1080 = vmatpush1.msra.mxu0 %v1079
    %1081 = vmatprep.subr.mxu0 0.0
    %v1082 = vand.u32 %v753, 4294901760
    %1083 = vmatpush1.msra.mxu0 %v1082
    %1084 = vmatprep.subr.mxu0 0.0
    %v1085 = vand.u32 %v754, 4294901760
    %1086 = vmatpush1.msra.mxu0 %v1085
    %1087 = vmatprep.subr.mxu0 0.0
    %v1088 = vand.u32 %v755, 4294901760
    %1089 = vmatpush1.msra.mxu0 %v1088
    %1090 = vmatprep.subr.mxu0 0.0
    %v1091 = vand.u32 %v756, 4294901760
    %1092 = vmatpush1.msra.mxu0 %v1091
    %1093 = vmatprep.subr.mxu0 0.0
    %v1094 = vand.u32 %v757, 4294901760
    %1095 = vmatpush1.msra.mxu0 %v1094
    %1096 = vmatprep.subr.mxu0 0.0
    %v1097 = vand.u32 %v758, 4294901760
    %1098 = vmatpush1.msra.mxu0 %v1097
    %1099 = vmatprep.subr.mxu0 0.0
    %v1100 = vand.u32 %v759, 4294901760
    %1101 = vmatpush1.msra.mxu0 %v1100
    %1102 = vmatprep.subr.mxu0 0.0
    %1103 = vmatpush1.msra.mxu0 0.0
    %1104 = vmatprep.subr.mxu0 0.0
    %1105 = vmatpush1.msra.mxu0 0.0
    %1106 = vmatprep.subr.mxu0 0.0
    %1107 = vmatpush1.msra.mxu0 0.0
    %1108 = vmatprep.subr.mxu0 0.0
    %1109 = vmatpush1.msra.mxu0 0.0
    %1110 = vmatprep.subr.mxu0 0.0
    %1111 = vmatpush1.msra.mxu0 0.0
    %1112 = vmatprep.subr.mxu0 0.0
    %1113 = vmatpush1.msra.mxu0 0.0
    %1114 = vmatprep.subr.mxu0 0.0
    %1115 = vmatpush1.msra.mxu0 0.0
    %1116 = vmatprep.subr.mxu0 0.0
    %1117 = vmatpush1.msra.mxu0 0.0
    %1118 = vmatprep.subr.mxu0 0.0
    %1119 = vmatpush1.msra.mxu0 0.0
    %1120 = vmatprep.subr.mxu0 0.0
    %1121 = vmatpush1.msra.mxu0 0.0
    %1122 = vmatprep.subr.mxu0 0.0
    %1123 = vmatpush1.msra.mxu0 0.0
    %1124 = vmatprep.subr.mxu0 0.0
    %1125 = vmatpush1.msra.mxu0 0.0
    %1126 = vmatprep.subr.mxu0 0.0
    %1127 = vmatpush1.msra.mxu0 0.0
    %1128 = vmatprep.subr.mxu0 0.0
    %1129 = vmatpush1.msra.mxu0 0.0
    %1130 = vmatprep.subr.mxu0 0.0
    %1131 = vmatpush1.msra.mxu0 0.0
    %1132 = vmatprep.subr.mxu0 0.0
    %1133 = vmatpush1.msra.mxu0 0.0
    %1134 = vmatprep.subr.mxu0 0.0
    %1135 = vmatpush1.msra.mxu0 0.0
    %1136 = vmatprep.subr.mxu0 0.0
    %1137 = vmatpush1.msra.mxu0 0.0
    %1138 = vmatprep.subr.mxu0 0.0
    %1139 = vmatpush1.msra.mxu0 0.0
    %1140 = vmatprep.subr.mxu0 0.0
    %1141 = vmatpush1.msra.mxu0 0.0
    %1142 = vmatprep.subr.mxu0 0.0
    %1143 = vmatpush1.msra.mxu0 0.0
    %1144 = vmatprep.subr.mxu0 0.0
    %1145 = vmatpush1.msra.mxu0 0.0
    %1146 = vmatprep.subr.mxu0 0.0
    %1147 = vmatpush1.msra.mxu0 0.0
    %1148 = vmatprep.subr.mxu0 0.0
    %1149 = vmatpush1.msra.mxu0 0.0
    %1150 = vmatprep.mubr.f32.mxu0 0.0
    %v1151 = vand.u32 %v768, 4294901760
    %v1152 = vsub.f32 %v768, %v1151
    %v1153 = vand.u32 %v1152, 4294901760
    %1154 = vmatmul.mubr.f32.gmra.mrb[0].mxu0 %v1153
    %v1155 = vpop.f32.mrb[0].mxu0
    %v1156 = vadd.f32 %v1068, %v1155
    %v1157 = vpop.f32.mrb[0].mxu0
    %1158 = vmatprep.mubr.f32.mxu0 0.0
    %v1159 = vand.u32 %v771, 4294901760
    %v1160 = vsub.f32 %v771, %v1159
    %v1161 = vand.u32 %v1160, 4294901760
    %1162 = vmatmul.mubr.f32.gmra.mrb[0].mxu0 %v1161
    %v1163 = vpop.f32.mrb[0].mxu0
    %v1164 = vadd.f32 %v1075, %v1163
    %v1165 = vpop.f32.mrb[0].mxu0
    %1166 = vdwg.mxu0
    %1167 = vmatprep.subr.mxu0 0.0
    %v1168 = vand.u32 %v752, 4294901760
    %v1169 = vsub.f32 %v752, %v1168
    %v1170 = vand.u32 %v1169, 4294901760
    %1171 = vmatpush1.msra.mxu0 %v1170
    %1172 = vmatprep.subr.mxu0 0.0
    %v1173 = vand.u32 %v753, 4294901760
    %v1174 = vsub.f32 %v753, %v1173
    %v1175 = vand.u32 %v1174, 4294901760
    %1176 = vmatpush1.msra.mxu0 %v1175
    %1177 = vmatprep.subr.mxu0 0.0
    %v1178 = vand.u32 %v754, 4294901760
    %v1179 = vsub.f32 %v754, %v1178
    %v1180 = vand.u32 %v1179, 4294901760
    %1181 = vmatpush1.msra.mxu0 %v1180
    %1182 = vmatprep.subr.mxu0 0.0
    %v1183 = vand.u32 %v755, 4294901760
    %v1184 = vsub.f32 %v755, %v1183
    %v1185 = vand.u32 %v1184, 4294901760
    %1186 = vmatpush1.msra.mxu0 %v1185
    %1187 = vmatprep.subr.mxu0 0.0
    %v1188 = vand.u32 %v756, 4294901760
    %v1189 = vsub.f32 %v756, %v1188
    %v1190 = vand.u32 %v1189, 4294901760
    %1191 = vmatpush1.msra.mxu0 %v1190
    %1192 = vmatprep.subr.mxu0 0.0
    %v1193 = vand.u32 %v757, 4294901760
    %v1194 = vsub.f32 %v757, %v1193
    %v1195 = vand.u32 %v1194, 4294901760
    %1196 = vmatpush1.msra.mxu0 %v1195
    %1197 = vmatprep.subr.mxu0 0.0
    %v1198 = vand.u32 %v758, 4294901760
    %v1199 = vsub.f32 %v758, %v1198
    %v1200 = vand.u32 %v1199, 4294901760
    %1201 = vmatpush1.msra.mxu0 %v1200
    %1202 = vmatprep.subr.mxu0 0.0
    %v1203 = vand.u32 %v759, 4294901760
    %v1204 = vsub.f32 %v759, %v1203
    %v1205 = vand.u32 %v1204, 4294901760
    %1206 = vmatpush1.msra.mxu0 %v1205
    %1207 = vmatprep.subr.mxu0 0.0
    %1208 = vmatpush1.msra.mxu0 0.0
    %1209 = vmatprep.subr.mxu0 0.0
    %1210 = vmatpush1.msra.mxu0 0.0
    %1211 = vmatprep.subr.mxu0 0.0
    %1212 = vmatpush1.msra.mxu0 0.0
    %1213 = vmatprep.subr.mxu0 0.0
    %1214 = vmatpush1.msra.mxu0 0.0
    %1215 = vmatprep.subr.mxu0 0.0
    %1216 = vmatpush1.msra.mxu0 0.0
    %1217 = vmatprep.subr.mxu0 0.0
    %1218 = vmatpush1.msra.mxu0 0.0
    %1219 = vmatprep.subr.mxu0 0.0
    %1220 = vmatpush1.msra.mxu0 0.0
    %1221 = vmatprep.subr.mxu0 0.0
    %1222 = vmatpush1.msra.mxu0 0.0
    %1223 = vmatprep.subr.mxu0 0.0
    %1224 = vmatpush1.msra.mxu0 0.0
    %1225 = vmatprep.subr.mxu0 0.0
    %1226 = vmatpush1.msra.mxu0 0.0
    %1227 = vmatprep.subr.mxu0 0.0
    %1228 = vmatpush1.msra.mxu0 0.0
    %1229 = vmatprep.subr.mxu0 0.0
    %1230 = vmatpush1.msra.mxu0 0.0
    %1231 = vmatprep.subr.mxu0 0.0
    %1232 = vmatpush1.msra.mxu0 0.0
    %1233 = vmatprep.subr.mxu0 0.0
    %1234 = vmatpush1.msra.mxu0 0.0
    %1235 = vmatprep.subr.mxu0 0.0
    %1236 = vmatpush1.msra.mxu0 0.0
    %1237 = vmatprep.subr.mxu0 0.0
    %1238 = vmatpush1.msra.mxu0 0.0
    %1239 = vmatprep.subr.mxu0 0.0
    %1240 = vmatpush1.msra.mxu0 0.0
    %1241 = vmatprep.subr.mxu0 0.0
    %1242 = vmatpush1.msra.mxu0 0.0
    %1243 = vmatprep.subr.mxu0 0.0
    %1244 = vmatpush1.msra.mxu0 0.0
    %1245 = vmatprep.subr.mxu0 0.0
    %1246 = vmatpush1.msra.mxu0 0.0
    %1247 = vmatprep.subr.mxu0 0.0
    %1248 = vmatpush1.msra.mxu0 0.0
    %1249 = vmatprep.subr.mxu0 0.0
    %1250 = vmatpush1.msra.mxu0 0.0
    %1251 = vmatprep.subr.mxu0 0.0
    %1252 = vmatpush1.msra.mxu0 0.0
    %1253 = vmatprep.subr.mxu0 0.0
    %1254 = vmatpush1.msra.mxu0 0.0
    %1255 = vmatprep.mubr.f32.mxu0 0.0
    %v1256 = vand.u32 %v768, 4294901760
    %1257 = vmatmul.mubr.f32.gmra.mrb[0].mxu0 %v1256
    %v1258 = vpop.f32.mrb[0].mxu0
    %v1259 = vadd.f32 %v1156, %v1258
    %v1260 = vpop.f32.mrb[0].mxu0
    %1261 = vmatprep.mubr.f32.mxu0 0.0
    %v1262 = vand.u32 %v771, 4294901760
    %1263 = vmatmul.mubr.f32.gmra.mrb[0].mxu0 %v1262
    %v1264 = vpop.f32.mrb[0].mxu0
    %v1265 = vadd.f32 %v1164, %v1264
    %v1266 = vpop.f32.mrb[0].mxu0
    %1267 = vdwg.mxu0
    %1268 = vmatprep.subr.mxu0 0.0
    %v1269 = vand.u32 %v752, 4294901760
    %1270 = vmatpush1.msra.mxu0 %v1269
    %1271 = vmatprep.subr.mxu0 0.0
    %v1272 = vand.u32 %v753, 4294901760
    %1273 = vmatpush1.msra.mxu0 %v1272
    %1274 = vmatprep.subr.mxu0 0.0
    %v1275 = vand.u32 %v754, 4294901760
    %1276 = vmatpush1.msra.mxu0 %v1275
    %1277 = vmatprep.subr.mxu0 0.0
    %v1278 = vand.u32 %v755, 4294901760
    %1279 = vmatpush1.msra.mxu0 %v1278
    %1280 = vmatprep.subr.mxu0 0.0
    %v1281 = vand.u32 %v756, 4294901760
    %1282 = vmatpush1.msra.mxu0 %v1281
    %1283 = vmatprep.subr.mxu0 0.0
    %v1284 = vand.u32 %v757, 4294901760
    %1285 = vmatpush1.msra.mxu0 %v1284
    %1286 = vmatprep.subr.mxu0 0.0
    %v1287 = vand.u32 %v758, 4294901760
    %1288 = vmatpush1.msra.mxu0 %v1287
    %1289 = vmatprep.subr.mxu0 0.0
    %v1290 = vand.u32 %v759, 4294901760
    %1291 = vmatpush1.msra.mxu0 %v1290
    %1292 = vmatprep.subr.mxu0 0.0
    %1293 = vmatpush1.msra.mxu0 0.0
    %1294 = vmatprep.subr.mxu0 0.0
    %1295 = vmatpush1.msra.mxu0 0.0
    %1296 = vmatprep.subr.mxu0 0.0
    %1297 = vmatpush1.msra.mxu0 0.0
    %1298 = vmatprep.subr.mxu0 0.0
    %1299 = vmatpush1.msra.mxu0 0.0
    %1300 = vmatprep.subr.mxu0 0.0
    %1301 = vmatpush1.msra.mxu0 0.0
    %1302 = vmatprep.subr.mxu0 0.0
    %1303 = vmatpush1.msra.mxu0 0.0
    %1304 = vmatprep.subr.mxu0 0.0
    %1305 = vmatpush1.msra.mxu0 0.0
    %1306 = vmatprep.subr.mxu0 0.0
    %1307 = vmatpush1.msra.mxu0 0.0
    %1308 = vmatprep.subr.mxu0 0.0
    %1309 = vmatpush1.msra.mxu0 0.0
    %1310 = vmatprep.subr.mxu0 0.0
    %1311 = vmatpush1.msra.mxu0 0.0
    %1312 = vmatprep.subr.mxu0 0.0
    %1313 = vmatpush1.msra.mxu0 0.0
    %1314 = vmatprep.subr.mxu0 0.0
    %1315 = vmatpush1.msra.mxu0 0.0
    %1316 = vmatprep.subr.mxu0 0.0
    %1317 = vmatpush1.msra.mxu0 0.0
    %1318 = vmatprep.subr.mxu0 0.0
    %1319 = vmatpush1.msra.mxu0 0.0
    %1320 = vmatprep.subr.mxu0 0.0
    %1321 = vmatpush1.msra.mxu0 0.0
    %1322 = vmatprep.subr.mxu0 0.0
    %1323 = vmatpush1.msra.mxu0 0.0
    %1324 = vmatprep.subr.mxu0 0.0
    %1325 = vmatpush1.msra.mxu0 0.0
    %1326 = vmatprep.subr.mxu0 0.0
    %1327 = vmatpush1.msra.mxu0 0.0
    %1328 = vmatprep.subr.mxu0 0.0
    %1329 = vmatpush1.msra.mxu0 0.0
    %1330 = vmatprep.subr.mxu0 0.0
    %1331 = vmatpush1.msra.mxu0 0.0
    %1332 = vmatprep.subr.mxu0 0.0
    %1333 = vmatpush1.msra.mxu0 0.0
    %1334 = vmatprep.subr.mxu0 0.0
    %1335 = vmatpush1.msra.mxu0 0.0
    %1336 = vmatprep.subr.mxu0 0.0
    %1337 = vmatpush1.msra.mxu0 0.0
    %1338 = vmatprep.subr.mxu0 0.0
    %1339 = vmatpush1.msra.mxu0 0.0
    %1340 = vmatprep.mubr.f32.mxu0 0.0
    %v1341 = vand.u32 %v768, 4294901760
    %1342 = vmatmul.mubr.f32.gmra.mrb[0].mxu0 %v1341
    %v1343 = vpop.f32.mrb[0].mxu0
    %v1344 = vadd.f32 %v1259, %v1343
    %v1345 = vpop.f32.mrb[0].mxu0
    %1346 = vmatprep.mubr.f32.mxu0 0.0
    %v1347 = vand.u32 %v771, 4294901760
    %1348 = vmatmul.mubr.f32.gmra.mrb[0].mxu0 %v1347
    %v1349 = vpop.f32.mrb[0].mxu0
    %v1350 = vadd.f32 %v1265, %v1349
    %v1351 = vpop.f32.mrb[0].mxu0
    %1352 = vdwg.mxu0
    %v1353 = vld [vmem:[#allocation8] sm:$0xff]
    %v1354 = vld [vmem:[#allocation8 + $0x8] sm:$0xff]
    %v1355 = vld [vmem:[#allocation8 + $0x10] sm:$0xff]
    %v1356 = vld [vmem:[#allocation8 + $0x18] sm:$0xff]
    %v1357 = vld [vmem:[#allocation8 + $0x20] sm:$0xff]
    %v1358 = vld [vmem:[#allocation8 + $0x28] sm:$0xff]
    %v1359 = vld [vmem:[#allocation8 + $0x30] sm:$0xff]
    %v1360 = vld [vmem:[#allocation8 + $0x38] sm:$0xff]
    %v1361 = vld [vmem:[%s6] sm:$0x1]
    %v1363 = vlaneseq
    %v1364 = vshrl.u32 %v1363, 7
    %v1365 = vsub.s32 0, %v1364
    %v1366 = vrot.slane %v1361, %v1365
    %1368 = vmatprep.subr.mxu0 0.0
    %v1369 = vand.u32 %v1353, 4294901760
    %1370 = vmatpush1.msra.mxu0 %v1369
    %1371 = vmatprep.subr.mxu0 0.0
    %v1372 = vand.u32 %v1354, 4294901760
    %1373 = vmatpush1.msra.mxu0 %v1372
    %1374 = vmatprep.subr.mxu0 0.0
    %v1375 = vand.u32 %v1355, 4294901760
    %1376 = vmatpush1.msra.mxu0 %v1375
    %1377 = vmatprep.subr.mxu0 0.0
    %v1378 = vand.u32 %v1356, 4294901760
    %1379 = vmatpush1.msra.mxu0 %v1378
    %1380 = vmatprep.subr.mxu0 0.0
    %v1381 = vand.u32 %v1357, 4294901760
    %1382 = vmatpush1.msra.mxu0 %v1381
    %1383 = vmatprep.subr.mxu0 0.0
    %v1384 = vand.u32 %v1358, 4294901760
    %1385 = vmatpush1.msra.mxu0 %v1384
    %1386 = vmatprep.subr.mxu0 0.0
    %v1387 = vand.u32 %v1359, 4294901760
    %1388 = vmatpush1.msra.mxu0 %v1387
    %1389 = vmatprep.subr.mxu0 0.0
    %v1390 = vand.u32 %v1360, 4294901760
    %1391 = vmatpush1.msra.mxu0 %v1390
    %1392 = vmatprep.subr.mxu0 0.0
    %1393 = vmatpush1.msra.mxu0 0.0
    %1394 = vmatprep.subr.mxu0 0.0
    %1395 = vmatpush1.msra.mxu0 0.0
    %1396 = vmatprep.subr.mxu0 0.0
    %1397 = vmatpush1.msra.mxu0 0.0
    %1398 = vmatprep.subr.mxu0 0.0
    %1399 = vmatpush1.msra.mxu0 0.0
    %1400 = vmatprep.subr.mxu0 0.0
    %1401 = vmatpush1.msra.mxu0 0.0
    %1402 = vmatprep.subr.mxu0 0.0
    %1403 = vmatpush1.msra.mxu0 0.0
    %1404 = vmatprep.subr.mxu0 0.0
    %1405 = vmatpush1.msra.mxu0 0.0
    %1406 = vmatprep.subr.mxu0 0.0
    %1407 = vmatpush1.msra.mxu0 0.0
    %1408 = vmatprep.subr.mxu0 0.0
    %1409 = vmatpush1.msra.mxu0 0.0
    %1410 = vmatprep.subr.mxu0 0.0
    %1411 = vmatpush1.msra.mxu0 0.0
    %1412 = vmatprep.subr.mxu0 0.0
    %1413 = vmatpush1.msra.mxu0 0.0
    %1414 = vmatprep.subr.mxu0 0.0
    %1415 = vmatpush1.msra.mxu0 0.0
    %1416 = vmatprep.subr.mxu0 0.0
    %1417 = vmatpush1.msra.mxu0 0.0
    %1418 = vmatprep.subr.mxu0 0.0
    %1419 = vmatpush1.msra.mxu0 0.0
    %1420 = vmatprep.subr.mxu0 0.0
    %1421 = vmatpush1.msra.mxu0 0.0
    %1422 = vmatprep.subr.mxu0 0.0
    %1423 = vmatpush1.msra.mxu0 0.0
    %1424 = vmatprep.subr.mxu0 0.0
    %1425 = vmatpush1.msra.mxu0 0.0
    %1426 = vmatprep.subr.mxu0 0.0
    %1427 = vmatpush1.msra.mxu0 0.0
    %1428 = vmatprep.subr.mxu0 0.0
    %1429 = vmatpush1.msra.mxu0 0.0
    %1430 = vmatprep.subr.mxu0 0.0
    %1431 = vmatpush1.msra.mxu0 0.0
    %1432 = vmatprep.subr.mxu0 0.0
    %1433 = vmatpush1.msra.mxu0 0.0
    %1434 = vmatprep.subr.mxu0 0.0
    %1435 = vmatpush1.msra.mxu0 0.0
    %1436 = vmatprep.subr.mxu0 0.0
    %1437 = vmatpush1.msra.mxu0 0.0
    %1438 = vmatprep.subr.mxu0 0.0
    %1439 = vmatpush1.msra.mxu0 0.0
    %1440 = vmatprep.mubr.f32.mxu0 0.0
    %v1441 = vand.u32 %v768, 4294901760
    %v1442 = vsub.f32 %v768, %v1441
    %v1443 = vand.u32 %v1442, 4294901760
    %v1444 = vsub.f32 %v1442, %v1443
    %v1445 = vand.u32 %v1444, 4294901760
    %1446 = vmatmul.mubr.f32.gmra.mrb[0].mxu0 %v1445
    %v1447 = vpop.f32.mrb[0].mxu0
    %v1448 = vadd.f32 %v1366, %v1447
    %v1449 = vpop.f32.mrb[0].mxu0
    %1450 = vmatprep.mubr.f32.mxu0 0.0
    %v1451 = vand.u32 %v771, 4294901760
    %v1452 = vsub.f32 %v771, %v1451
    %v1453 = vand.u32 %v1452, 4294901760
    %v1454 = vsub.f32 %v1452, %v1453
    %v1455 = vand.u32 %v1454, 4294901760
    %1456 = vmatmul.mubr.f32.gmra.mrb[0].mxu0 %v1455
    %v1457 = vpop.f32.mrb[0].mxu0
    %v1458 = vadd.f32 %v1366, %v1457
    %v1459 = vpop.f32.mrb[0].mxu0
    %1460 = vdwg.mxu0
    %1461 = vmatprep.subr.mxu0 0.0
    %v1462 = vand.u32 %v1353, 4294901760
    %v1463 = vsub.f32 %v1353, %v1462
    %v1464 = vand.u32 %v1463, 4294901760
    %v1465 = vsub.f32 %v1463, %v1464
    %v1466 = vand.u32 %v1465, 4294901760
    %1467 = vmatpush1.msra.mxu0 %v1466
    %1468 = vmatprep.subr.mxu0 0.0
    %v1469 = vand.u32 %v1354, 4294901760
    %v1470 = vsub.f32 %v1354, %v1469
    %v1471 = vand.u32 %v1470, 4294901760
    %v1472 = vsub.f32 %v1470, %v1471
    %v1473 = vand.u32 %v1472, 4294901760
    %1474 = vmatpush1.msra.mxu0 %v1473
    %1475 = vmatprep.subr.mxu0 0.0
    %v1476 = vand.u32 %v1355, 4294901760
    %v1477 = vsub.f32 %v1355, %v1476
    %v1478 = vand.u32 %v1477, 4294901760
    %v1479 = vsub.f32 %v1477, %v1478
    %v1480 = vand.u32 %v1479, 4294901760
    %1481 = vmatpush1.msra.mxu0 %v1480
    %1482 = vmatprep.subr.mxu0 0.0
    %v1483 = vand.u32 %v1356, 4294901760
    %v1484 = vsub.f32 %v1356, %v1483
    %v1485 = vand.u32 %v1484, 4294901760
    %v1486 = vsub.f32 %v1484, %v1485
    %v1487 = vand.u32 %v1486, 4294901760
    %1488 = vmatpush1.msra.mxu0 %v1487
    %1489 = vmatprep.subr.mxu0 0.0
    %v1490 = vand.u32 %v1357, 4294901760
    %v1491 = vsub.f32 %v1357, %v1490
    %v1492 = vand.u32 %v1491, 4294901760
    %v1493 = vsub.f32 %v1491, %v1492
    %v1494 = vand.u32 %v1493, 4294901760
    %1495 = vmatpush1.msra.mxu0 %v1494
    %1496 = vmatprep.subr.mxu0 0.0
    %v1497 = vand.u32 %v1358, 4294901760
    %v1498 = vsub.f32 %v1358, %v1497
    %v1499 = vand.u32 %v1498, 4294901760
    %v1500 = vsub.f32 %v1498, %v1499
    %v1501 = vand.u32 %v1500, 4294901760
    %1502 = vmatpush1.msra.mxu0 %v1501
    %1503 = vmatprep.subr.mxu0 0.0
    %v1504 = vand.u32 %v1359, 4294901760
    %v1505 = vsub.f32 %v1359, %v1504
    %v1506 = vand.u32 %v1505, 4294901760
    %v1507 = vsub.f32 %v1505, %v1506
    %v1508 = vand.u32 %v1507, 4294901760
    %1509 = vmatpush1.msra.mxu0 %v1508
    %1510 = vmatprep.subr.mxu0 0.0
    %v1511 = vand.u32 %v1360, 4294901760
    %v1512 = vsub.f32 %v1360, %v1511
    %v1513 = vand.u32 %v1512, 4294901760
    %v1514 = vsub.f32 %v1512, %v1513
    %v1515 = vand.u32 %v1514, 4294901760
    %1516 = vmatpush1.msra.mxu0 %v1515
    %1517 = vmatprep.subr.mxu0 0.0
    %1518 = vmatpush1.msra.mxu0 0.0
    %1519 = vmatprep.subr.mxu0 0.0
    %1520 = vmatpush1.msra.mxu0 0.0
    %1521 = vmatprep.subr.mxu0 0.0
    %1522 = vmatpush1.msra.mxu0 0.0
    %1523 = vmatprep.subr.mxu0 0.0
    %1524 = vmatpush1.msra.mxu0 0.0
    %1525 = vmatprep.subr.mxu0 0.0
    %1526 = vmatpush1.msra.mxu0 0.0
    %1527 = vmatprep.subr.mxu0 0.0
    %1528 = vmatpush1.msra.mxu0 0.0
    %1529 = vmatprep.subr.mxu0 0.0
    %1530 = vmatpush1.msra.mxu0 0.0
    %1531 = vmatprep.subr.mxu0 0.0
    %1532 = vmatpush1.msra.mxu0 0.0
    %1533 = vmatprep.subr.mxu0 0.0
    %1534 = vmatpush1.msra.mxu0 0.0
    %1535 = vmatprep.subr.mxu0 0.0
    %1536 = vmatpush1.msra.mxu0 0.0
    %1537 = vmatprep.subr.mxu0 0.0
    %1538 = vmatpush1.msra.mxu0 0.0
    %1539 = vmatprep.subr.mxu0 0.0
    %1540 = vmatpush1.msra.mxu0 0.0
    %1541 = vmatprep.subr.mxu0 0.0
    %1542 = vmatpush1.msra.mxu0 0.0
    %1543 = vmatprep.subr.mxu0 0.0
    %1544 = vmatpush1.msra.mxu0 0.0
    %1545 = vmatprep.subr.mxu0 0.0
    %1546 = vmatpush1.msra.mxu0 0.0
    %1547 = vmatprep.subr.mxu0 0.0
    %1548 = vmatpush1.msra.mxu0 0.0
    %1549 = vmatprep.subr.mxu0 0.0
    %1550 = vmatpush1.msra.mxu0 0.0
    %1551 = vmatprep.subr.mxu0 0.0
    %1552 = vmatpush1.msra.mxu0 0.0
    %1553 = vmatprep.subr.mxu0 0.0
    %1554 = vmatpush1.msra.mxu0 0.0
    %1555 = vmatprep.subr.mxu0 0.0
    %1556 = vmatpush1.msra.mxu0 0.0
    %1557 = vmatprep.subr.mxu0 0.0
    %1558 = vmatpush1.msra.mxu0 0.0
    %1559 = vmatprep.subr.mxu0 0.0
    %1560 = vmatpush1.msra.mxu0 0.0
    %1561 = vmatprep.subr.mxu0 0.0
    %1562 = vmatpush1.msra.mxu0 0.0
    %1563 = vmatprep.subr.mxu0 0.0
    %1564 = vmatpush1.msra.mxu0 0.0
    %1565 = vmatprep.mubr.f32.mxu0 0.0
    %v1566 = vand.u32 %v768, 4294901760
    %1567 = vmatmul.mubr.f32.gmra.mrb[0].mxu0 %v1566
    %v1568 = vpop.f32.mrb[0].mxu0
    %v1569 = vadd.f32 %v1448, %v1568
    %v1570 = vpop.f32.mrb[0].mxu0
    %1571 = vmatprep.mubr.f32.mxu0 0.0
    %v1572 = vand.u32 %v771, 4294901760
    %1573 = vmatmul.mubr.f32.gmra.mrb[0].mxu0 %v1572
    %v1574 = vpop.f32.mrb[0].mxu0
    %v1575 = vadd.f32 %v1458, %v1574
    %v1576 = vpop.f32.mrb[0].mxu0
    %1577 = vdwg.mxu0
    %1578 = vmatprep.subr.mxu0 0.0
    %v1579 = vand.u32 %v1353, 4294901760
    %v1580 = vsub.f32 %v1353, %v1579
    %1581 = vmatpush1.msra.mxu0 %v1580
    %1582 = vmatprep.subr.mxu0 0.0
    %v1583 = vand.u32 %v1354, 4294901760
    %v1584 = vsub.f32 %v1354, %v1583
    %1585 = vmatpush1.msra.mxu0 %v1584
    %1586 = vmatprep.subr.mxu0 0.0
    %v1587 = vand.u32 %v1355, 4294901760
    %v1588 = vsub.f32 %v1355, %v1587
    %1589 = vmatpush1.msra.mxu0 %v1588
    %1590 = vmatprep.subr.mxu0 0.0
    %v1591 = vand.u32 %v1356, 4294901760
    %v1592 = vsub.f32 %v1356, %v1591
    %1593 = vmatpush1.msra.mxu0 %v1592
    %1594 = vmatprep.subr.mxu0 0.0
    %v1595 = vand.u32 %v1357, 4294901760
    %v1596 = vsub.f32 %v1357, %v1595
    %1597 = vmatpush1.msra.mxu0 %v1596
    %1598 = vmatprep.subr.mxu0 0.0
    %v1599 = vand.u32 %v1358, 4294901760
    %v1600 = vsub.f32 %v1358, %v1599
    %1601 = vmatpush1.msra.mxu0 %v1600
    %1602 = vmatprep.subr.mxu0 0.0
    %v1603 = vand.u32 %v1359, 4294901760
    %v1604 = vsub.f32 %v1359, %v1603
    %1605 = vmatpush1.msra.mxu0 %v1604
    %1606 = vmatprep.subr.mxu0 0.0
    %v1607 = vand.u32 %v1360, 4294901760
    %v1608 = vsub.f32 %v1360, %v1607
    %1609 = vmatpush1.msra.mxu0 %v1608
    %1610 = vmatprep.subr.mxu0 0.0
    %1611 = vmatpush1.msra.mxu0 0.0
    %1612 = vmatprep.subr.mxu0 0.0
    %1613 = vmatpush1.msra.mxu0 0.0
    %1614 = vmatprep.subr.mxu0 0.0
    %1615 = vmatpush1.msra.mxu0 0.0
    %1616 = vmatprep.subr.mxu0 0.0
    %1617 = vmatpush1.msra.mxu0 0.0
    %1618 = vmatprep.subr.mxu0 0.0
    %1619 = vmatpush1.msra.mxu0 0.0
    %1620 = vmatprep.subr.mxu0 0.0
    %1621 = vmatpush1.msra.mxu0 0.0
    %1622 = vmatprep.subr.mxu0 0.0
    %1623 = vmatpush1.msra.mxu0 0.0
    %1624 = vmatprep.subr.mxu0 0.0
    %1625 = vmatpush1.msra.mxu0 0.0
    %1626 = vmatprep.subr.mxu0 0.0
    %1627 = vmatpush1.msra.mxu0 0.0
    %1628 = vmatprep.subr.mxu0 0.0
    %1629 = vmatpush1.msra.mxu0 0.0
    %1630 = vmatprep.subr.mxu0 0.0
    %1631 = vmatpush1.msra.mxu0 0.0
    %1632 = vmatprep.subr.mxu0 0.0
    %1633 = vmatpush1.msra.mxu0 0.0
    %1634 = vmatprep.subr.mxu0 0.0
    %1635 = vmatpush1.msra.mxu0 0.0
    %1636 = vmatprep.subr.mxu0 0.0
    %1637 = vmatpush1.msra.mxu0 0.0
    %1638 = vmatprep.subr.mxu0 0.0
    %1639 = vmatpush1.msra.mxu0 0.0
    %1640 = vmatprep.subr.mxu0 0.0
    %1641 = vmatpush1.msra.mxu0 0.0
    %1642 = vmatprep.subr.mxu0 0.0
    %1643 = vmatpush1.msra.mxu0 0.0
    %1644 = vmatprep.subr.mxu0 0.0
    %1645 = vmatpush1.msra.mxu0 0.0
    %1646 = vmatprep.subr.mxu0 0.0
    %1647 = vmatpush1.msra.mxu0 0.0
    %1648 = vmatprep.subr.mxu0 0.0
    %1649 = vmatpush1.msra.mxu0 0.0
    %1650 = vmatprep.subr.mxu0 0.0
    %1651 = vmatpush1.msra.mxu0 0.0
    %1652 = vmatprep.subr.mxu0 0.0
    %1653 = vmatpush1.msra.mxu0 0.0
    %1654 = vmatprep.subr.mxu0 0.0
    %1655 = vmatpush1.msra.mxu0 0.0
    %1656 = vmatprep.subr.mxu0 0.0
    %1657 = vmatpush1.msra.mxu0 0.0
    %1658 = vmatprep.mubr.f32.mxu0 0.0
    %v1659 = vand.u32 %v768, 4294901760
    %v1660 = vsub.f32 %v768, %v1659
    %1661 = vmatmul.mubr.f32.gmra.mrb[0].mxu0 %v1660
    %v1662 = vpop.f32.mrb[0].mxu0
    %v1663 = vadd.f32 %v1569, %v1662
    %v1664 = vpop.f32.mrb[0].mxu0
    %1665 = vmatprep.mubr.f32.mxu0 0.0
    %v1666 = vand.u32 %v771, 4294901760
    %v1667 = vsub.f32 %v771, %v1666
    %1668 = vmatmul.mubr.f32.gmra.mrb[0].mxu0 %v1667
    %v1669 = vpop.f32.mrb[0].mxu0
    %v1670 = vadd.f32 %v1575, %v1669
    %v1671 = vpop.f32.mrb[0].mxu0
    %1672 = vdwg.mxu0
    %1673 = vmatprep.subr.mxu0 0.0
    %v1674 = vand.u32 %v1353, 4294901760
    %1675 = vmatpush1.msra.mxu0 %v1674
    %1676 = vmatprep.subr.mxu0 0.0
    %v1677 = vand.u32 %v1354, 4294901760
    %1678 = vmatpush1.msra.mxu0 %v1677
    %1679 = vmatprep.subr.mxu0 0.0
    %v1680 = vand.u32 %v1355, 4294901760
    %1681 = vmatpush1.msra.mxu0 %v1680
    %1682 = vmatprep.subr.mxu0 0.0
    %v1683 = vand.u32 %v1356, 4294901760
    %1684 = vmatpush1.msra.mxu0 %v1683
    %1685 = vmatprep.subr.mxu0 0.0
    %v1686 = vand.u32 %v1357, 4294901760
    %1687 = vmatpush1.msra.mxu0 %v1686
    %1688 = vmatprep.subr.mxu0 0.0
    %v1689 = vand.u32 %v1358, 4294901760
    %1690 = vmatpush1.msra.mxu0 %v1689
    %1691 = vmatprep.subr.mxu0 0.0
    %v1692 = vand.u32 %v1359, 4294901760
    %1693 = vmatpush1.msra.mxu0 %v1692
    %1694 = vmatprep.subr.mxu0 0.0
    %v1695 = vand.u32 %v1360, 4294901760
    %1696 = vmatpush1.msra.mxu0 %v1695
    %1697 = vmatprep.subr.mxu0 0.0
    %1698 = vmatpush1.msra.mxu0 0.0
    %1699 = vmatprep.subr.mxu0 0.0
    %1700 = vmatpush1.msra.mxu0 0.0
    %1701 = vmatprep.subr.mxu0 0.0
    %1702 = vmatpush1.msra.mxu0 0.0
    %1703 = vmatprep.subr.mxu0 0.0
    %1704 = vmatpush1.msra.mxu0 0.0
    %1705 = vmatprep.subr.mxu0 0.0
    %1706 = vmatpush1.msra.mxu0 0.0
    %1707 = vmatprep.subr.mxu0 0.0
    %1708 = vmatpush1.msra.mxu0 0.0
    %1709 = vmatprep.subr.mxu0 0.0
    %1710 = vmatpush1.msra.mxu0 0.0
    %1711 = vmatprep.subr.mxu0 0.0
    %1712 = vmatpush1.msra.mxu0 0.0
    %1713 = vmatprep.subr.mxu0 0.0
    %1714 = vmatpush1.msra.mxu0 0.0
    %1715 = vmatprep.subr.mxu0 0.0
    %1716 = vmatpush1.msra.mxu0 0.0
    %1717 = vmatprep.subr.mxu0 0.0
    %1718 = vmatpush1.msra.mxu0 0.0
    %1719 = vmatprep.subr.mxu0 0.0
    %1720 = vmatpush1.msra.mxu0 0.0
    %1721 = vmatprep.subr.mxu0 0.0
    %1722 = vmatpush1.msra.mxu0 0.0
    %1723 = vmatprep.subr.mxu0 0.0
    %1724 = vmatpush1.msra.mxu0 0.0
    %1725 = vmatprep.subr.mxu0 0.0
    %1726 = vmatpush1.msra.mxu0 0.0
    %1727 = vmatprep.subr.mxu0 0.0
    %1728 = vmatpush1.msra.mxu0 0.0
    %1729 = vmatprep.subr.mxu0 0.0
    %1730 = vmatpush1.msra.mxu0 0.0
    %1731 = vmatprep.subr.mxu0 0.0
    %1732 = vmatpush1.msra.mxu0 0.0
    %1733 = vmatprep.subr.mxu0 0.0
    %1734 = vmatpush1.msra.mxu0 0.0
    %1735 = vmatprep.subr.mxu0 0.0
    %1736 = vmatpush1.msra.mxu0 0.0
    %1737 = vmatprep.subr.mxu0 0.0
    %1738 = vmatpush1.msra.mxu0 0.0
    %1739 = vmatprep.subr.mxu0 0.0
    %1740 = vmatpush1.msra.mxu0 0.0
    %1741 = vmatprep.subr.mxu0 0.0
    %1742 = vmatpush1.msra.mxu0 0.0
    %1743 = vmatprep.subr.mxu0 0.0
    %1744 = vmatpush1.msra.mxu0 0.0
    %1745 = vmatprep.mubr.f32.mxu0 0.0
    %v1746 = vand.u32 %v768, 4294901760
    %v1747 = vsub.f32 %v768, %v1746
    %v1748 = vand.u32 %v1747, 4294901760
    %1749 = vmatmul.mubr.f32.gmra.mrb[0].mxu0 %v1748
    %v1750 = vpop.f32.mrb[0].mxu0
    %v1751 = vadd.f32 %v1663, %v1750
    %v1752 = vpop.f32.mrb[0].mxu0
    %1753 = vmatprep.mubr.f32.mxu0 0.0
    %v1754 = vand.u32 %v771, 4294901760
    %v1755 = vsub.f32 %v771, %v1754
    %v1756 = vand.u32 %v1755, 4294901760
    %1757 = vmatmul.mubr.f32.gmra.mrb[0].mxu0 %v1756
    %v1758 = vpop.f32.mrb[0].mxu0
    %v1759 = vadd.f32 %v1670, %v1758
    %v1760 = vpop.f32.mrb[0].mxu0
    %1761 = vdwg.mxu0
    %1762 = vmatprep.subr.mxu0 0.0
    %v1763 = vand.u32 %v1353, 4294901760
    %v1764 = vsub.f32 %v1353, %v1763
    %v1765 = vand.u32 %v1764, 4294901760
    %1766 = vmatpush1.msra.mxu0 %v1765
    %1767 = vmatprep.subr.mxu0 0.0
    %v1768 = vand.u32 %v1354, 4294901760
    %v1769 = vsub.f32 %v1354, %v1768
    %v1770 = vand.u32 %v1769, 4294901760
    %1771 = vmatpush1.msra.mxu0 %v1770
    %1772 = vmatprep.subr.mxu0 0.0
    %v1773 = vand.u32 %v1355, 4294901760
    %v1774 = vsub.f32 %v1355, %v1773
    %v1775 = vand.u32 %v1774, 4294901760
    %1776 = vmatpush1.msra.mxu0 %v1775
    %1777 = vmatprep.subr.mxu0 0.0
    %v1778 = vand.u32 %v1356, 4294901760
    %v1779 = vsub.f32 %v1356, %v1778
    %v1780 = vand.u32 %v1779, 4294901760
    %1781 = vmatpush1.msra.mxu0 %v1780
    %1782 = vmatprep.subr.mxu0 0.0
    %v1783 = vand.u32 %v1357, 4294901760
    %v1784 = vsub.f32 %v1357, %v1783
    %v1785 = vand.u32 %v1784, 4294901760
    %1786 = vmatpush1.msra.mxu0 %v1785
    %1787 = vmatprep.subr.mxu0 0.0
    %v1788 = vand.u32 %v1358, 4294901760
    %v1789 = vsub.f32 %v1358, %v1788
    %v1790 = vand.u32 %v1789, 4294901760
    %1791 = vmatpush1.msra.mxu0 %v1790
    %1792 = vmatprep.subr.mxu0 0.0
    %v1793 = vand.u32 %v1359, 4294901760
    %v1794 = vsub.f32 %v1359, %v1793
    %v1795 = vand.u32 %v1794, 4294901760
    %1796 = vmatpush1.msra.mxu0 %v1795
    %1797 = vmatprep.subr.mxu0 0.0
    %v1798 = vand.u32 %v1360, 4294901760
    %v1799 = vsub.f32 %v1360, %v1798
    %v1800 = vand.u32 %v1799, 4294901760
    %1801 = vmatpush1.msra.mxu0 %v1800
    %1802 = vmatprep.subr.mxu0 0.0
    %1803 = vmatpush1.msra.mxu0 0.0
    %1804 = vmatprep.subr.mxu0 0.0
    %1805 = vmatpush1.msra.mxu0 0.0
    %1806 = vmatprep.subr.mxu0 0.0
    %1807 = vmatpush1.msra.mxu0 0.0
    %1808 = vmatprep.subr.mxu0 0.0
    %1809 = vmatpush1.msra.mxu0 0.0
    %1810 = vmatprep.subr.mxu0 0.0
    %1811 = vmatpush1.msra.mxu0 0.0
    %1812 = vmatprep.subr.mxu0 0.0
    %1813 = vmatpush1.msra.mxu0 0.0
    %1814 = vmatprep.subr.mxu0 0.0
    %1815 = vmatpush1.msra.mxu0 0.0
    %1816 = vmatprep.subr.mxu0 0.0
    %1817 = vmatpush1.msra.mxu0 0.0
    %1818 = vmatprep.subr.mxu0 0.0
    %1819 = vmatpush1.msra.mxu0 0.0
    %1820 = vmatprep.subr.mxu0 0.0
    %1821 = vmatpush1.msra.mxu0 0.0
    %1822 = vmatprep.subr.mxu0 0.0
    %1823 = vmatpush1.msra.mxu0 0.0
    %1824 = vmatprep.subr.mxu0 0.0
    %1825 = vmatpush1.msra.mxu0 0.0
    %1826 = vmatprep.subr.mxu0 0.0
    %1827 = vmatpush1.msra.mxu0 0.0
    %1828 = vmatprep.subr.mxu0 0.0
    %1829 = vmatpush1.msra.mxu0 0.0
    %1830 = vmatprep.subr.mxu0 0.0
    %1831 = vmatpush1.msra.mxu0 0.0
    %1832 = vmatprep.subr.mxu0 0.0
    %1833 = vmatpush1.msra.mxu0 0.0
    %1834 = vmatprep.subr.mxu0 0.0
    %1835 = vmatpush1.msra.mxu0 0.0
    %1836 = vmatprep.subr.mxu0 0.0
    %1837 = vmatpush1.msra.mxu0 0.0
    %1838 = vmatprep.subr.mxu0 0.0
    %1839 = vmatpush1.msra.mxu0 0.0
    %1840 = vmatprep.subr.mxu0 0.0
    %1841 = vmatpush1.msra.mxu0 0.0
    %1842 = vmatprep.subr.mxu0 0.0
    %1843 = vmatpush1.msra.mxu0 0.0
    %1844 = vmatprep.subr.mxu0 0.0
    %1845 = vmatpush1.msra.mxu0 0.0
    %1846 = vmatprep.subr.mxu0 0.0
    %1847 = vmatpush1.msra.mxu0 0.0
    %1848 = vmatprep.subr.mxu0 0.0
    %1849 = vmatpush1.msra.mxu0 0.0
    %1850 = vmatprep.mubr.f32.mxu0 0.0
    %v1851 = vand.u32 %v768, 4294901760
    %1852 = vmatmul.mubr.f32.gmra.mrb[0].mxu0 %v1851
    %v1853 = vpop.f32.mrb[0].mxu0
    %v1854 = vadd.f32 %v1751, %v1853
    %v1855 = vpop.f32.mrb[0].mxu0
    %1856 = vmatprep.mubr.f32.mxu0 0.0
    %v1857 = vand.u32 %v771, 4294901760
    %1858 = vmatmul.mubr.f32.gmra.mrb[0].mxu0 %v1857
    %v1859 = vpop.f32.mrb[0].mxu0
    %v1860 = vadd.f32 %v1759, %v1859
    %v1861 = vpop.f32.mrb[0].mxu0
    %1862 = vdwg.mxu0
    %1863 = vmatprep.subr.mxu0 0.0
    %v1864 = vand.u32 %v1353, 4294901760
    %1865 = vmatpush1.msra.mxu0 %v1864
    %1866 = vmatprep.subr.mxu0 0.0
    %v1867 = vand.u32 %v1354, 4294901760
    %1868 = vmatpush1.msra.mxu0 %v1867
    %1869 = vmatprep.subr.mxu0 0.0
    %v1870 = vand.u32 %v1355, 4294901760
    %1871 = vmatpush1.msra.mxu0 %v1870
    %1872 = vmatprep.subr.mxu0 0.0
    %v1873 = vand.u32 %v1356, 4294901760
    %1874 = vmatpush1.msra.mxu0 %v1873
    %1875 = vmatprep.subr.mxu0 0.0
    %v1876 = vand.u32 %v1357, 4294901760
    %1877 = vmatpush1.msra.mxu0 %v1876
    %1878 = vmatprep.subr.mxu0 0.0
    %v1879 = vand.u32 %v1358, 4294901760
    %1880 = vmatpush1.msra.mxu0 %v1879
    %1881 = vmatprep.subr.mxu0 0.0
    %v1882 = vand.u32 %v1359, 4294901760
    %1883 = vmatpush1.msra.mxu0 %v1882
    %1884 = vmatprep.subr.mxu0 0.0
    %v1885 = vand.u32 %v1360, 4294901760
    %1886 = vmatpush1.msra.mxu0 %v1885
    %1887 = vmatprep.subr.mxu0 0.0
    %1888 = vmatpush1.msra.mxu0 0.0
    %1889 = vmatprep.subr.mxu0 0.0
    %1890 = vmatpush1.msra.mxu0 0.0
    %1891 = vmatprep.subr.mxu0 0.0
    %1892 = vmatpush1.msra.mxu0 0.0
    %1893 = vmatprep.subr.mxu0 0.0
    %1894 = vmatpush1.msra.mxu0 0.0
    %1895 = vmatprep.subr.mxu0 0.0
    %1896 = vmatpush1.msra.mxu0 0.0
    %1897 = vmatprep.subr.mxu0 0.0
    %1898 = vmatpush1.msra.mxu0 0.0
    %1899 = vmatprep.subr.mxu0 0.0
    %1900 = vmatpush1.msra.mxu0 0.0
    %1901 = vmatprep.subr.mxu0 0.0
    %1902 = vmatpush1.msra.mxu0 0.0
    %1903 = vmatprep.subr.mxu0 0.0
    %1904 = vmatpush1.msra.mxu0 0.0
    %1905 = vmatprep.subr.mxu0 0.0
    %1906 = vmatpush1.msra.mxu0 0.0
    %1907 = vmatprep.subr.mxu0 0.0
    %1908 = vmatpush1.msra.mxu0 0.0
    %1909 = vmatprep.subr.mxu0 0.0
    %1910 = vmatpush1.msra.mxu0 0.0
    %1911 = vmatprep.subr.mxu0 0.0
    %1912 = vmatpush1.msra.mxu0 0.0
    %1913 = vmatprep.subr.mxu0 0.0
    %1914 = vmatpush1.msra.mxu0 0.0
    %1915 = vmatprep.subr.mxu0 0.0
    %1916 = vmatpush1.msra.mxu0 0.0
    %1917 = vmatprep.subr.mxu0 0.0
    %1918 = vmatpush1.msra.mxu0 0.0
    %1919 = vmatprep.subr.mxu0 0.0
    %1920 = vmatpush1.msra.mxu0 0.0
    %1921 = vmatprep.subr.mxu0 0.0
    %1922 = vmatpush1.msra.mxu0 0.0
    %1923 = vmatprep.subr.mxu0 0.0
    %1924 = vmatpush1.msra.mxu0 0.0
    %1925 = vmatprep.subr.mxu0 0.0
    %1926 = vmatpush1.msra.mxu0 0.0
    %1927 = vmatprep.subr.mxu0 0.0
    %1928 = vmatpush1.msra.mxu0 0.0
    %1929 = vmatprep.subr.mxu0 0.0
    %1930 = vmatpush1.msra.mxu0 0.0
    %1931 = vmatprep.subr.mxu0 0.0
    %1932 = vmatpush1.msra.mxu0 0.0
    %1933 = vmatprep.subr.mxu0 0.0
    %1934 = vmatpush1.msra.mxu0 0.0
    %1935 = vmatprep.mubr.f32.mxu0 0.0
    %v1936 = vand.u32 %v768, 4294901760
    %1937 = vmatmul.mubr.f32.gmra.mrb[0].mxu0 %v1936
    %v1938 = vpop.f32.mrb[0].mxu0
    %v1939 = vadd.f32 %v1854, %v1938
    %v1940 = vpop.f32.mrb[0].mxu0
    %1941 = vmatprep.mubr.f32.mxu0 0.0
    %v1942 = vand.u32 %v771, 4294901760
    %1943 = vmatmul.mubr.f32.gmra.mrb[0].mxu0 %v1942
    %v1944 = vpop.f32.mrb[0].mxu0
    %v1945 = vadd.f32 %v1860, %v1944
    %v1946 = vpop.f32.mrb[0].mxu0
    %1947 = vdwg.mxu0
    %v1948 = vld [vmem:[#allocation10] sm:$0xff]
    %v1949 = vld [vmem:[#allocation10 + $0x8] sm:$0xff]
    %v1950 = vld [vmem:[#allocation10 + $0x10] sm:$0xff]
    %v1951 = vld [vmem:[#allocation10 + $0x18] sm:$0xff]
    %v1952 = vld [vmem:[#allocation10 + $0x20] sm:$0xff]
    %v1953 = vld [vmem:[#allocation10 + $0x28] sm:$0xff]
    %v1954 = vld [vmem:[#allocation10 + $0x30] sm:$0xff]
    %v1955 = vld [vmem:[#allocation10 + $0x38] sm:$0xff]
    %v1956 = vld [vmem:[%s8] sm:$0x1]
    %v1958 = vlaneseq
    %v1959 = vshrl.u32 %v1958, 7
    %v1960 = vsub.s32 0, %v1959
    %v1961 = vrot.slane %v1956, %v1960
    %1963 = vmatprep.subr.mxu0 0.0
    %v1964 = vand.u32 %v1948, 4294901760
    %1965 = vmatpush1.msra.mxu0 %v1964
    %1966 = vmatprep.subr.mxu0 0.0
    %v1967 = vand.u32 %v1949, 4294901760
    %1968 = vmatpush1.msra.mxu0 %v1967
    %1969 = vmatprep.subr.mxu0 0.0
    %v1970 = vand.u32 %v1950, 4294901760
    %1971 = vmatpush1.msra.mxu0 %v1970
    %1972 = vmatprep.subr.mxu0 0.0
    %v1973 = vand.u32 %v1951, 4294901760
    %1974 = vmatpush1.msra.mxu0 %v1973
    %1975 = vmatprep.subr.mxu0 0.0
    %v1976 = vand.u32 %v1952, 4294901760
    %1977 = vmatpush1.msra.mxu0 %v1976
    %1978 = vmatprep.subr.mxu0 0.0
    %v1979 = vand.u32 %v1953, 4294901760
    %1980 = vmatpush1.msra.mxu0 %v1979
    %1981 = vmatprep.subr.mxu0 0.0
    %v1982 = vand.u32 %v1954, 4294901760
    %1983 = vmatpush1.msra.mxu0 %v1982
    %1984 = vmatprep.subr.mxu0 0.0
    %v1985 = vand.u32 %v1955, 4294901760
    %1986 = vmatpush1.msra.mxu0 %v1985
    %1987 = vmatprep.subr.mxu0 0.0
    %1988 = vmatpush1.msra.mxu0 0.0
    %1989 = vmatprep.subr.mxu0 0.0
    %1990 = vmatpush1.msra.mxu0 0.0
    %1991 = vmatprep.subr.mxu0 0.0
    %1992 = vmatpush1.msra.mxu0 0.0
    %1993 = vmatprep.subr.mxu0 0.0
    %1994 = vmatpush1.msra.mxu0 0.0
    %1995 = vmatprep.subr.mxu0 0.0
    %1996 = vmatpush1.msra.mxu0 0.0
    %1997 = vmatprep.subr.mxu0 0.0
    %1998 = vmatpush1.msra.mxu0 0.0
    %1999 = vmatprep.subr.mxu0 0.0
    %2000 = vmatpush1.msra.mxu0 0.0
    %2001 = vmatprep.subr.mxu0 0.0
    %2002 = vmatpush1.msra.mxu0 0.0
    %2003 = vmatprep.subr.mxu0 0.0
    %2004 = vmatpush1.msra.mxu0 0.0
    %2005 = vmatprep.subr.mxu0 0.0
    %2006 = vmatpush1.msra.mxu0 0.0
    %2007 = vmatprep.subr.mxu0 0.0
    %2008 = vmatpush1.msra.mxu0 0.0
    %2009 = vmatprep.subr.mxu0 0.0
    %2010 = vmatpush1.msra.mxu0 0.0
    %2011 = vmatprep.subr.mxu0 0.0
    %2012 = vmatpush1.msra.mxu0 0.0
    %2013 = vmatprep.subr.mxu0 0.0
    %2014 = vmatpush1.msra.mxu0 0.0
    %2015 = vmatprep.subr.mxu0 0.0
    %2016 = vmatpush1.msra.mxu0 0.0
    %2017 = vmatprep.subr.mxu0 0.0
    %2018 = vmatpush1.msra.mxu0 0.0
    %2019 = vmatprep.subr.mxu0 0.0
    %2020 = vmatpush1.msra.mxu0 0.0
    %2021 = vmatprep.subr.mxu0 0.0
    %2022 = vmatpush1.msra.mxu0 0.0
    %2023 = vmatprep.subr.mxu0 0.0
    %2024 = vmatpush1.msra.mxu0 0.0
    %2025 = vmatprep.subr.mxu0 0.0
    %2026 = vmatpush1.msra.mxu0 0.0
    %2027 = vmatprep.subr.mxu0 0.0
    %2028 = vmatpush1.msra.mxu0 0.0
    %2029 = vmatprep.subr.mxu0 0.0
    %2030 = vmatpush1.msra.mxu0 0.0
    %2031 = vmatprep.subr.mxu0 0.0
    %2032 = vmatpush1.msra.mxu0 0.0
    %2033 = vmatprep.subr.mxu0 0.0
    %2034 = vmatpush1.msra.mxu0 0.0
    %2035 = vmatprep.mubr.f32.mxu0 0.0
    %v2036 = vand.u32 %v768, 4294901760
    %v2037 = vsub.f32 %v768, %v2036
    %v2038 = vand.u32 %v2037, 4294901760
    %v2039 = vsub.f32 %v2037, %v2038
    %v2040 = vand.u32 %v2039, 4294901760
    %2041 = vmatmul.mubr.f32.gmra.mrb[0].mxu0 %v2040
    %v2042 = vpop.f32.mrb[0].mxu0
    %v2043 = vadd.f32 %v1961, %v2042
    %v2044 = vpop.f32.mrb[0].mxu0
    %2045 = vmatprep.mubr.f32.mxu0 0.0
    %v2046 = vand.u32 %v771, 4294901760
    %v2047 = vsub.f32 %v771, %v2046
    %v2048 = vand.u32 %v2047, 4294901760
    %v2049 = vsub.f32 %v2047, %v2048
    %v2050 = vand.u32 %v2049, 4294901760
    %2051 = vmatmul.mubr.f32.gmra.mrb[0].mxu0 %v2050
    %v2052 = vpop.f32.mrb[0].mxu0
    %v2053 = vadd.f32 %v1961, %v2052
    %v2054 = vpop.f32.mrb[0].mxu0
    %2055 = vdwg.mxu0
    %2056 = vmatprep.subr.mxu0 0.0
    %v2057 = vand.u32 %v1948, 4294901760
    %v2058 = vsub.f32 %v1948, %v2057
    %v2059 = vand.u32 %v2058, 4294901760
    %v2060 = vsub.f32 %v2058, %v2059
    %v2061 = vand.u32 %v2060, 4294901760
    %2062 = vmatpush1.msra.mxu0 %v2061
    %2063 = vmatprep.subr.mxu0 0.0
    %v2064 = vand.u32 %v1949, 4294901760
    %v2065 = vsub.f32 %v1949, %v2064
    %v2066 = vand.u32 %v2065, 4294901760
    %v2067 = vsub.f32 %v2065, %v2066
    %v2068 = vand.u32 %v2067, 4294901760
    %2069 = vmatpush1.msra.mxu0 %v2068
    %2070 = vmatprep.subr.mxu0 0.0
    %v2071 = vand.u32 %v1950, 4294901760
    %v2072 = vsub.f32 %v1950, %v2071
    %v2073 = vand.u32 %v2072, 4294901760
    %v2074 = vsub.f32 %v2072, %v2073
    %v2075 = vand.u32 %v2074, 4294901760
    %2076 = vmatpush1.msra.mxu0 %v2075
    %2077 = vmatprep.subr.mxu0 0.0
    %v2078 = vand.u32 %v1951, 4294901760
    %v2079 = vsub.f32 %v1951, %v2078
    %v2080 = vand.u32 %v2079, 4294901760
    %v2081 = vsub.f32 %v2079, %v2080
    %v2082 = vand.u32 %v2081, 4294901760
    %2083 = vmatpush1.msra.mxu0 %v2082
    %2084 = vmatprep.subr.mxu0 0.0
    %v2085 = vand.u32 %v1952, 4294901760
    %v2086 = vsub.f32 %v1952, %v2085
    %v2087 = vand.u32 %v2086, 4294901760
    %v2088 = vsub.f32 %v2086, %v2087
    %v2089 = vand.u32 %v2088, 4294901760
    %2090 = vmatpush1.msra.mxu0 %v2089
    %2091 = vmatprep.subr.mxu0 0.0
    %v2092 = vand.u32 %v1953, 4294901760
    %v2093 = vsub.f32 %v1953, %v2092
    %v2094 = vand.u32 %v2093, 4294901760
    %v2095 = vsub.f32 %v2093, %v2094
    %v2096 = vand.u32 %v2095, 4294901760
    %2097 = vmatpush1.msra.mxu0 %v2096
    %2098 = vmatprep.subr.mxu0 0.0
    %v2099 = vand.u32 %v1954, 4294901760
    %v2100 = vsub.f32 %v1954, %v2099
    %v2101 = vand.u32 %v2100, 4294901760
    %v2102 = vsub.f32 %v2100, %v2101
    %v2103 = vand.u32 %v2102, 4294901760
    %2104 = vmatpush1.msra.mxu0 %v2103
    %2105 = vmatprep.subr.mxu0 0.0
    %v2106 = vand.u32 %v1955, 4294901760
    %v2107 = vsub.f32 %v1955, %v2106
    %v2108 = vand.u32 %v2107, 4294901760
    %v2109 = vsub.f32 %v2107, %v2108
    %v2110 = vand.u32 %v2109, 4294901760
    %2111 = vmatpush1.msra.mxu0 %v2110
    %2112 = vmatprep.subr.mxu0 0.0
    %2113 = vmatpush1.msra.mxu0 0.0
    %2114 = vmatprep.subr.mxu0 0.0
    %2115 = vmatpush1.msra.mxu0 0.0
    %2116 = vmatprep.subr.mxu0 0.0
    %2117 = vmatpush1.msra.mxu0 0.0
    %2118 = vmatprep.subr.mxu0 0.0
    %2119 = vmatpush1.msra.mxu0 0.0
    %2120 = vmatprep.subr.mxu0 0.0
    %2121 = vmatpush1.msra.mxu0 0.0
    %2122 = vmatprep.subr.mxu0 0.0
    %2123 = vmatpush1.msra.mxu0 0.0
    %2124 = vmatprep.subr.mxu0 0.0
    %2125 = vmatpush1.msra.mxu0 0.0
    %2126 = vmatprep.subr.mxu0 0.0
    %2127 = vmatpush1.msra.mxu0 0.0
    %2128 = vmatprep.subr.mxu0 0.0
    %2129 = vmatpush1.msra.mxu0 0.0
    %2130 = vmatprep.subr.mxu0 0.0
    %2131 = vmatpush1.msra.mxu0 0.0
    %2132 = vmatprep.subr.mxu0 0.0
    %2133 = vmatpush1.msra.mxu0 0.0
    %2134 = vmatprep.subr.mxu0 0.0
    %2135 = vmatpush1.msra.mxu0 0.0
    %2136 = vmatprep.subr.mxu0 0.0
    %2137 = vmatpush1.msra.mxu0 0.0
    %2138 = vmatprep.subr.mxu0 0.0
    %2139 = vmatpush1.msra.mxu0 0.0
    %2140 = vmatprep.subr.mxu0 0.0
    %2141 = vmatpush1.msra.mxu0 0.0
    %2142 = vmatprep.subr.mxu0 0.0
    %2143 = vmatpush1.msra.mxu0 0.0
    %2144 = vmatprep.subr.mxu0 0.0
    %2145 = vmatpush1.msra.mxu0 0.0
    %2146 = vmatprep.subr.mxu0 0.0
    %2147 = vmatpush1.msra.mxu0 0.0
    %2148 = vmatprep.subr.mxu0 0.0
    %2149 = vmatpush1.msra.mxu0 0.0
    %2150 = vmatprep.subr.mxu0 0.0
    %2151 = vmatpush1.msra.mxu0 0.0
    %2152 = vmatprep.subr.mxu0 0.0
    %2153 = vmatpush1.msra.mxu0 0.0
    %2154 = vmatprep.subr.mxu0 0.0
    %2155 = vmatpush1.msra.mxu0 0.0
    %2156 = vmatprep.subr.mxu0 0.0
    %2157 = vmatpush1.msra.mxu0 0.0
    %2158 = vmatprep.subr.mxu0 0.0
    %2159 = vmatpush1.msra.mxu0 0.0
    %2160 = vmatprep.mubr.f32.mxu0 0.0
    %v2161 = vand.u32 %v768, 4294901760
    %2162 = vmatmul.mubr.f32.gmra.mrb[0].mxu0 %v2161
    %v2163 = vpop.f32.mrb[0].mxu0
    %v2164 = vadd.f32 %v2043, %v2163
    %v2165 = vpop.f32.mrb[0].mxu0
    %2166 = vmatprep.mubr.f32.mxu0 0.0
    %v2167 = vand.u32 %v771, 4294901760
    %2168 = vmatmul.mubr.f32.gmra.mrb[0].mxu0 %v2167
    %v2169 = vpop.f32.mrb[0].mxu0
    %v2170 = vadd.f32 %v2053, %v2169
    %v2171 = vpop.f32.mrb[0].mxu0
    %2172 = vdwg.mxu0
    %2173 = vmatprep.subr.mxu0 0.0
    %v2174 = vand.u32 %v1948, 4294901760
    %v2175 = vsub.f32 %v1948, %v2174
    %2176 = vmatpush1.msra.mxu0 %v2175
    %2177 = vmatprep.subr.mxu0 0.0
    %v2178 = vand.u32 %v1949, 4294901760
    %v2179 = vsub.f32 %v1949, %v2178
    %2180 = vmatpush1.msra.mxu0 %v2179
    %2181 = vmatprep.subr.mxu0 0.0
    %v2182 = vand.u32 %v1950, 4294901760
    %v2183 = vsub.f32 %v1950, %v2182
    %2184 = vmatpush1.msra.mxu0 %v2183
    %2185 = vmatprep.subr.mxu0 0.0
    %v2186 = vand.u32 %v1951, 4294901760
    %v2187 = vsub.f32 %v1951, %v2186
    %2188 = vmatpush1.msra.mxu0 %v2187
    %2189 = vmatprep.subr.mxu0 0.0
    %v2190 = vand.u32 %v1952, 4294901760
    %v2191 = vsub.f32 %v1952, %v2190
    %2192 = vmatpush1.msra.mxu0 %v2191
    %2193 = vmatprep.subr.mxu0 0.0
    %v2194 = vand.u32 %v1953, 4294901760
    %v2195 = vsub.f32 %v1953, %v2194
    %2196 = vmatpush1.msra.mxu0 %v2195
    %2197 = vmatprep.subr.mxu0 0.0
    %v2198 = vand.u32 %v1954, 4294901760
    %v2199 = vsub.f32 %v1954, %v2198
    %2200 = vmatpush1.msra.mxu0 %v2199
    %2201 = vmatprep.subr.mxu0 0.0
    %v2202 = vand.u32 %v1955, 4294901760
    %v2203 = vsub.f32 %v1955, %v2202
    %2204 = vmatpush1.msra.mxu0 %v2203
    %2205 = vmatprep.subr.mxu0 0.0
    %2206 = vmatpush1.msra.mxu0 0.0
    %2207 = vmatprep.subr.mxu0 0.0
    %2208 = vmatpush1.msra.mxu0 0.0
    %2209 = vmatprep.subr.mxu0 0.0
    %2210 = vmatpush1.msra.mxu0 0.0
    %2211 = vmatprep.subr.mxu0 0.0
    %2212 = vmatpush1.msra.mxu0 0.0
    %2213 = vmatprep.subr.mxu0 0.0
    %2214 = vmatpush1.msra.mxu0 0.0
    %2215 = vmatprep.subr.mxu0 0.0
    %2216 = vmatpush1.msra.mxu0 0.0
    %2217 = vmatprep.subr.mxu0 0.0
    %2218 = vmatpush1.msra.mxu0 0.0
    %2219 = vmatprep.subr.mxu0 0.0
    %2220 = vmatpush1.msra.mxu0 0.0
    %2221 = vmatprep.subr.mxu0 0.0
    %2222 = vmatpush1.msra.mxu0 0.0
    %2223 = vmatprep.subr.mxu0 0.0
    %2224 = vmatpush1.msra.mxu0 0.0
    %2225 = vmatprep.subr.mxu0 0.0
    %2226 = vmatpush1.msra.mxu0 0.0
    %2227 = vmatprep.subr.mxu0 0.0
    %2228 = vmatpush1.msra.mxu0 0.0
    %2229 = vmatprep.subr.mxu0 0.0
    %2230 = vmatpush1.msra.mxu0 0.0
    %2231 = vmatprep.subr.mxu0 0.0
    %2232 = vmatpush1.msra.mxu0 0.0
    %2233 = vmatprep.subr.mxu0 0.0
    %2234 = vmatpush1.msra.mxu0 0.0
    %2235 = vmatprep.subr.mxu0 0.0
    %2236 = vmatpush1.msra.mxu0 0.0
    %2237 = vmatprep.subr.mxu0 0.0
    %2238 = vmatpush1.msra.mxu0 0.0
    %2239 = vmatprep.subr.mxu0 0.0
    %2240 = vmatpush1.msra.mxu0 0.0
    %2241 = vmatprep.subr.mxu0 0.0
    %2242 = vmatpush1.msra.mxu0 0.0
    %2243 = vmatprep.subr.mxu0 0.0
    %2244 = vmatpush1.msra.mxu0 0.0
    %2245 = vmatprep.subr.mxu0 0.0
    %2246 = vmatpush1.msra.mxu0 0.0
    %2247 = vmatprep.subr.mxu0 0.0
    %2248 = vmatpush1.msra.mxu0 0.0
    %2249 = vmatprep.subr.mxu0 0.0
    %2250 = vmatpush1.msra.mxu0 0.0
    %2251 = vmatprep.subr.mxu0 0.0
    %2252 = vmatpush1.msra.mxu0 0.0
    %2253 = vmatprep.mubr.f32.mxu0 0.0
    %v2254 = vand.u32 %v768, 4294901760
    %v2255 = vsub.f32 %v768, %v2254
    %2256 = vmatmul.mubr.f32.gmra.mrb[0].mxu0 %v2255
    %v2257 = vpop.f32.mrb[0].mxu0
    %v2258 = vadd.f32 %v2164, %v2257
    %v2259 = vpop.f32.mrb[0].mxu0
    %2260 = vmatprep.mubr.f32.mxu0 0.0
    %v2261 = vand.u32 %v771, 4294901760
    %v2262 = vsub.f32 %v771, %v2261
    %2263 = vmatmul.mubr.f32.gmra.mrb[0].mxu0 %v2262
    %v2264 = vpop.f32.mrb[0].mxu0
    %v2265 = vadd.f32 %v2170, %v2264
    %v2266 = vpop.f32.mrb[0].mxu0
    %2267 = vdwg.mxu0
    %2268 = vmatprep.subr.mxu0 0.0
    %v2269 = vand.u32 %v1948, 4294901760
    %2270 = vmatpush1.msra.mxu0 %v2269
    %2271 = vmatprep.subr.mxu0 0.0
    %v2272 = vand.u32 %v1949, 4294901760
    %2273 = vmatpush1.msra.mxu0 %v2272
    %2274 = vmatprep.subr.mxu0 0.0
    %v2275 = vand.u32 %v1950, 4294901760
    %2276 = vmatpush1.msra.mxu0 %v2275
    %2277 = vmatprep.subr.mxu0 0.0
    %v2278 = vand.u32 %v1951, 4294901760
    %2279 = vmatpush1.msra.mxu0 %v2278
    %2280 = vmatprep.subr.mxu0 0.0
    %v2281 = vand.u32 %v1952, 4294901760
    %2282 = vmatpush1.msra.mxu0 %v2281
    %2283 = vmatprep.subr.mxu0 0.0
    %v2284 = vand.u32 %v1953, 4294901760
    %2285 = vmatpush1.msra.mxu0 %v2284
    %2286 = vmatprep.subr.mxu0 0.0
    %v2287 = vand.u32 %v1954, 4294901760
    %2288 = vmatpush1.msra.mxu0 %v2287
    %2289 = vmatprep.subr.mxu0 0.0
    %v2290 = vand.u32 %v1955, 4294901760
    %2291 = vmatpush1.msra.mxu0 %v2290
    %2292 = vmatprep.subr.mxu0 0.0
    %2293 = vmatpush1.msra.mxu0 0.0
    %2294 = vmatprep.subr.mxu0 0.0
    %2295 = vmatpush1.msra.mxu0 0.0
    %2296 = vmatprep.subr.mxu0 0.0
    %2297 = vmatpush1.msra.mxu0 0.0
    %2298 = vmatprep.subr.mxu0 0.0
    %2299 = vmatpush1.msra.mxu0 0.0
    %2300 = vmatprep.subr.mxu0 0.0
    %2301 = vmatpush1.msra.mxu0 0.0
    %2302 = vmatprep.subr.mxu0 0.0
    %2303 = vmatpush1.msra.mxu0 0.0
    %2304 = vmatprep.subr.mxu0 0.0
    %2305 = vmatpush1.msra.mxu0 0.0
    %2306 = vmatprep.subr.mxu0 0.0
    %2307 = vmatpush1.msra.mxu0 0.0
    %2308 = vmatprep.subr.mxu0 0.0
    %2309 = vmatpush1.msra.mxu0 0.0
    %2310 = vmatprep.subr.mxu0 0.0
    %2311 = vmatpush1.msra.mxu0 0.0
    %2312 = vmatprep.subr.mxu0 0.0
    %2313 = vmatpush1.msra.mxu0 0.0
    %2314 = vmatprep.subr.mxu0 0.0
    %2315 = vmatpush1.msra.mxu0 0.0
    %2316 = vmatprep.subr.mxu0 0.0
    %2317 = vmatpush1.msra.mxu0 0.0
    %2318 = vmatprep.subr.mxu0 0.0
    %2319 = vmatpush1.msra.mxu0 0.0
    %2320 = vmatprep.subr.mxu0 0.0
    %2321 = vmatpush1.msra.mxu0 0.0
    %2322 = vmatprep.subr.mxu0 0.0
    %2323 = vmatpush1.msra.mxu0 0.0
    %2324 = vmatprep.subr.mxu0 0.0
    %2325 = vmatpush1.msra.mxu0 0.0
    %2326 = vmatprep.subr.mxu0 0.0
    %2327 = vmatpush1.msra.mxu0 0.0
    %2328 = vmatprep.subr.mxu0 0.0
    %2329 = vmatpush1.msra.mxu0 0.0
    %2330 = vmatprep.subr.mxu0 0.0
    %2331 = vmatpush1.msra.mxu0 0.0
    %2332 = vmatprep.subr.mxu0 0.0
    %2333 = vmatpush1.msra.mxu0 0.0
    %2334 = vmatprep.subr.mxu0 0.0
    %2335 = vmatpush1.msra.mxu0 0.0
    %2336 = vmatprep.subr.mxu0 0.0
    %2337 = vmatpush1.msra.mxu0 0.0
    %2338 = vmatprep.subr.mxu0 0.0
    %2339 = vmatpush1.msra.mxu0 0.0
    %2340 = vmatprep.mubr.f32.mxu0 0.0
    %v2341 = vand.u32 %v768, 4294901760
    %v2342 = vsub.f32 %v768, %v2341
    %v2343 = vand.u32 %v2342, 4294901760
    %2344 = vmatmul.mubr.f32.gmra.mrb[0].mxu0 %v2343
    %v2345 = vpop.f32.mrb[0].mxu0
    %v2346 = vadd.f32 %v2258, %v2345
    %v2347 = vpop.f32.mrb[0].mxu0
    %2348 = vmatprep.mubr.f32.mxu0 0.0
    %v2349 = vand.u32 %v771, 4294901760
    %v2350 = vsub.f32 %v771, %v2349
    %v2351 = vand.u32 %v2350, 4294901760
    %2352 = vmatmul.mubr.f32.gmra.mrb[0].mxu0 %v2351
    %v2353 = vpop.f32.mrb[0].mxu0
    %v2354 = vadd.f32 %v2265, %v2353
    %v2355 = vpop.f32.mrb[0].mxu0
    %2356 = vdwg.mxu0
    %2357 = vmatprep.subr.mxu0 0.0
    %v2358 = vand.u32 %v1948, 4294901760
    %v2359 = vsub.f32 %v1948, %v2358
    %v2360 = vand.u32 %v2359, 4294901760
    %2361 = vmatpush1.msra.mxu0 %v2360
    %2362 = vmatprep.subr.mxu0 0.0
    %v2363 = vand.u32 %v1949, 4294901760
    %v2364 = vsub.f32 %v1949, %v2363
    %v2365 = vand.u32 %v2364, 4294901760
    %2366 = vmatpush1.msra.mxu0 %v2365
    %2367 = vmatprep.subr.mxu0 0.0
    %v2368 = vand.u32 %v1950, 4294901760
    %v2369 = vsub.f32 %v1950, %v2368
    %v2370 = vand.u32 %v2369, 4294901760
    %2371 = vmatpush1.msra.mxu0 %v2370
    %2372 = vmatprep.subr.mxu0 0.0
    %v2373 = vand.u32 %v1951, 4294901760
    %v2374 = vsub.f32 %v1951, %v2373
    %v2375 = vand.u32 %v2374, 4294901760
    %2376 = vmatpush1.msra.mxu0 %v2375
    %2377 = vmatprep.subr.mxu0 0.0
    %v2378 = vand.u32 %v1952, 4294901760
    %v2379 = vsub.f32 %v1952, %v2378
    %v2380 = vand.u32 %v2379, 4294901760
    %2381 = vmatpush1.msra.mxu0 %v2380
    %2382 = vmatprep.subr.mxu0 0.0
    %v2383 = vand.u32 %v1953, 4294901760
    %v2384 = vsub.f32 %v1953, %v2383
    %v2385 = vand.u32 %v2384, 4294901760
    %2386 = vmatpush1.msra.mxu0 %v2385
    %2387 = vmatprep.subr.mxu0 0.0
    %v2388 = vand.u32 %v1954, 4294901760
    %v2389 = vsub.f32 %v1954, %v2388
    %v2390 = vand.u32 %v2389, 4294901760
    %2391 = vmatpush1.msra.mxu0 %v2390
    %2392 = vmatprep.subr.mxu0 0.0
    %v2393 = vand.u32 %v1955, 4294901760
    %v2394 = vsub.f32 %v1955, %v2393
    %v2395 = vand.u32 %v2394, 4294901760
    %2396 = vmatpush1.msra.mxu0 %v2395
    %2397 = vmatprep.subr.mxu0 0.0
    %2398 = vmatpush1.msra.mxu0 0.0
    %2399 = vmatprep.subr.mxu0 0.0
    %2400 = vmatpush1.msra.mxu0 0.0
    %2401 = vmatprep.subr.mxu0 0.0
    %2402 = vmatpush1.msra.mxu0 0.0
    %2403 = vmatprep.subr.mxu0 0.0
    %2404 = vmatpush1.msra.mxu0 0.0
    %2405 = vmatprep.subr.mxu0 0.0
    %2406 = vmatpush1.msra.mxu0 0.0
    %2407 = vmatprep.subr.mxu0 0.0
    %2408 = vmatpush1.msra.mxu0 0.0
    %2409 = vmatprep.subr.mxu0 0.0
    %2410 = vmatpush1.msra.mxu0 0.0
    %2411 = vmatprep.subr.mxu0 0.0
    %2412 = vmatpush1.msra.mxu0 0.0
    %2413 = vmatprep.subr.mxu0 0.0
    %2414 = vmatpush1.msra.mxu0 0.0
    %2415 = vmatprep.subr.mxu0 0.0
    %2416 = vmatpush1.msra.mxu0 0.0
    %2417 = vmatprep.subr.mxu0 0.0
    %2418 = vmatpush1.msra.mxu0 0.0
    %2419 = vmatprep.subr.mxu0 0.0
    %2420 = vmatpush1.msra.mxu0 0.0
    %2421 = vmatprep.subr.mxu0 0.0
    %2422 = vmatpush1.msra.mxu0 0.0
    %2423 = vmatprep.subr.mxu0 0.0
    %2424 = vmatpush1.msra.mxu0 0.0
    %2425 = vmatprep.subr.mxu0 0.0
    %2426 = vmatpush1.msra.mxu0 0.0
    %2427 = vmatprep.subr.mxu0 0.0
    %2428 = vmatpush1.msra.mxu0 0.0
    %2429 = vmatprep.subr.mxu0 0.0
    %2430 = vmatpush1.msra.mxu0 0.0
    %2431 = vmatprep.subr.mxu0 0.0
    %2432 = vmatpush1.msra.mxu0 0.0
    %2433 = vmatprep.subr.mxu0 0.0
    %2434 = vmatpush1.msra.mxu0 0.0
    %2435 = vmatprep.subr.mxu0 0.0
    %2436 = vmatpush1.msra.mxu0 0.0
    %2437 = vmatprep.subr.mxu0 0.0
    %2438 = vmatpush1.msra.mxu0 0.0
    %2439 = vmatprep.subr.mxu0 0.0
    %2440 = vmatpush1.msra.mxu0 0.0
    %2441 = vmatprep.subr.mxu0 0.0
    %2442 = vmatpush1.msra.mxu0 0.0
    %2443 = vmatprep.subr.mxu0 0.0
    %2444 = vmatpush1.msra.mxu0 0.0
    %2445 = vmatprep.mubr.f32.mxu0 0.0
    %v2446 = vand.u32 %v768, 4294901760
    %2447 = vmatmul.mubr.f32.gmra.mrb[0].mxu0 %v2446
    %v2448 = vpop.f32.mrb[0].mxu0
    %v2449 = vadd.f32 %v2346, %v2448
    %v2450 = vpop.f32.mrb[0].mxu0
    %2451 = vmatprep.mubr.f32.mxu0 0.0
    %v2452 = vand.u32 %v771, 4294901760
    %2453 = vmatmul.mubr.f32.gmra.mrb[0].mxu0 %v2452
    %v2454 = vpop.f32.mrb[0].mxu0
    %v2455 = vadd.f32 %v2354, %v2454
    %v2456 = vpop.f32.mrb[0].mxu0
    %2457 = vdwg.mxu0
    %2458 = vmatprep.subr.mxu0 0.0
    %v2459 = vand.u32 %v1948, 4294901760
    %2460 = vmatpush1.msra.mxu0 %v2459
    %2461 = vmatprep.subr.mxu0 0.0
    %v2462 = vand.u32 %v1949, 4294901760
    %2463 = vmatpush1.msra.mxu0 %v2462
    %2464 = vmatprep.subr.mxu0 0.0
    %v2465 = vand.u32 %v1950, 4294901760
    %2466 = vmatpush1.msra.mxu0 %v2465
    %2467 = vmatprep.subr.mxu0 0.0
    %v2468 = vand.u32 %v1951, 4294901760
    %2469 = vmatpush1.msra.mxu0 %v2468
    %2470 = vmatprep.subr.mxu0 0.0
    %v2471 = vand.u32 %v1952, 4294901760
    %2472 = vmatpush1.msra.mxu0 %v2471
    %2473 = vmatprep.subr.mxu0 0.0
    %v2474 = vand.u32 %v1953, 4294901760
    %2475 = vmatpush1.msra.mxu0 %v2474
    %2476 = vmatprep.subr.mxu0 0.0
    %v2477 = vand.u32 %v1954, 4294901760
    %2478 = vmatpush1.msra.mxu0 %v2477
    %2479 = vmatprep.subr.mxu0 0.0
    %v2480 = vand.u32 %v1955, 4294901760
    %2481 = vmatpush1.msra.mxu0 %v2480
    %2482 = vmatprep.subr.mxu0 0.0
    %2483 = vmatpush1.msra.mxu0 0.0
    %2484 = vmatprep.subr.mxu0 0.0
    %2485 = vmatpush1.msra.mxu0 0.0
    %2486 = vmatprep.subr.mxu0 0.0
    %2487 = vmatpush1.msra.mxu0 0.0
    %2488 = vmatprep.subr.mxu0 0.0
    %2489 = vmatpush1.msra.mxu0 0.0
    %2490 = vmatprep.subr.mxu0 0.0
    %2491 = vmatpush1.msra.mxu0 0.0
    %2492 = vmatprep.subr.mxu0 0.0
    %2493 = vmatpush1.msra.mxu0 0.0
    %2494 = vmatprep.subr.mxu0 0.0
    %2495 = vmatpush1.msra.mxu0 0.0
    %2496 = vmatprep.subr.mxu0 0.0
    %2497 = vmatpush1.msra.mxu0 0.0
    %2498 = vmatprep.subr.mxu0 0.0
    %2499 = vmatpush1.msra.mxu0 0.0
    %2500 = vmatprep.subr.mxu0 0.0
    %2501 = vmatpush1.msra.mxu0 0.0
    %2502 = vmatprep.subr.mxu0 0.0
    %2503 = vmatpush1.msra.mxu0 0.0
    %2504 = vmatprep.subr.mxu0 0.0
    %2505 = vmatpush1.msra.mxu0 0.0
    %2506 = vmatprep.subr.mxu0 0.0
    %2507 = vmatpush1.msra.mxu0 0.0
    %2508 = vmatprep.subr.mxu0 0.0
    %2509 = vmatpush1.msra.mxu0 0.0
    %2510 = vmatprep.subr.mxu0 0.0
    %2511 = vmatpush1.msra.mxu0 0.0
    %2512 = vmatprep.subr.mxu0 0.0
    %2513 = vmatpush1.msra.mxu0 0.0
    %2514 = vmatprep.subr.mxu0 0.0
    %2515 = vmatpush1.msra.mxu0 0.0
    %2516 = vmatprep.subr.mxu0 0.0
    %2517 = vmatpush1.msra.mxu0 0.0
    %2518 = vmatprep.subr.mxu0 0.0
    %2519 = vmatpush1.msra.mxu0 0.0
    %2520 = vmatprep.subr.mxu0 0.0
    %2521 = vmatpush1.msra.mxu0 0.0
    %2522 = vmatprep.subr.mxu0 0.0
    %2523 = vmatpush1.msra.mxu0 0.0
    %2524 = vmatprep.subr.mxu0 0.0
    %2525 = vmatpush1.msra.mxu0 0.0
    %2526 = vmatprep.subr.mxu0 0.0
    %2527 = vmatpush1.msra.mxu0 0.0
    %2528 = vmatprep.subr.mxu0 0.0
    %2529 = vmatpush1.msra.mxu0 0.0
    %2530 = vmatprep.mubr.f32.mxu0 0.0
    %v2531 = vand.u32 %v768, 4294901760
    %2532 = vmatmul.mubr.f32.gmra.mrb[0].mxu0 %v2531
    %v2533 = vpop.f32.mrb[0].mxu0
    %v2534 = vadd.f32 %v2449, %v2533
    %v2535 = vpop.f32.mrb[0].mxu0
    %2536 = vmatprep.mubr.f32.mxu0 0.0
    %v2537 = vand.u32 %v771, 4294901760
    %2538 = vmatmul.mubr.f32.gmra.mrb[0].mxu0 %v2537
    %v2539 = vpop.f32.mrb[0].mxu0
    %v2540 = vadd.f32 %v2455, %v2539
    %v2541 = vpop.f32.mrb[0].mxu0
    %2542 = vdwg.mxu0
    %vm2543 = vcmask 261120
    %v2545 = vsel %vm2543, %v1344, 0
    %v2548 = vsel %vm2543, %v1350, 0
    %v2551 = vsel %vm2543, %v1939, 0
    %v2554 = vsel %vm2543, %v1945, 0
    %2556 = vmatprep.subr.mxu0 0.0
    %v2557 = vand.u32 %v2551, 4294901760
    %2558 = vmatpush1.xpose.msra.mxu0 %v2557
    %2559 = vmatprep.subr.mxu0 0.0
    %v2560 = vand.u32 %v2554, 4294901760
    %2561 = vmatpush1.xpose.msra.mxu0 %v2560
    %2562 = vmatprep.subr.mxu0 0.0
    %2563 = vmatpush1.xpose.msra.mxu0 0.0
    %2564 = vmatprep.subr.mxu0 0.0
    %2565 = vmatpush1.xpose.msra.mxu0 0.0
    %2566 = vmatprep.subr.mxu0 0.0
    %2567 = vmatpush1.xpose.msra.mxu0 0.0
    %2568 = vmatprep.subr.mxu0 0.0
    %2569 = vmatpush1.xpose.msra.mxu0 0.0
    %2570 = vmatprep.subr.mxu0 0.0
    %2571 = vmatpush1.xpose.msra.mxu0 0.0
    %2572 = vmatprep.subr.mxu0 0.0
    %2573 = vmatpush1.xpose.msra.mxu0 0.0
    %2574 = vmatprep.subr.mxu0 0.0
    %2575 = vmatpush1.xpose.msra.mxu0 0.0
    %2576 = vmatprep.subr.mxu0 0.0
    %2577 = vmatpush1.xpose.msra.mxu0 0.0
    %2578 = vmatprep.subr.mxu0 0.0
    %2579 = vmatpush1.xpose.msra.mxu0 0.0
    %2580 = vmatprep.subr.mxu0 0.0
    %2581 = vmatpush1.xpose.msra.mxu0 0.0
    %2582 = vmatprep.subr.mxu0 0.0
    %2583 = vmatpush1.xpose.msra.mxu0 0.0
    %2584 = vmatprep.subr.mxu0 0.0
    %2585 = vmatpush1.xpose.msra.mxu0 0.0
    %2586 = vmatprep.subr.mxu0 0.0
    %2587 = vmatpush1.xpose.msra.mxu0 0.0
    %2588 = vmatprep.subr.mxu0 0.0
    %2589 = vmatpush1.xpose.msra.mxu0 0.0
    %2590 = vmatprep.subr.mxu0 0.0
    %2591 = vmatpush1.xpose.msra.mxu0 0.0
    %2592 = vmatprep.subr.mxu0 0.0
    %2593 = vmatpush1.xpose.msra.mxu0 0.0
    %2594 = vmatprep.subr.mxu0 0.0
    %2595 = vmatpush1.xpose.msra.mxu0 0.0
    %2596 = vmatprep.subr.mxu0 0.0
    %2597 = vmatpush1.xpose.msra.mxu0 0.0
    %2598 = vmatprep.subr.mxu0 0.0
    %2599 = vmatpush1.xpose.msra.mxu0 0.0
    %2600 = vmatprep.subr.mxu0 0.0
    %2601 = vmatpush1.xpose.msra.mxu0 0.0
    %2602 = vmatprep.subr.mxu0 0.0
    %2603 = vmatpush1.xpose.msra.mxu0 0.0
    %2604 = vmatprep.subr.mxu0 0.0
    %2605 = vmatpush1.xpose.msra.mxu0 0.0
    %2606 = vmatprep.subr.mxu0 0.0
    %2607 = vmatpush1.xpose.msra.mxu0 0.0
    %2608 = vmatprep.subr.mxu0 0.0
    %2609 = vmatpush1.xpose.msra.mxu0 0.0
    %2610 = vmatprep.subr.mxu0 0.0
    %2611 = vmatpush1.xpose.msra.mxu0 0.0
    %2612 = vmatprep.subr.mxu0 0.0
    %2613 = vmatpush1.xpose.msra.mxu0 0.0
    %2614 = vmatprep.subr.mxu0 0.0
    %2615 = vmatpush1.xpose.msra.mxu0 0.0
    %2616 = vmatprep.subr.mxu0 0.0
    %2617 = vmatpush1.xpose.msra.mxu0 0.0
    %2618 = vmatprep.subr.mxu0 0.0
    %2619 = vmatpush1.xpose.msra.mxu0 0.0
    %2620 = vmatprep.subr.mxu0 0.0
    %2621 = vmatpush1.xpose.msra.mxu0 0.0
    %2622 = vmatprep.mubr.f32.mxu0 0.0
    %v2623 = vand.u32 %v2545, 4294901760
    %v2624 = vsub.f32 %v2545, %v2623
    %v2625 = vand.u32 %v2624, 4294901760
    %v2626 = vsub.f32 %v2624, %v2625
    %v2627 = vand.u32 %v2626, 4294901760
    %2628 = vmatmul.mubr.f32.gmra.mrb[0].mxu0 %v2627
    %v2629 = vpop.f32.mrb[0].mxu0
    %v2630 = vadd.f32 0.0, %v2629
    %v2631 = vpop.f32.mrb[0].mxu0
    %2632 = vmatprep.mubr.f32.mxu0 0.0
    %v2633 = vand.u32 %v2548, 4294901760
    %v2634 = vsub.f32 %v2548, %v2633
    %v2635 = vand.u32 %v2634, 4294901760
    %v2636 = vsub.f32 %v2634, %v2635
    %v2637 = vand.u32 %v2636, 4294901760
    %2638 = vmatmul.mubr.f32.gmra.mrb[0].mxu0 %v2637
    %v2639 = vpop.f32.mrb[0].mxu0
    %v2640 = vadd.f32 0.0, %v2639
    %v2641 = vpop.f32.mrb[0].mxu0
    %2642 = vdwg.mxu0
    %2643 = vmatprep.subr.mxu0 0.0
    %v2644 = vand.u32 %v2551, 4294901760
    %v2645 = vsub.f32 %v2551, %v2644
    %v2646 = vand.u32 %v2645, 4294901760
    %v2647 = vsub.f32 %v2645, %v2646
    %v2648 = vand.u32 %v2647, 4294901760
    %2649 = vmatpush1.xpose.msra.mxu0 %v2648
    %2650 = vmatprep.subr.mxu0 0.0
    %v2651 = vand.u32 %v2554, 4294901760
    %v2652 = vsub.f32 %v2554, %v2651
    %v2653 = vand.u32 %v2652, 4294901760
    %v2654 = vsub.f32 %v2652, %v2653
    %v2655 = vand.u32 %v2654, 4294901760
    %2656 = vmatpush1.xpose.msra.mxu0 %v2655
    %2657 = vmatprep.subr.mxu0 0.0
    %2658 = vmatpush1.xpose.msra.mxu0 0.0
    %2659 = vmatprep.subr.mxu0 0.0
    %2660 = vmatpush1.xpose.msra.mxu0 0.0
    %2661 = vmatprep.subr.mxu0 0.0
    %2662 = vmatpush1.xpose.msra.mxu0 0.0
    %2663 = vmatprep.subr.mxu0 0.0
    %2664 = vmatpush1.xpose.msra.mxu0 0.0
    %2665 = vmatprep.subr.mxu0 0.0
    %2666 = vmatpush1.xpose.msra.mxu0 0.0
    %2667 = vmatprep.subr.mxu0 0.0
    %2668 = vmatpush1.xpose.msra.mxu0 0.0
    %2669 = vmatprep.subr.mxu0 0.0
    %2670 = vmatpush1.xpose.msra.mxu0 0.0
    %2671 = vmatprep.subr.mxu0 0.0
    %2672 = vmatpush1.xpose.msra.mxu0 0.0
    %2673 = vmatprep.subr.mxu0 0.0
    %2674 = vmatpush1.xpose.msra.mxu0 0.0
    %2675 = vmatprep.subr.mxu0 0.0
    %2676 = vmatpush1.xpose.msra.mxu0 0.0
    %2677 = vmatprep.subr.mxu0 0.0
    %2678 = vmatpush1.xpose.msra.mxu0 0.0
    %2679 = vmatprep.subr.mxu0 0.0
    %2680 = vmatpush1.xpose.msra.mxu0 0.0
    %2681 = vmatprep.subr.mxu0 0.0
    %2682 = vmatpush1.xpose.msra.mxu0 0.0
    %2683 = vmatprep.subr.mxu0 0.0
    %2684 = vmatpush1.xpose.msra.mxu0 0.0
    %2685 = vmatprep.subr.mxu0 0.0
    %2686 = vmatpush1.xpose.msra.mxu0 0.0
    %2687 = vmatprep.subr.mxu0 0.0
    %2688 = vmatpush1.xpose.msra.mxu0 0.0
    %2689 = vmatprep.subr.mxu0 0.0
    %2690 = vmatpush1.xpose.msra.mxu0 0.0
    %2691 = vmatprep.subr.mxu0 0.0
    %2692 = vmatpush1.xpose.msra.mxu0 0.0
    %2693 = vmatprep.subr.mxu0 0.0
    %2694 = vmatpush1.xpose.msra.mxu0 0.0
    %2695 = vmatprep.subr.mxu0 0.0
    %2696 = vmatpush1.xpose.msra.mxu0 0.0
    %2697 = vmatprep.subr.mxu0 0.0
    %2698 = vmatpush1.xpose.msra.mxu0 0.0
    %2699 = vmatprep.subr.mxu0 0.0
    %2700 = vmatpush1.xpose.msra.mxu0 0.0
    %2701 = vmatprep.subr.mxu0 0.0
    %2702 = vmatpush1.xpose.msra.mxu0 0.0
    %2703 = vmatprep.subr.mxu0 0.0
    %2704 = vmatpush1.xpose.msra.mxu0 0.0
    %2705 = vmatprep.subr.mxu0 0.0
    %2706 = vmatpush1.xpose.msra.mxu0 0.0
    %2707 = vmatprep.subr.mxu0 0.0
    %2708 = vmatpush1.xpose.msra.mxu0 0.0
    %2709 = vmatprep.subr.mxu0 0.0
    %2710 = vmatpush1.xpose.msra.mxu0 0.0
    %2711 = vmatprep.subr.mxu0 0.0
    %2712 = vmatpush1.xpose.msra.mxu0 0.0
    %2713 = vmatprep.subr.mxu0 0.0
    %2714 = vmatpush1.xpose.msra.mxu0 0.0
    %2715 = vmatprep.subr.mxu0 0.0
    %2716 = vmatpush1.xpose.msra.mxu0 0.0
    %2717 = vmatprep.mubr.f32.mxu0 0.0
    %v2718 = vand.u32 %v2545, 4294901760
    %2719 = vmatmul.mubr.f32.gmra.mrb[0].mxu0 %v2718
    %v2720 = vpop.f32.mrb[0].mxu0
    %v2721 = vadd.f32 %v2630, %v2720
    %v2722 = vpop.f32.mrb[0].mxu0
    %2723 = vmatprep.mubr.f32.mxu0 0.0
    %v2724 = vand.u32 %v2548, 4294901760
    %2725 = vmatmul.mubr.f32.gmra.mrb[0].mxu0 %v2724
    %v2726 = vpop.f32.mrb[0].mxu0
    %v2727 = vadd.f32 %v2640, %v2726
    %v2728 = vpop.f32.mrb[0].mxu0
    %2729 = vdwg.mxu0
    %2730 = vmatprep.subr.mxu0 0.0
    %v2731 = vand.u32 %v2551, 4294901760
    %v2732 = vsub.f32 %v2551, %v2731
    %2733 = vmatpush1.xpose.msra.mxu0 %v2732
    %2734 = vmatprep.subr.mxu0 0.0
    %v2735 = vand.u32 %v2554, 4294901760
    %v2736 = vsub.f32 %v2554, %v2735
    %2737 = vmatpush1.xpose.msra.mxu0 %v2736
    %2738 = vmatprep.subr.mxu0 0.0
    %2739 = vmatpush1.xpose.msra.mxu0 0.0
    %2740 = vmatprep.subr.mxu0 0.0
    %2741 = vmatpush1.xpose.msra.mxu0 0.0
    %2742 = vmatprep.subr.mxu0 0.0
    %2743 = vmatpush1.xpose.msra.mxu0 0.0
    %2744 = vmatprep.subr.mxu0 0.0
    %2745 = vmatpush1.xpose.msra.mxu0 0.0
    %2746 = vmatprep.subr.mxu0 0.0
    %2747 = vmatpush1.xpose.msra.mxu0 0.0
    %2748 = vmatprep.subr.mxu0 0.0
    %2749 = vmatpush1.xpose.msra.mxu0 0.0
    %2750 = vmatprep.subr.mxu0 0.0
    %2751 = vmatpush1.xpose.msra.mxu0 0.0
    %2752 = vmatprep.subr.mxu0 0.0
    %2753 = vmatpush1.xpose.msra.mxu0 0.0
    %2754 = vmatprep.subr.mxu0 0.0
    %2755 = vmatpush1.xpose.msra.mxu0 0.0
    %2756 = vmatprep.subr.mxu0 0.0
    %2757 = vmatpush1.xpose.msra.mxu0 0.0
    %2758 = vmatprep.subr.mxu0 0.0
    %2759 = vmatpush1.xpose.msra.mxu0 0.0
    %2760 = vmatprep.subr.mxu0 0.0
    %2761 = vmatpush1.xpose.msra.mxu0 0.0
    %2762 = vmatprep.subr.mxu0 0.0
    %2763 = vmatpush1.xpose.msra.mxu0 0.0
    %2764 = vmatprep.subr.mxu0 0.0
    %2765 = vmatpush1.xpose.msra.mxu0 0.0
    %2766 = vmatprep.subr.mxu0 0.0
    %2767 = vmatpush1.xpose.msra.mxu0 0.0
    %2768 = vmatprep.subr.mxu0 0.0
    %2769 = vmatpush1.xpose.msra.mxu0 0.0
    %2770 = vmatprep.subr.mxu0 0.0
    %2771 = vmatpush1.xpose.msra.mxu0 0.0
    %2772 = vmatprep.subr.mxu0 0.0
    %2773 = vmatpush1.xpose.msra.mxu0 0.0
    %2774 = vmatprep.subr.mxu0 0.0
    %2775 = vmatpush1.xpose.msra.mxu0 0.0
    %2776 = vmatprep.subr.mxu0 0.0
    %2777 = vmatpush1.xpose.msra.mxu0 0.0
    %2778 = vmatprep.subr.mxu0 0.0
    %2779 = vmatpush1.xpose.msra.mxu0 0.0
    %2780 = vmatprep.subr.mxu0 0.0
    %2781 = vmatpush1.xpose.msra.mxu0 0.0
    %2782 = vmatprep.subr.mxu0 0.0
    %2783 = vmatpush1.xpose.msra.mxu0 0.0
    %2784 = vmatprep.subr.mxu0 0.0
    %2785 = vmatpush1.xpose.msra.mxu0 0.0
    %2786 = vmatprep.subr.mxu0 0.0
    %2787 = vmatpush1.xpose.msra.mxu0 0.0
    %2788 = vmatprep.subr.mxu0 0.0
    %2789 = vmatpush1.xpose.msra.mxu0 0.0
    %2790 = vmatprep.subr.mxu0 0.0
    %2791 = vmatpush1.xpose.msra.mxu0 0.0
    %2792 = vmatprep.subr.mxu0 0.0
    %2793 = vmatpush1.xpose.msra.mxu0 0.0
    %2794 = vmatprep.subr.mxu0 0.0
    %2795 = vmatpush1.xpose.msra.mxu0 0.0
    %2796 = vmatprep.subr.mxu0 0.0
    %2797 = vmatpush1.xpose.msra.mxu0 0.0
    %2798 = vmatprep.mubr.f32.mxu0 0.0
    %v2799 = vand.u32 %v2545, 4294901760
    %v2800 = vsub.f32 %v2545, %v2799
    %2801 = vmatmul.mubr.f32.gmra.mrb[0].mxu0 %v2800
    %v2802 = vpop.f32.mrb[0].mxu0
    %v2803 = vadd.f32 %v2721, %v2802
    %v2804 = vpop.f32.mrb[0].mxu0
    %2805 = vmatprep.mubr.f32.mxu0 0.0
    %v2806 = vand.u32 %v2548, 4294901760
    %v2807 = vsub.f32 %v2548, %v2806
    %2808 = vmatmul.mubr.f32.gmra.mrb[0].mxu0 %v2807
    %v2809 = vpop.f32.mrb[0].mxu0
    %v2810 = vadd.f32 %v2727, %v2809
    %v2811 = vpop.f32.mrb[0].mxu0
    %2812 = vdwg.mxu0
    %2813 = vmatprep.subr.mxu0 0.0
    %v2814 = vand.u32 %v2551, 4294901760
    %2815 = vmatpush1.xpose.msra.mxu0 %v2814
    %2816 = vmatprep.subr.mxu0 0.0
    %v2817 = vand.u32 %v2554, 4294901760
    %2818 = vmatpush1.xpose.msra.mxu0 %v2817
    %2819 = vmatprep.subr.mxu0 0.0
    %2820 = vmatpush1.xpose.msra.mxu0 0.0
    %2821 = vmatprep.subr.mxu0 0.0
    %2822 = vmatpush1.xpose.msra.mxu0 0.0
    %2823 = vmatprep.subr.mxu0 0.0
    %2824 = vmatpush1.xpose.msra.mxu0 0.0
    %2825 = vmatprep.subr.mxu0 0.0
    %2826 = vmatpush1.xpose.msra.mxu0 0.0
    %2827 = vmatprep.subr.mxu0 0.0
    %2828 = vmatpush1.xpose.msra.mxu0 0.0
    %2829 = vmatprep.subr.mxu0 0.0
    %2830 = vmatpush1.xpose.msra.mxu0 0.0
    %2831 = vmatprep.subr.mxu0 0.0
    %2832 = vmatpush1.xpose.msra.mxu0 0.0
    %2833 = vmatprep.subr.mxu0 0.0
    %2834 = vmatpush1.xpose.msra.mxu0 0.0
    %2835 = vmatprep.subr.mxu0 0.0
    %2836 = vmatpush1.xpose.msra.mxu0 0.0
    %2837 = vmatprep.subr.mxu0 0.0
    %2838 = vmatpush1.xpose.msra.mxu0 0.0
    %2839 = vmatprep.subr.mxu0 0.0
    %2840 = vmatpush1.xpose.msra.mxu0 0.0
    %2841 = vmatprep.subr.mxu0 0.0
    %2842 = vmatpush1.xpose.msra.mxu0 0.0
    %2843 = vmatprep.subr.mxu0 0.0
    %2844 = vmatpush1.xpose.msra.mxu0 0.0
    %2845 = vmatprep.subr.mxu0 0.0
    %2846 = vmatpush1.xpose.msra.mxu0 0.0
    %2847 = vmatprep.subr.mxu0 0.0
    %2848 = vmatpush1.xpose.msra.mxu0 0.0
    %2849 = vmatprep.subr.mxu0 0.0
    %2850 = vmatpush1.xpose.msra.mxu0 0.0
    %2851 = vmatprep.subr.mxu0 0.0
    %2852 = vmatpush1.xpose.msra.mxu0 0.0
    %2853 = vmatprep.subr.mxu0 0.0
    %2854 = vmatpush1.xpose.msra.mxu0 0.0
    %2855 = vmatprep.subr.mxu0 0.0
    %2856 = vmatpush1.xpose.msra.mxu0 0.0
    %2857 = vmatprep.subr.mxu0 0.0
    %2858 = vmatpush1.xpose.msra.mxu0 0.0
    %2859 = vmatprep.subr.mxu0 0.0
    %2860 = vmatpush1.xpose.msra.mxu0 0.0
    %2861 = vmatprep.subr.mxu0 0.0
    %2862 = vmatpush1.xpose.msra.mxu0 0.0
    %2863 = vmatprep.subr.mxu0 0.0
    %2864 = vmatpush1.xpose.msra.mxu0 0.0
    %2865 = vmatprep.subr.mxu0 0.0
    %2866 = vmatpush1.xpose.msra.mxu0 0.0
    %2867 = vmatprep.subr.mxu0 0.0
    %2868 = vmatpush1.xpose.msra.mxu0 0.0
    %2869 = vmatprep.subr.mxu0 0.0
    %2870 = vmatpush1.xpose.msra.mxu0 0.0
    %2871 = vmatprep.subr.mxu0 0.0
    %2872 = vmatpush1.xpose.msra.mxu0 0.0
    %2873 = vmatprep.subr.mxu0 0.0
    %2874 = vmatpush1.xpose.msra.mxu0 0.0
    %2875 = vmatprep.subr.mxu0 0.0
    %2876 = vmatpush1.xpose.msra.mxu0 0.0
    %2877 = vmatprep.subr.mxu0 0.0
    %2878 = vmatpush1.xpose.msra.mxu0 0.0
    %2879 = vmatprep.mubr.f32.mxu0 0.0
    %v2880 = vand.u32 %v2545, 4294901760
    %v2881 = vsub.f32 %v2545, %v2880
    %v2882 = vand.u32 %v2881, 4294901760
    %2883 = vmatmul.mubr.f32.gmra.mrb[0].mxu0 %v2882
    %v2884 = vpop.f32.mrb[0].mxu0
    %v2885 = vadd.f32 %v2803, %v2884
    %v2886 = vpop.f32.mrb[0].mxu0
    %2887 = vmatprep.mubr.f32.mxu0 0.0
    %v2888 = vand.u32 %v2548, 4294901760
    %v2889 = vsub.f32 %v2548, %v2888
    %v2890 = vand.u32 %v2889, 4294901760
    %2891 = vmatmul.mubr.f32.gmra.mrb[0].mxu0 %v2890
    %v2892 = vpop.f32.mrb[0].mxu0
    %v2893 = vadd.f32 %v2810, %v2892
    %v2894 = vpop.f32.mrb[0].mxu0
    %2895 = vdwg.mxu0
    %2896 = vmatprep.subr.mxu0 0.0
    %v2897 = vand.u32 %v2551, 4294901760
    %v2898 = vsub.f32 %v2551, %v2897
    %v2899 = vand.u32 %v2898, 4294901760
    %2900 = vmatpush1.xpose.msra.mxu0 %v2899
    %2901 = vmatprep.subr.mxu0 0.0
    %v2902 = vand.u32 %v2554, 4294901760
    %v2903 = vsub.f32 %v2554, %v2902
    %v2904 = vand.u32 %v2903, 4294901760
    %2905 = vmatpush1.xpose.msra.mxu0 %v2904
    %2906 = vmatprep.subr.mxu0 0.0
    %2907 = vmatpush1.xpose.msra.mxu0 0.0
    %2908 = vmatprep.subr.mxu0 0.0
    %2909 = vmatpush1.xpose.msra.mxu0 0.0
    %2910 = vmatprep.subr.mxu0 0.0
    %2911 = vmatpush1.xpose.msra.mxu0 0.0
    %2912 = vmatprep.subr.mxu0 0.0
    %2913 = vmatpush1.xpose.msra.mxu0 0.0
    %2914 = vmatprep.subr.mxu0 0.0
    %2915 = vmatpush1.xpose.msra.mxu0 0.0
    %2916 = vmatprep.subr.mxu0 0.0
    %2917 = vmatpush1.xpose.msra.mxu0 0.0
    %2918 = vmatprep.subr.mxu0 0.0
    %2919 = vmatpush1.xpose.msra.mxu0 0.0
    %2920 = vmatprep.subr.mxu0 0.0
    %2921 = vmatpush1.xpose.msra.mxu0 0.0
    %2922 = vmatprep.subr.mxu0 0.0
    %2923 = vmatpush1.xpose.msra.mxu0 0.0
    %2924 = vmatprep.subr.mxu0 0.0
    %2925 = vmatpush1.xpose.msra.mxu0 0.0
    %2926 = vmatprep.subr.mxu0 0.0
    %2927 = vmatpush1.xpose.msra.mxu0 0.0
    %2928 = vmatprep.subr.mxu0 0.0
    %2929 = vmatpush1.xpose.msra.mxu0 0.0
    %2930 = vmatprep.subr.mxu0 0.0
    %2931 = vmatpush1.xpose.msra.mxu0 0.0
    %2932 = vmatprep.subr.mxu0 0.0
    %2933 = vmatpush1.xpose.msra.mxu0 0.0
    %2934 = vmatprep.subr.mxu0 0.0
    %2935 = vmatpush1.xpose.msra.mxu0 0.0
    %2936 = vmatprep.subr.mxu0 0.0
    %2937 = vmatpush1.xpose.msra.mxu0 0.0
    %2938 = vmatprep.subr.mxu0 0.0
    %2939 = vmatpush1.xpose.msra.mxu0 0.0
    %2940 = vmatprep.subr.mxu0 0.0
    %2941 = vmatpush1.xpose.msra.mxu0 0.0
    %2942 = vmatprep.subr.mxu0 0.0
    %2943 = vmatpush1.xpose.msra.mxu0 0.0
    %2944 = vmatprep.subr.mxu0 0.0
    %2945 = vmatpush1.xpose.msra.mxu0 0.0
    %2946 = vmatprep.subr.mxu0 0.0
    %2947 = vmatpush1.xpose.msra.mxu0 0.0
    %2948 = vmatprep.subr.mxu0 0.0
    %2949 = vmatpush1.xpose.msra.mxu0 0.0
    %2950 = vmatprep.subr.mxu0 0.0
    %2951 = vmatpush1.xpose.msra.mxu0 0.0
    %2952 = vmatprep.subr.mxu0 0.0
    %2953 = vmatpush1.xpose.msra.mxu0 0.0
    %2954 = vmatprep.subr.mxu0 0.0
    %2955 = vmatpush1.xpose.msra.mxu0 0.0
    %2956 = vmatprep.subr.mxu0 0.0
    %2957 = vmatpush1.xpose.msra.mxu0 0.0
    %2958 = vmatprep.subr.mxu0 0.0
    %2959 = vmatpush1.xpose.msra.mxu0 0.0
    %2960 = vmatprep.subr.mxu0 0.0
    %2961 = vmatpush1.xpose.msra.mxu0 0.0
    %2962 = vmatprep.subr.mxu0 0.0
    %2963 = vmatpush1.xpose.msra.mxu0 0.0
    %2964 = vmatprep.subr.mxu0 0.0
    %2965 = vmatpush1.xpose.msra.mxu0 0.0
    %2966 = vmatprep.mubr.f32.mxu0 0.0
    %v2967 = vand.u32 %v2545, 4294901760
    %2968 = vmatmul.mubr.f32.gmra.mrb[0].mxu0 %v2967
    %v2969 = vpop.f32.mrb[0].mxu0
    %v2970 = vadd.f32 %v2885, %v2969
    %v2971 = vpop.f32.mrb[0].mxu0
    %2972 = vmatprep.mubr.f32.mxu0 0.0
    %v2973 = vand.u32 %v2548, 4294901760
    %2974 = vmatmul.mubr.f32.gmra.mrb[0].mxu0 %v2973
    %v2975 = vpop.f32.mrb[0].mxu0
    %v2976 = vadd.f32 %v2893, %v2975
    %v2977 = vpop.f32.mrb[0].mxu0
    %2978 = vdwg.mxu0
    %2979 = vmatprep.subr.mxu0 0.0
    %v2980 = vand.u32 %v2551, 4294901760
    %2981 = vmatpush1.xpose.msra.mxu0 %v2980
    %2982 = vmatprep.subr.mxu0 0.0
    %v2983 = vand.u32 %v2554, 4294901760
    %2984 = vmatpush1.xpose.msra.mxu0 %v2983
    %2985 = vmatprep.subr.mxu0 0.0
    %2986 = vmatpush1.xpose.msra.mxu0 0.0
    %2987 = vmatprep.subr.mxu0 0.0
    %2988 = vmatpush1.xpose.msra.mxu0 0.0
    %2989 = vmatprep.subr.mxu0 0.0
    %2990 = vmatpush1.xpose.msra.mxu0 0.0
    %2991 = vmatprep.subr.mxu0 0.0
    %2992 = vmatpush1.xpose.msra.mxu0 0.0
    %2993 = vmatprep.subr.mxu0 0.0
    %2994 = vmatpush1.xpose.msra.mxu0 0.0
    %2995 = vmatprep.subr.mxu0 0.0
    %2996 = vmatpush1.xpose.msra.mxu0 0.0
    %2997 = vmatprep.subr.mxu0 0.0
    %2998 = vmatpush1.xpose.msra.mxu0 0.0
    %2999 = vmatprep.subr.mxu0 0.0
    %3000 = vmatpush1.xpose.msra.mxu0 0.0
    %3001 = vmatprep.subr.mxu0 0.0
    %3002 = vmatpush1.xpose.msra.mxu0 0.0
    %3003 = vmatprep.subr.mxu0 0.0
    %3004 = vmatpush1.xpose.msra.mxu0 0.0
    %3005 = vmatprep.subr.mxu0 0.0
    %3006 = vmatpush1.xpose.msra.mxu0 0.0
    %3007 = vmatprep.subr.mxu0 0.0
    %3008 = vmatpush1.xpose.msra.mxu0 0.0
    %3009 = vmatprep.subr.mxu0 0.0
    %3010 = vmatpush1.xpose.msra.mxu0 0.0
    %3011 = vmatprep.subr.mxu0 0.0
    %3012 = vmatpush1.xpose.msra.mxu0 0.0
    %3013 = vmatprep.subr.mxu0 0.0
    %3014 = vmatpush1.xpose.msra.mxu0 0.0
    %3015 = vmatprep.subr.mxu0 0.0
    %3016 = vmatpush1.xpose.msra.mxu0 0.0
    %3017 = vmatprep.subr.mxu0 0.0
    %3018 = vmatpush1.xpose.msra.mxu0 0.0
    %3019 = vmatprep.subr.mxu0 0.0
    %3020 = vmatpush1.xpose.msra.mxu0 0.0
    %3021 = vmatprep.subr.mxu0 0.0
    %3022 = vmatpush1.xpose.msra.mxu0 0.0
    %3023 = vmatprep.subr.mxu0 0.0
    %3024 = vmatpush1.xpose.msra.mxu0 0.0
    %3025 = vmatprep.subr.mxu0 0.0
    %3026 = vmatpush1.xpose.msra.mxu0 0.0
    %3027 = vmatprep.subr.mxu0 0.0
    %3028 = vmatpush1.xpose.msra.mxu0 0.0
    %3029 = vmatprep.subr.mxu0 0.0
    %3030 = vmatpush1.xpose.msra.mxu0 0.0
    %3031 = vmatprep.subr.mxu0 0.0
    %3032 = vmatpush1.xpose.msra.mxu0 0.0
    %3033 = vmatprep.subr.mxu0 0.0
    %3034 = vmatpush1.xpose.msra.mxu0 0.0
    %3035 = vmatprep.subr.mxu0 0.0
    %3036 = vmatpush1.xpose.msra.mxu0 0.0
    %3037 = vmatprep.subr.mxu0 0.0
    %3038 = vmatpush1.xpose.msra.mxu0 0.0
    %3039 = vmatprep.subr.mxu0 0.0
    %3040 = vmatpush1.xpose.msra.mxu0 0.0
    %3041 = vmatprep.subr.mxu0 0.0
    %3042 = vmatpush1.xpose.msra.mxu0 0.0
    %3043 = vmatprep.subr.mxu0 0.0
    %3044 = vmatpush1.xpose.msra.mxu0 0.0
    %3045 = vmatprep.mubr.f32.mxu0 0.0
    %v3046 = vand.u32 %v2545, 4294901760
    %3047 = vmatmul.mubr.f32.gmra.mrb[0].mxu0 %v3046
    %v3048 = vpop.f32.mrb[0].mxu0
    %v3049 = vadd.f32 %v2970, %v3048
    %v3050 = vpop.f32.mrb[0].mxu0
    %3051 = vmatprep.mubr.f32.mxu0 0.0
    %v3052 = vand.u32 %v2548, 4294901760
    %3053 = vmatmul.mubr.f32.gmra.mrb[0].mxu0 %v3052
    %v3054 = vpop.f32.mrb[0].mxu0
    %v3055 = vadd.f32 %v2976, %v3054
    %v3056 = vpop.f32.mrb[0].mxu0
    %3057 = vdwg.mxu0
    %v3058 = vmul.f32 %v3049, 0.17677669
    %v3059 = vmul.f32 %v3055, 0.17677669
    %vm3060 = vcmask 130048
    %v3061 = vsel %vm3060, %v3058, -inf
    %3062 = vmax.xlane.f32.xlu0 %v3061
    %v3063 = vpop.xlane.xlu0 %3062
    %v3064 = vsel %vm3060, %v3059, -inf
    %3065 = vmax.xlane.f32.xlu0 %v3064
    %v3066 = vpop.xlane.xlu0 %3065
    %v3067 = vsub.f32 %v3058, %v3063
    %v3068 = vsub.f32 %v3059, %v3066
    %v3069 = vmul.f32 %v3067, 1.442695
    %v3070 = vpow.pop %v3069
    %v3071 = vmul.f32 %v3068, 1.442695
    %v3072 = vpow.pop %v3071
    %v3073 = vsel %vm3060, %v3070, 0.0
    %3074 = vadd.xlane.f32.xlu0 %v3073
    %v3075 = vpop.xlane.xlu0 %3074
    %v3076 = vsel %vm3060, %v3072, 0.0
    %3077 = vadd.xlane.f32.xlu0 %v3076
    %v3078 = vpop.xlane.xlu0 %3077
    %v3079 = vrcp.pop %v3075
    %v3080 = vmul.f32 %v3070, %v3079
    %v3081 = vrcp.pop %v3078
    %v3082 = vmul.f32 %v3072, %v3081
    %v3084 = vsel %vm3060, %v3080, 0
    %v3087 = vsel %vm3060, %v3082, 0
    %3089 = vmatprep.subr.mxu0 0.0
    %v3090 = vand.u32 %v2534, 4294901760
    %3091 = vmatpush1.msra.mxu0 %v3090
    %3092 = vmatprep.subr.mxu0 0.0
    %v3093 = vand.u32 %v2540, 4294901760
    %3094 = vmatpush1.msra.mxu0 %v3093
    %3095 = vmatprep.subr.mxu0 0.0
    %3096 = vmatpush1.msra.mxu0 0.0
    %3097 = vmatprep.subr.mxu0 0.0
    %3098 = vmatpush1.msra.mxu0 0.0
    %3099 = vmatprep.subr.mxu0 0.0
    %3100 = vmatpush1.msra.mxu0 0.0
    %3101 = vmatprep.subr.mxu0 0.0
    %3102 = vmatpush1.msra.mxu0 0.0
    %3103 = vmatprep.subr.mxu0 0.0
    %3104 = vmatpush1.msra.mxu0 0.0
    %3105 = vmatprep.subr.mxu0 0.0
    %3106 = vmatpush1.msra.mxu0 0.0
    %3107 = vmatprep.subr.mxu0 0.0
    %3108 = vmatpush1.msra.mxu0 0.0
    %3109 = vmatprep.subr.mxu0 0.0
    %3110 = vmatpush1.msra.mxu0 0.0
    %3111 = vmatprep.subr.mxu0 0.0
    %3112 = vmatpush1.msra.mxu0 0.0
    %3113 = vmatprep.subr.mxu0 0.0
    %3114 = vmatpush1.msra.mxu0 0.0
    %3115 = vmatprep.subr.mxu0 0.0
    %3116 = vmatpush1.msra.mxu0 0.0
    %3117 = vmatprep.subr.mxu0 0.0
    %3118 = vmatpush1.msra.mxu0 0.0
    %3119 = vmatprep.subr.mxu0 0.0
    %3120 = vmatpush1.msra.mxu0 0.0
    %3121 = vmatprep.subr.mxu0 0.0
    %3122 = vmatpush1.msra.mxu0 0.0
    %3123 = vmatprep.subr.mxu0 0.0
    %3124 = vmatpush1.msra.mxu0 0.0
    %3125 = vmatprep.subr.mxu0 0.0
    %3126 = vmatpush1.msra.mxu0 0.0
    %3127 = vmatprep.subr.mxu0 0.0
    %3128 = vmatpush1.msra.mxu0 0.0
    %3129 = vmatprep.subr.mxu0 0.0
    %3130 = vmatpush1.msra.mxu0 0.0
    %3131 = vmatprep.subr.mxu0 0.0
    %3132 = vmatpush1.msra.mxu0 0.0
    %3133 = vmatprep.subr.mxu0 0.0
    %3134 = vmatpush1.msra.mxu0 0.0
    %3135 = vmatprep.subr.mxu0 0.0
    %3136 = vmatpush1.msra.mxu0 0.0
    %3137 = vmatprep.subr.mxu0 0.0
    %3138 = vmatpush1.msra.mxu0 0.0
    %3139 = vmatprep.subr.mxu0 0.0
    %3140 = vmatpush1.msra.mxu0 0.0
    %3141 = vmatprep.subr.mxu0 0.0
    %3142 = vmatpush1.msra.mxu0 0.0
    %3143 = vmatprep.subr.mxu0 0.0
    %3144 = vmatpush1.msra.mxu0 0.0
    %3145 = vmatprep.subr.mxu0 0.0
    %3146 = vmatpush1.msra.mxu0 0.0
    %3147 = vmatprep.subr.mxu0 0.0
    %3148 = vmatpush1.msra.mxu0 0.0
    %3149 = vmatprep.subr.mxu0 0.0
    %3150 = vmatpush1.msra.mxu0 0.0
    %3151 = vmatprep.subr.mxu0 0.0
    %3152 = vmatpush1.msra.mxu0 0.0
    %3153 = vmatprep.subr.mxu0 0.0
    %3154 = vmatpush1.msra.mxu0 0.0
    %3155 = vmatprep.mubr.f32.mxu0 0.0
    %v3156 = vand.u32 %v3084, 4294901760
    %v3157 = vsub.f32 %v3084, %v3156
    %v3158 = vand.u32 %v3157, 4294901760
    %v3159 = vsub.f32 %v3157, %v3158
    %v3160 = vand.u32 %v3159, 4294901760
    %3161 = vmatmul.mubr.f32.gmra.mrb[0].mxu0 %v3160
    %v3162 = vpop.f32.mrb[0].mxu0
    %v3163 = vadd.f32 0.0, %v3162
    %v3164 = vpop.f32.mrb[0].mxu0
    %3165 = vmatprep.mubr.f32.mxu0 0.0
    %v3166 = vand.u32 %v3087, 4294901760
    %v3167 = vsub.f32 %v3087, %v3166
    %v3168 = vand.u32 %v3167, 4294901760
    %v3169 = vsub.f32 %v3167, %v3168
    %v3170 = vand.u32 %v3169, 4294901760
    %3171 = vmatmul.mubr.f32.gmra.mrb[0].mxu0 %v3170
    %v3172 = vpop.f32.mrb[0].mxu0
    %v3173 = vadd.f32 0.0, %v3172
    %v3174 = vpop.f32.mrb[0].mxu0
    %3175 = vdwg.mxu0
    %3176 = vmatprep.subr.mxu0 0.0
    %v3177 = vand.u32 %v2534, 4294901760
    %v3178 = vsub.f32 %v2534, %v3177
    %v3179 = vand.u32 %v3178, 4294901760
    %v3180 = vsub.f32 %v3178, %v3179
    %v3181 = vand.u32 %v3180, 4294901760
    %3182 = vmatpush1.msra.mxu0 %v3181
    %3183 = vmatprep.subr.mxu0 0.0
    %v3184 = vand.u32 %v2540, 4294901760
    %v3185 = vsub.f32 %v2540, %v3184
    %v3186 = vand.u32 %v3185, 4294901760
    %v3187 = vsub.f32 %v3185, %v3186
    %v3188 = vand.u32 %v3187, 4294901760
    %3189 = vmatpush1.msra.mxu0 %v3188
    %3190 = vmatprep.subr.mxu0 0.0
    %3191 = vmatpush1.msra.mxu0 0.0
    %3192 = vmatprep.subr.mxu0 0.0
    %3193 = vmatpush1.msra.mxu0 0.0
    %3194 = vmatprep.subr.mxu0 0.0
    %3195 = vmatpush1.msra.mxu0 0.0
    %3196 = vmatprep.subr.mxu0 0.0
    %3197 = vmatpush1.msra.mxu0 0.0
    %3198 = vmatprep.subr.mxu0 0.0
    %3199 = vmatpush1.msra.mxu0 0.0
    %3200 = vmatprep.subr.mxu0 0.0
    %3201 = vmatpush1.msra.mxu0 0.0
    %3202 = vmatprep.subr.mxu0 0.0
    %3203 = vmatpush1.msra.mxu0 0.0
    %3204 = vmatprep.subr.mxu0 0.0
    %3205 = vmatpush1.msra.mxu0 0.0
    %3206 = vmatprep.subr.mxu0 0.0
    %3207 = vmatpush1.msra.mxu0 0.0
    %3208 = vmatprep.subr.mxu0 0.0
    %3209 = vmatpush1.msra.mxu0 0.0
    %3210 = vmatprep.subr.mxu0 0.0
    %3211 = vmatpush1.msra.mxu0 0.0
    %3212 = vmatprep.subr.mxu0 0.0
    %3213 = vmatpush1.msra.mxu0 0.0
    %3214 = vmatprep.subr.mxu0 0.0
    %3215 = vmatpush1.msra.mxu0 0.0
    %3216 = vmatprep.subr.mxu0 0.0
    %3217 = vmatpush1.msra.mxu0 0.0
    %3218 = vmatprep.subr.mxu0 0.0
    %3219 = vmatpush1.msra.mxu0 0.0
    %3220 = vmatprep.subr.mxu0 0.0
    %3221 = vmatpush1.msra.mxu0 0.0
    %3222 = vmatprep.subr.mxu0 0.0
    %3223 = vmatpush1.msra.mxu0 0.0
    %3224 = vmatprep.subr.mxu0 0.0
    %3225 = vmatpush1.msra.mxu0 0.0
    %3226 = vmatprep.subr.mxu0 0.0
    %3227 = vmatpush1.msra.mxu0 0.0
    %3228 = vmatprep.subr.mxu0 0.0
    %3229 = vmatpush1.msra.mxu0 0.0
    %3230 = vmatprep.subr.mxu0 0.0
    %3231 = vmatpush1.msra.mxu0 0.0
    %3232 = vmatprep.subr.mxu0 0.0
    %3233 = vmatpush1.msra.mxu0 0.0
    %3234 = vmatprep.subr.mxu0 0.0
    %3235 = vmatpush1.msra.mxu0 0.0
    %3236 = vmatprep.subr.mxu0 0.0
    %3237 = vmatpush1.msra.mxu0 0.0
    %3238 = vmatprep.subr.mxu0 0.0
    %3239 = vmatpush1.msra.mxu0 0.0
    %3240 = vmatprep.subr.mxu0 0.0
    %3241 = vmatpush1.msra.mxu0 0.0
    %3242 = vmatprep.subr.mxu0 0.0
    %3243 = vmatpush1.msra.mxu0 0.0
    %3244 = vmatprep.subr.mxu0 0.0
    %3245 = vmatpush1.msra.mxu0 0.0
    %3246 = vmatprep.subr.mxu0 0.0
    %3247 = vmatpush1.msra.mxu0 0.0
    %3248 = vmatprep.subr.mxu0 0.0
    %3249 = vmatpush1.msra.mxu0 0.0
    %3250 = vmatprep.mubr.f32.mxu0 0.0
    %v3251 = vand.u32 %v3084, 4294901760
    %3252 = vmatmul.mubr.f32.gmra.mrb[0].mxu0 %v3251
    %v3253 = vpop.f32.mrb[0].mxu0
    %v3254 = vadd.f32 %v3163, %v3253
    %v3255 = vpop.f32.mrb[0].mxu0
    %3256 = vmatprep.mubr.f32.mxu0 0.0
    %v3257 = vand.u32 %v3087, 4294901760
    %3258 = vmatmul.mubr.f32.gmra.mrb[0].mxu0 %v3257
    %v3259 = vpop.f32.mrb[0].mxu0
    %v3260 = vadd.f32 %v3173, %v3259
    %v3261 = vpop.f32.mrb[0].mxu0
    %3262 = vdwg.mxu0
    %3263 = vmatprep.subr.mxu0 0.0
    %v3264 = vand.u32 %v2534, 4294901760
    %v3265 = vsub.f32 %v2534, %v3264
    %3266 = vmatpush1.msra.mxu0 %v3265
    %3267 = vmatprep.subr.mxu0 0.0
    %v3268 = vand.u32 %v2540, 4294901760
    %v3269 = vsub.f32 %v2540, %v3268
    %3270 = vmatpush1.msra.mxu0 %v3269
    %3271 = vmatprep.subr.mxu0 0.0
    %3272 = vmatpush1.msra.mxu0 0.0
    %3273 = vmatprep.subr.mxu0 0.0
    %3274 = vmatpush1.msra.mxu0 0.0
    %3275 = vmatprep.subr.mxu0 0.0
    %3276 = vmatpush1.msra.mxu0 0.0
    %3277 = vmatprep.subr.mxu0 0.0
    %3278 = vmatpush1.msra.mxu0 0.0
    %3279 = vmatprep.subr.mxu0 0.0
    %3280 = vmatpush1.msra.mxu0 0.0
    %3281 = vmatprep.subr.mxu0 0.0
    %3282 = vmatpush1.msra.mxu0 0.0
    %3283 = vmatprep.subr.mxu0 0.0
    %3284 = vmatpush1.msra.mxu0 0.0
    %3285 = vmatprep.subr.mxu0 0.0
    %3286 = vmatpush1.msra.mxu0 0.0
    %3287 = vmatprep.subr.mxu0 0.0
    %3288 = vmatpush1.msra.mxu0 0.0
    %3289 = vmatprep.subr.mxu0 0.0
    %3290 = vmatpush1.msra.mxu0 0.0
    %3291 = vmatprep.subr.mxu0 0.0
    %3292 = vmatpush1.msra.mxu0 0.0
    %3293 = vmatprep.subr.mxu0 0.0
    %3294 = vmatpush1.msra.mxu0 0.0
    %3295 = vmatprep.subr.mxu0 0.0
    %3296 = vmatpush1.msra.mxu0 0.0
    %3297 = vmatprep.subr.mxu0 0.0
    %3298 = vmatpush1.msra.mxu0 0.0
    %3299 = vmatprep.subr.mxu0 0.0
    %3300 = vmatpush1.msra.mxu0 0.0
    %3301 = vmatprep.subr.mxu0 0.0
    %3302 = vmatpush1.msra.mxu0 0.0
    %3303 = vmatprep.subr.mxu0 0.0
    %3304 = vmatpush1.msra.mxu0 0.0
    %3305 = vmatprep.subr.mxu0 0.0
    %3306 = vmatpush1.msra.mxu0 0.0
    %3307 = vmatprep.subr.mxu0 0.0
    %3308 = vmatpush1.msra.mxu0 0.0
    %3309 = vmatprep.subr.mxu0 0.0
    %3310 = vmatpush1.msra.mxu0 0.0
    %3311 = vmatprep.subr.mxu0 0.0
    %3312 = vmatpush1.msra.mxu0 0.0
    %3313 = vmatprep.subr.mxu0 0.0
    %3314 = vmatpush1.msra.mxu0 0.0
    %3315 = vmatprep.subr.mxu0 0.0
    %3316 = vmatpush1.msra.mxu0 0.0
    %3317 = vmatprep.subr.mxu0 0.0
    %3318 = vmatpush1.msra.mxu0 0.0
    %3319 = vmatprep.subr.mxu0 0.0
    %3320 = vmatpush1.msra.mxu0 0.0
    %3321 = vmatprep.subr.mxu0 0.0
    %3322 = vmatpush1.msra.mxu0 0.0
    %3323 = vmatprep.subr.mxu0 0.0
    %3324 = vmatpush1.msra.mxu0 0.0
    %3325 = vmatprep.subr.mxu0 0.0
    %3326 = vmatpush1.msra.mxu0 0.0
    %3327 = vmatprep.subr.mxu0 0.0
    %3328 = vmatpush1.msra.mxu0 0.0
    %3329 = vmatprep.subr.mxu0 0.0
    %3330 = vmatpush1.msra.mxu0 0.0
    %3331 = vmatprep.mubr.f32.mxu0 0.0
    %v3332 = vand.u32 %v3084, 4294901760
    %v3333 = vsub.f32 %v3084, %v3332
    %3334 = vmatmul.mubr.f32.gmra.mrb[0].mxu0 %v3333
    %v3335 = vpop.f32.mrb[0].mxu0
    %v3336 = vadd.f32 %v3254, %v3335
    %v3337 = vpop.f32.mrb[0].mxu0
    %3338 = vmatprep.mubr.f32.mxu0 0.0
    %v3339 = vand.u32 %v3087, 4294901760
    %v3340 = vsub.f32 %v3087, %v3339
    %3341 = vmatmul.mubr.f32.gmra.mrb[0].mxu0 %v3340
    %v3342 = vpop.f32.mrb[0].mxu0
    %v3343 = vadd.f32 %v3260, %v3342
    %v3344 = vpop.f32.mrb[0].mxu0
    %3345 = vdwg.mxu0
    %3346 = vmatprep.subr.mxu0 0.0
    %v3347 = vand.u32 %v2534, 4294901760
    %3348 = vmatpush1.msra.mxu0 %v3347
    %3349 = vmatprep.subr.mxu0 0.0
    %v3350 = vand.u32 %v2540, 4294901760
    %3351 = vmatpush1.msra.mxu0 %v3350
    %3352 = vmatprep.subr.mxu0 0.0
    %3353 = vmatpush1.msra.mxu0 0.0
    %3354 = vmatprep.subr.mxu0 0.0
    %3355 = vmatpush1.msra.mxu0 0.0
    %3356 = vmatprep.subr.mxu0 0.0
    %3357 = vmatpush1.msra.mxu0 0.0
    %3358 = vmatprep.subr.mxu0 0.0
    %3359 = vmatpush1.msra.mxu0 0.0
    %3360 = vmatprep.subr.mxu0 0.0
    %3361 = vmatpush1.msra.mxu0 0.0
    %3362 = vmatprep.subr.mxu0 0.0
    %3363 = vmatpush1.msra.mxu0 0.0
    %3364 = vmatprep.subr.mxu0 0.0
    %3365 = vmatpush1.msra.mxu0 0.0
    %3366 = vmatprep.subr.mxu0 0.0
    %3367 = vmatpush1.msra.mxu0 0.0
    %3368 = vmatprep.subr.mxu0 0.0
    %3369 = vmatpush1.msra.mxu0 0.0
    %3370 = vmatprep.subr.mxu0 0.0
    %3371 = vmatpush1.msra.mxu0 0.0
    %3372 = vmatprep.subr.mxu0 0.0
    %3373 = vmatpush1.msra.mxu0 0.0
    %3374 = vmatprep.subr.mxu0 0.0
    %3375 = vmatpush1.msra.mxu0 0.0
    %3376 = vmatprep.subr.mxu0 0.0
    %3377 = vmatpush1.msra.mxu0 0.0
    %3378 = vmatprep.subr.mxu0 0.0
    %3379 = vmatpush1.msra.mxu0 0.0
    %3380 = vmatprep.subr.mxu0 0.0
    %3381 = vmatpush1.msra.mxu0 0.0
    %3382 = vmatprep.subr.mxu0 0.0
    %3383 = vmatpush1.msra.mxu0 0.0
    %3384 = vmatprep.subr.mxu0 0.0
    %3385 = vmatpush1.msra.mxu0 0.0
    %3386 = vmatprep.subr.mxu0 0.0
    %3387 = vmatpush1.msra.mxu0 0.0
    %3388 = vmatprep.subr.mxu0 0.0
    %3389 = vmatpush1.msra.mxu0 0.0
    %3390 = vmatprep.subr.mxu0 0.0
    %3391 = vmatpush1.msra.mxu0 0.0
    %3392 = vmatprep.subr.mxu0 0.0
    %3393 = vmatpush1.msra.mxu0 0.0
    %3394 = vmatprep.subr.mxu0 0.0
    %3395 = vmatpush1.msra.mxu0 0.0
    %3396 = vmatprep.subr.mxu0 0.0
    %3397 = vmatpush1.msra.mxu0 0.0
    %3398 = vmatprep.subr.mxu0 0.0
    %3399 = vmatpush1.msra.mxu0 0.0
    %3400 = vmatprep.subr.mxu0 0.0
    %3401 = vmatpush1.msra.mxu0 0.0
    %3402 = vmatprep.subr.mxu0 0.0
    %3403 = vmatpush1.msra.mxu0 0.0
    %3404 = vmatprep.subr.mxu0 0.0
    %3405 = vmatpush1.msra.mxu0 0.0
    %3406 = vmatprep.subr.mxu0 0.0
    %3407 = vmatpush1.msra.mxu0 0.0
    %3408 = vmatprep.subr.mxu0 0.0
    %3409 = vmatpush1.msra.mxu0 0.0
    %3410 = vmatprep.subr.mxu0 0.0
    %3411 = vmatpush1.msra.mxu0 0.0
    %3412 = vmatprep.mubr.f32.mxu0 0.0
    %v3413 = vand.u32 %v3084, 4294901760
    %v3414 = vsub.f32 %v3084, %v3413
    %v3415 = vand.u32 %v3414, 4294901760
    %3416 = vmatmul.mubr.f32.gmra.mrb[0].mxu0 %v3415
    %v3417 = vpop.f32.mrb[0].mxu0
    %v3418 = vadd.f32 %v3336, %v3417
    %v3419 = vpop.f32.mrb[0].mxu0
    %3420 = vmatprep.mubr.f32.mxu0 0.0
    %v3421 = vand.u32 %v3087, 4294901760
    %v3422 = vsub.f32 %v3087, %v3421
    %v3423 = vand.u32 %v3422, 4294901760
    %3424 = vmatmul.mubr.f32.gmra.mrb[0].mxu0 %v3423
    %v3425 = vpop.f32.mrb[0].mxu0
    %v3426 = vadd.f32 %v3343, %v3425
    %v3427 = vpop.f32.mrb[0].mxu0
    %3428 = vdwg.mxu0
    %3429 = vmatprep.subr.mxu0 0.0
    %v3430 = vand.u32 %v2534, 4294901760
    %v3431 = vsub.f32 %v2534, %v3430
    %v3432 = vand.u32 %v3431, 4294901760
    %3433 = vmatpush1.msra.mxu0 %v3432
    %3434 = vmatprep.subr.mxu0 0.0
    %v3435 = vand.u32 %v2540, 4294901760
    %v3436 = vsub.f32 %v2540, %v3435
    %v3437 = vand.u32 %v3436, 4294901760
    %3438 = vmatpush1.msra.mxu0 %v3437
    %3439 = vmatprep.subr.mxu0 0.0
    %3440 = vmatpush1.msra.mxu0 0.0
    %3441 = vmatprep.subr.mxu0 0.0
    %3442 = vmatpush1.msra.mxu0 0.0
    %3443 = vmatprep.subr.mxu0 0.0
    %3444 = vmatpush1.msra.mxu0 0.0
    %3445 = vmatprep.subr.mxu0 0.0
    %3446 = vmatpush1.msra.mxu0 0.0
    %3447 = vmatprep.subr.mxu0 0.0
    %3448 = vmatpush1.msra.mxu0 0.0
    %3449 = vmatprep.subr.mxu0 0.0
    %3450 = vmatpush1.msra.mxu0 0.0
    %3451 = vmatprep.subr.mxu0 0.0
    %3452 = vmatpush1.msra.mxu0 0.0
    %3453 = vmatprep.subr.mxu0 0.0
    %3454 = vmatpush1.msra.mxu0 0.0
    %3455 = vmatprep.subr.mxu0 0.0
    %3456 = vmatpush1.msra.mxu0 0.0
    %3457 = vmatprep.subr.mxu0 0.0
    %3458 = vmatpush1.msra.mxu0 0.0
    %3459 = vmatprep.subr.mxu0 0.0
    %3460 = vmatpush1.msra.mxu0 0.0
    %3461 = vmatprep.subr.mxu0 0.0
    %3462 = vmatpush1.msra.mxu0 0.0
    %3463 = vmatprep.subr.mxu0 0.0
    %3464 = vmatpush1.msra.mxu0 0.0
    %3465 = vmatprep.subr.mxu0 0.0
    %3466 = vmatpush1.msra.mxu0 0.0
    %3467 = vmatprep.subr.mxu0 0.0
    %3468 = vmatpush1.msra.mxu0 0.0
    %3469 = vmatprep.subr.mxu0 0.0
    %3470 = vmatpush1.msra.mxu0 0.0
    %3471 = vmatprep.subr.mxu0 0.0
    %3472 = vmatpush1.msra.mxu0 0.0
    %3473 = vmatprep.subr.mxu0 0.0
    %3474 = vmatpush1.msra.mxu0 0.0
    %3475 = vmatprep.subr.mxu0 0.0
    %3476 = vmatpush1.msra.mxu0 0.0
    %3477 = vmatprep.subr.mxu0 0.0
    %3478 = vmatpush1.msra.mxu0 0.0
    %3479 = vmatprep.subr.mxu0 0.0
    %3480 = vmatpush1.msra.mxu0 0.0
    %3481 = vmatprep.subr.mxu0 0.0
    %3482 = vmatpush1.msra.mxu0 0.0
    %3483 = vmatprep.subr.mxu0 0.0
    %3484 = vmatpush1.msra.mxu0 0.0
    %3485 = vmatprep.subr.mxu0 0.0
    %3486 = vmatpush1.msra.mxu0 0.0
    %3487 = vmatprep.subr.mxu0 0.0
    %3488 = vmatpush1.msra.mxu0 0.0
    %3489 = vmatprep.subr.mxu0 0.0
    %3490 = vmatpush1.msra.mxu0 0.0
    %3491 = vmatprep.subr.mxu0 0.0
    %3492 = vmatpush1.msra.mxu0 0.0
    %3493 = vmatprep.subr.mxu0 0.0
    %3494 = vmatpush1.msra.mxu0 0.0
    %3495 = vmatprep.subr.mxu0 0.0
    %3496 = vmatpush1.msra.mxu0 0.0
    %3497 = vmatprep.subr.mxu0 0.0
    %3498 = vmatpush1.msra.mxu0 0.0
    %3499 = vmatprep.mubr.f32.mxu0 0.0
    %v3500 = vand.u32 %v3084, 4294901760
    %3501 = vmatmul.mubr.f32.gmra.mrb[0].mxu0 %v3500
    %v3502 = vpop.f32.mrb[0].mxu0
    %v3503 = vadd.f32 %v3418, %v3502
    %v3504 = vpop.f32.mrb[0].mxu0
    %3505 = vmatprep.mubr.f32.mxu0 0.0
    %v3506 = vand.u32 %v3087, 4294901760
    %3507 = vmatmul.mubr.f32.gmra.mrb[0].mxu0 %v3506
    %v3508 = vpop.f32.mrb[0].mxu0
    %v3509 = vadd.f32 %v3426, %v3508
    %v3510 = vpop.f32.mrb[0].mxu0
    %3511 = vdwg.mxu0
    %3512 = vmatprep.subr.mxu0 0.0
    %v3513 = vand.u32 %v2534, 4294901760
    %3514 = vmatpush1.msra.mxu0 %v3513
    %3515 = vmatprep.subr.mxu0 0.0
    %v3516 = vand.u32 %v2540, 4294901760
    %3517 = vmatpush1.msra.mxu0 %v3516
    %3518 = vmatprep.subr.mxu0 0.0
    %3519 = vmatpush1.msra.mxu0 0.0
    %3520 = vmatprep.subr.mxu0 0.0
    %3521 = vmatpush1.msra.mxu0 0.0
    %3522 = vmatprep.subr.mxu0 0.0
    %3523 = vmatpush1.msra.mxu0 0.0
    %3524 = vmatprep.subr.mxu0 0.0
    %3525 = vmatpush1.msra.mxu0 0.0
    %3526 = vmatprep.subr.mxu0 0.0
    %3527 = vmatpush1.msra.mxu0 0.0
    %3528 = vmatprep.subr.mxu0 0.0
    %3529 = vmatpush1.msra.mxu0 0.0
    %3530 = vmatprep.subr.mxu0 0.0
    %3531 = vmatpush1.msra.mxu0 0.0
    %3532 = vmatprep.subr.mxu0 0.0
    %3533 = vmatpush1.msra.mxu0 0.0
    %3534 = vmatprep.subr.mxu0 0.0
    %3535 = vmatpush1.msra.mxu0 0.0
    %3536 = vmatprep.subr.mxu0 0.0
    %3537 = vmatpush1.msra.mxu0 0.0
    %3538 = vmatprep.subr.mxu0 0.0
    %3539 = vmatpush1.msra.mxu0 0.0
    %3540 = vmatprep.subr.mxu0 0.0
    %3541 = vmatpush1.msra.mxu0 0.0
    %3542 = vmatprep.subr.mxu0 0.0
    %3543 = vmatpush1.msra.mxu0 0.0
    %3544 = vmatprep.subr.mxu0 0.0
    %3545 = vmatpush1.msra.mxu0 0.0
    %3546 = vmatprep.subr.mxu0 0.0
    %3547 = vmatpush1.msra.mxu0 0.0
    %3548 = vmatprep.subr.mxu0 0.0
    %3549 = vmatpush1.msra.mxu0 0.0
    %3550 = vmatprep.subr.mxu0 0.0
    %3551 = vmatpush1.msra.mxu0 0.0
    %3552 = vmatprep.subr.mxu0 0.0
    %3553 = vmatpush1.msra.mxu0 0.0
    %3554 = vmatprep.subr.mxu0 0.0
    %3555 = vmatpush1.msra.mxu0 0.0
    %3556 = vmatprep.subr.mxu0 0.0
    %3557 = vmatpush1.msra.mxu0 0.0
    %3558 = vmatprep.subr.mxu0 0.0
    %3559 = vmatpush1.msra.mxu0 0.0
    %3560 = vmatprep.subr.mxu0 0.0
    %3561 = vmatpush1.msra.mxu0 0.0
    %3562 = vmatprep.subr.mxu0 0.0
    %3563 = vmatpush1.msra.mxu0 0.0
    %3564 = vmatprep.subr.mxu0 0.0
    %3565 = vmatpush1.msra.mxu0 0.0
    %3566 = vmatprep.subr.mxu0 0.0
    %3567 = vmatpush1.msra.mxu0 0.0
    %3568 = vmatprep.subr.mxu0 0.0
    %3569 = vmatpush1.msra.mxu0 0.0
    %3570 = vmatprep.subr.mxu0 0.0
    %3571 = vmatpush1.msra.mxu0 0.0
    %3572 = vmatprep.subr.mxu0 0.0
    %3573 = vmatpush1.msra.mxu0 0.0
    %3574 = vmatprep.subr.mxu0 0.0
    %3575 = vmatpush1.msra.mxu0 0.0
    %3576 = vmatprep.subr.mxu0 0.0
    %3577 = vmatpush1.msra.mxu0 0.0
    %3578 = vmatprep.mubr.f32.mxu0 0.0
    %v3579 = vand.u32 %v3084, 4294901760
    %3580 = vmatmul.mubr.f32.gmra.mrb[0].mxu0 %v3579
    %v3581 = vpop.f32.mrb[0].mxu0
    %v3582 = vadd.f32 %v3503, %v3581
    %v3583 = vpop.f32.mrb[0].mxu0
    %3584 = vmatprep.mubr.f32.mxu0 0.0
    %v3585 = vand.u32 %v3087, 4294901760
    %3586 = vmatmul.mubr.f32.gmra.mrb[0].mxu0 %v3585
    %v3587 = vpop.f32.mrb[0].mxu0
    %v3588 = vadd.f32 %v3509, %v3587
    %v3589 = vpop.f32.mrb[0].mxu0
    %3590 = vdwg.mxu0
    %3591 = vrot.lane.b32.xlu0 %v1344, 96
    %v3592 = vpop.permute.xlu0 %3591
    %3593 = vrot.lane.b32.xlu0 %v1350, 96
    %v3594 = vpop.permute.xlu0 %3593
    %3595 = vrot.lane.b32.xlu0 %v1939, 96
    %v3596 = vpop.permute.xlu0 %3595
    %3597 = vrot.lane.b32.xlu0 %v1945, 96
    %v3598 = vpop.permute.xlu0 %3597
    %v3599 = vsel %vm2543, %v3592, 0
    %v3601 = vsel %vm2543, %v3594, 0
    %v3603 = vsel %vm2543, %v3596, 0
    %v3605 = vsel %vm2543, %v3598, 0
    %3607 = vmatprep.subr.mxu0 0.0
    %v3608 = vand.u32 %v3603, 4294901760
    %3609 = vmatpush1.xpose.msra.mxu0 %v3608
    %3610 = vmatprep.subr.mxu0 0.0
    %v3611 = vand.u32 %v3605, 4294901760
    %3612 = vmatpush1.xpose.msra.mxu0 %v3611
    %3613 = vmatprep.subr.mxu0 0.0
    %3614 = vmatpush1.xpose.msra.mxu0 0.0
    %3615 = vmatprep.subr.mxu0 0.0
    %3616 = vmatpush1.xpose.msra.mxu0 0.0
    %3617 = vmatprep.subr.mxu0 0.0
    %3618 = vmatpush1.xpose.msra.mxu0 0.0
    %3619 = vmatprep.subr.mxu0 0.0
    %3620 = vmatpush1.xpose.msra.mxu0 0.0
    %3621 = vmatprep.subr.mxu0 0.0
    %3622 = vmatpush1.xpose.msra.mxu0 0.0
    %3623 = vmatprep.subr.mxu0 0.0
    %3624 = vmatpush1.xpose.msra.mxu0 0.0
    %3625 = vmatprep.subr.mxu0 0.0
    %3626 = vmatpush1.xpose.msra.mxu0 0.0
    %3627 = vmatprep.subr.mxu0 0.0
    %3628 = vmatpush1.xpose.msra.mxu0 0.0
    %3629 = vmatprep.subr.mxu0 0.0
    %3630 = vmatpush1.xpose.msra.mxu0 0.0
    %3631 = vmatprep.subr.mxu0 0.0
    %3632 = vmatpush1.xpose.msra.mxu0 0.0
    %3633 = vmatprep.subr.mxu0 0.0
    %3634 = vmatpush1.xpose.msra.mxu0 0.0
    %3635 = vmatprep.subr.mxu0 0.0
    %3636 = vmatpush1.xpose.msra.mxu0 0.0
    %3637 = vmatprep.subr.mxu0 0.0
    %3638 = vmatpush1.xpose.msra.mxu0 0.0
    %3639 = vmatprep.subr.mxu0 0.0
    %3640 = vmatpush1.xpose.msra.mxu0 0.0
    %3641 = vmatprep.subr.mxu0 0.0
    %3642 = vmatpush1.xpose.msra.mxu0 0.0
    %3643 = vmatprep.subr.mxu0 0.0
    %3644 = vmatpush1.xpose.msra.mxu0 0.0
    %3645 = vmatprep.subr.mxu0 0.0
    %3646 = vmatpush1.xpose.msra.mxu0 0.0
    %3647 = vmatprep.subr.mxu0 0.0
    %3648 = vmatpush1.xpose.msra.mxu0 0.0
    %3649 = vmatprep.subr.mxu0 0.0
    %3650 = vmatpush1.xpose.msra.mxu0 0.0
    %3651 = vmatprep.subr.mxu0 0.0
    %3652 = vmatpush1.xpose.msra.mxu0 0.0
    %3653 = vmatprep.subr.mxu0 0.0
    %3654 = vmatpush1.xpose.msra.mxu0 0.0
    %3655 = vmatprep.subr.mxu0 0.0
    %3656 = vmatpush1.xpose.msra.mxu0 0.0
    %3657 = vmatprep.subr.mxu0 0.0
    %3658 = vmatpush1.xpose.msra.mxu0 0.0
    %3659 = vmatprep.subr.mxu0 0.0
    %3660 = vmatpush1.xpose.msra.mxu0 0.0
    %3661 = vmatprep.subr.mxu0 0.0
    %3662 = vmatpush1.xpose.msra.mxu0 0.0
    %3663 = vmatprep.subr.mxu0 0.0
    %3664 = vmatpush1.xpose.msra.mxu0 0.0
    %3665 = vmatprep.subr.mxu0 0.0
    %3666 = vmatpush1.xpose.msra.mxu0 0.0
    %3667 = vmatprep.subr.mxu0 0.0
    %3668 = vmatpush1.xpose.msra.mxu0 0.0
    %3669 = vmatprep.subr.mxu0 0.0
    %3670 = vmatpush1.xpose.msra.mxu0 0.0
    %3671 = vmatprep.subr.mxu0 0.0
    %3672 = vmatpush1.xpose.msra.mxu0 0.0
    %3673 = vmatprep.mubr.f32.mxu0 0.0
    %v3674 = vand.u32 %v3599, 4294901760
    %v3675 = vsub.f32 %v3599, %v3674
    %v3676 = vand.u32 %v3675, 4294901760
    %v3677 = vsub.f32 %v3675, %v3676
    %v3678 = vand.u32 %v3677, 4294901760
    %3679 = vmatmul.mubr.f32.gmra.mrb[0].mxu0 %v3678
    %v3680 = vpop.f32.mrb[0].mxu0
    %v3681 = vadd.f32 0.0, %v3680
    %v3682 = vpop.f32.mrb[0].mxu0
    %3683 = vmatprep.mubr.f32.mxu0 0.0
    %v3684 = vand.u32 %v3601, 4294901760
    %v3685 = vsub.f32 %v3601, %v3684
    %v3686 = vand.u32 %v3685, 4294901760
    %v3687 = vsub.f32 %v3685, %v3686
    %v3688 = vand.u32 %v3687, 4294901760
    %3689 = vmatmul.mubr.f32.gmra.mrb[0].mxu0 %v3688
    %v3690 = vpop.f32.mrb[0].mxu0
    %v3691 = vadd.f32 0.0, %v3690
    %v3692 = vpop.f32.mrb[0].mxu0
    %3693 = vdwg.mxu0
    %3694 = vmatprep.subr.mxu0 0.0
    %v3695 = vand.u32 %v3603, 4294901760
    %v3696 = vsub.f32 %v3603, %v3695
    %v3697 = vand.u32 %v3696, 4294901760
    %v3698 = vsub.f32 %v3696, %v3697
    %v3699 = vand.u32 %v3698, 4294901760
    %3700 = vmatpush1.xpose.msra.mxu0 %v3699
    %3701 = vmatprep.subr.mxu0 0.0
    %v3702 = vand.u32 %v3605, 4294901760
    %v3703 = vsub.f32 %v3605, %v3702
    %v3704 = vand.u32 %v3703, 4294901760
    %v3705 = vsub.f32 %v3703, %v3704
    %v3706 = vand.u32 %v3705, 4294901760
    %3707 = vmatpush1.xpose.msra.mxu0 %v3706
    %3708 = vmatprep.subr.mxu0 0.0
    %3709 = vmatpush1.xpose.msra.mxu0 0.0
    %3710 = vmatprep.subr.mxu0 0.0
    %3711 = vmatpush1.xpose.msra.mxu0 0.0
    %3712 = vmatprep.subr.mxu0 0.0
    %3713 = vmatpush1.xpose.msra.mxu0 0.0
    %3714 = vmatprep.subr.mxu0 0.0
    %3715 = vmatpush1.xpose.msra.mxu0 0.0
    %3716 = vmatprep.subr.mxu0 0.0
    %3717 = vmatpush1.xpose.msra.mxu0 0.0
    %3718 = vmatprep.subr.mxu0 0.0
    %3719 = vmatpush1.xpose.msra.mxu0 0.0
    %3720 = vmatprep.subr.mxu0 0.0
    %3721 = vmatpush1.xpose.msra.mxu0 0.0
    %3722 = vmatprep.subr.mxu0 0.0
    %3723 = vmatpush1.xpose.msra.mxu0 0.0
    %3724 = vmatprep.subr.mxu0 0.0
    %3725 = vmatpush1.xpose.msra.mxu0 0.0
    %3726 = vmatprep.subr.mxu0 0.0
    %3727 = vmatpush1.xpose.msra.mxu0 0.0
    %3728 = vmatprep.subr.mxu0 0.0
    %3729 = vmatpush1.xpose.msra.mxu0 0.0
    %3730 = vmatprep.subr.mxu0 0.0
    %3731 = vmatpush1.xpose.msra.mxu0 0.0
    %3732 = vmatprep.subr.mxu0 0.0
    %3733 = vmatpush1.xpose.msra.mxu0 0.0
    %3734 = vmatprep.subr.mxu0 0.0
    %3735 = vmatpush1.xpose.msra.mxu0 0.0
    %3736 = vmatprep.subr.mxu0 0.0
    %3737 = vmatpush1.xpose.msra.mxu0 0.0
    %3738 = vmatprep.subr.mxu0 0.0
    %3739 = vmatpush1.xpose.msra.mxu0 0.0
    %3740 = vmatprep.subr.mxu0 0.0
    %3741 = vmatpush1.xpose.msra.mxu0 0.0
    %3742 = vmatprep.subr.mxu0 0.0
    %3743 = vmatpush1.xpose.msra.mxu0 0.0
    %3744 = vmatprep.subr.mxu0 0.0
    %3745 = vmatpush1.xpose.msra.mxu0 0.0
    %3746 = vmatprep.subr.mxu0 0.0
    %3747 = vmatpush1.xpose.msra.mxu0 0.0
    %3748 = vmatprep.subr.mxu0 0.0
    %3749 = vmatpush1.xpose.msra.mxu0 0.0
    %3750 = vmatprep.subr.mxu0 0.0
    %3751 = vmatpush1.xpose.msra.mxu0 0.0
    %3752 = vmatprep.subr.mxu0 0.0
    %3753 = vmatpush1.xpose.msra.mxu0 0.0
    %3754 = vmatprep.subr.mxu0 0.0
    %3755 = vmatpush1.xpose.msra.mxu0 0.0
    %3756 = vmatprep.subr.mxu0 0.0
    %3757 = vmatpush1.xpose.msra.mxu0 0.0
    %3758 = vmatprep.subr.mxu0 0.0
    %3759 = vmatpush1.xpose.msra.mxu0 0.0
    %3760 = vmatprep.subr.mxu0 0.0
    %3761 = vmatpush1.xpose.msra.mxu0 0.0
    %3762 = vmatprep.subr.mxu0 0.0
    %3763 = vmatpush1.xpose.msra.mxu0 0.0
    %3764 = vmatprep.subr.mxu0 0.0
    %3765 = vmatpush1.xpose.msra.mxu0 0.0
    %3766 = vmatprep.subr.mxu0 0.0
    %3767 = vmatpush1.xpose.msra.mxu0 0.0
    %3768 = vmatprep.mubr.f32.mxu0 0.0
    %v3769 = vand.u32 %v3599, 4294901760
    %3770 = vmatmul.mubr.f32.gmra.mrb[0].mxu0 %v3769
    %v3771 = vpop.f32.mrb[0].mxu0
    %v3772 = vadd.f32 %v3681, %v3771
    %v3773 = vpop.f32.mrb[0].mxu0
    %3774 = vmatprep.mubr.f32.mxu0 0.0
    %v3775 = vand.u32 %v3601, 4294901760
    %3776 = vmatmul.mubr.f32.gmra.mrb[0].mxu0 %v3775
    %v3777 = vpop.f32.mrb[0].mxu0
    %v3778 = vadd.f32 %v3691, %v3777
    %v3779 = vpop.f32.mrb[0].mxu0
    %3780 = vdwg.mxu0
    %3781 = vmatprep.subr.mxu0 0.0
    %v3782 = vand.u32 %v3603, 4294901760
    %v3783 = vsub.f32 %v3603, %v3782
    %3784 = vmatpush1.xpose.msra.mxu0 %v3783
    %3785 = vmatprep.subr.mxu0 0.0
    %v3786 = vand.u32 %v3605, 4294901760
    %v3787 = vsub.f32 %v3605, %v3786
    %3788 = vmatpush1.xpose.msra.mxu0 %v3787
    %3789 = vmatprep.subr.mxu0 0.0
    %3790 = vmatpush1.xpose.msra.mxu0 0.0
    %3791 = vmatprep.subr.mxu0 0.0
    %3792 = vmatpush1.xpose.msra.mxu0 0.0
    %3793 = vmatprep.subr.mxu0 0.0
    %3794 = vmatpush1.xpose.msra.mxu0 0.0
    %3795 = vmatprep.subr.mxu0 0.0
    %3796 = vmatpush1.xpose.msra.mxu0 0.0
    %3797 = vmatprep.subr.mxu0 0.0
    %3798 = vmatpush1.xpose.msra.mxu0 0.0
    %3799 = vmatprep.subr.mxu0 0.0
    %3800 = vmatpush1.xpose.msra.mxu0 0.0
    %3801 = vmatprep.subr.mxu0 0.0
    %3802 = vmatpush1.xpose.msra.mxu0 0.0
    %3803 = vmatprep.subr.mxu0 0.0
    %3804 = vmatpush1.xpose.msra.mxu0 0.0
    %3805 = vmatprep.subr.mxu0 0.0
    %3806 = vmatpush1.xpose.msra.mxu0 0.0
    %3807 = vmatprep.subr.mxu0 0.0
    %3808 = vmatpush1.xpose.msra.mxu0 0.0
    %3809 = vmatprep.subr.mxu0 0.0
    %3810 = vmatpush1.xpose.msra.mxu0 0.0
    %3811 = vmatprep.subr.mxu0 0.0
    %3812 = vmatpush1.xpose.msra.mxu0 0.0
    %3813 = vmatprep.subr.mxu0 0.0
    %3814 = vmatpush1.xpose.msra.mxu0 0.0
    %3815 = vmatprep.subr.mxu0 0.0
    %3816 = vmatpush1.xpose.msra.mxu0 0.0
    %3817 = vmatprep.subr.mxu0 0.0
    %3818 = vmatpush1.xpose.msra.mxu0 0.0
    %3819 = vmatprep.subr.mxu0 0.0
    %3820 = vmatpush1.xpose.msra.mxu0 0.0
    %3821 = vmatprep.subr.mxu0 0.0
    %3822 = vmatpush1.xpose.msra.mxu0 0.0
    %3823 = vmatprep.subr.mxu0 0.0
    %3824 = vmatpush1.xpose.msra.mxu0 0.0
    %3825 = vmatprep.subr.mxu0 0.0
    %3826 = vmatpush1.xpose.msra.mxu0 0.0
    %3827 = vmatprep.subr.mxu0 0.0
    %3828 = vmatpush1.xpose.msra.mxu0 0.0
    %3829 = vmatprep.subr.mxu0 0.0
    %3830 = vmatpush1.xpose.msra.mxu0 0.0
    %3831 = vmatprep.subr.mxu0 0.0
    %3832 = vmatpush1.xpose.msra.mxu0 0.0
    %3833 = vmatprep.subr.mxu0 0.0
    %3834 = vmatpush1.xpose.msra.mxu0 0.0
    %3835 = vmatprep.subr.mxu0 0.0
    %3836 = vmatpush1.xpose.msra.mxu0 0.0
    %3837 = vmatprep.subr.mxu0 0.0
    %3838 = vmatpush1.xpose.msra.mxu0 0.0
    %3839 = vmatprep.subr.mxu0 0.0
    %3840 = vmatpush1.xpose.msra.mxu0 0.0
    %3841 = vmatprep.subr.mxu0 0.0
    %3842 = vmatpush1.xpose.msra.mxu0 0.0
    %3843 = vmatprep.subr.mxu0 0.0
    %3844 = vmatpush1.xpose.msra.mxu0 0.0
    %3845 = vmatprep.subr.mxu0 0.0
    %3846 = vmatpush1.xpose.msra.mxu0 0.0
    %3847 = vmatprep.subr.mxu0 0.0
    %3848 = vmatpush1.xpose.msra.mxu0 0.0
    %3849 = vmatprep.mubr.f32.mxu0 0.0
    %v3850 = vand.u32 %v3599, 4294901760
    %v3851 = vsub.f32 %v3599, %v3850
    %3852 = vmatmul.mubr.f32.gmra.mrb[0].mxu0 %v3851
    %v3853 = vpop.f32.mrb[0].mxu0
    %v3854 = vadd.f32 %v3772, %v3853
    %v3855 = vpop.f32.mrb[0].mxu0
    %3856 = vmatprep.mubr.f32.mxu0 0.0
    %v3857 = vand.u32 %v3601, 4294901760
    %v3858 = vsub.f32 %v3601, %v3857
    %3859 = vmatmul.mubr.f32.gmra.mrb[0].mxu0 %v3858
    %v3860 = vpop.f32.mrb[0].mxu0
    %v3861 = vadd.f32 %v3778, %v3860
    %v3862 = vpop.f32.mrb[0].mxu0
    %3863 = vdwg.mxu0
    %3864 = vmatprep.subr.mxu0 0.0
    %v3865 = vand.u32 %v3603, 4294901760
    %3866 = vmatpush1.xpose.msra.mxu0 %v3865
    %3867 = vmatprep.subr.mxu0 0.0
    %v3868 = vand.u32 %v3605, 4294901760
    %3869 = vmatpush1.xpose.msra.mxu0 %v3868
    %3870 = vmatprep.subr.mxu0 0.0
    %3871 = vmatpush1.xpose.msra.mxu0 0.0
    %3872 = vmatprep.subr.mxu0 0.0
    %3873 = vmatpush1.xpose.msra.mxu0 0.0
    %3874 = vmatprep.subr.mxu0 0.0
    %3875 = vmatpush1.xpose.msra.mxu0 0.0
    %3876 = vmatprep.subr.mxu0 0.0
    %3877 = vmatpush1.xpose.msra.mxu0 0.0
    %3878 = vmatprep.subr.mxu0 0.0
    %3879 = vmatpush1.xpose.msra.mxu0 0.0
    %3880 = vmatprep.subr.mxu0 0.0
    %3881 = vmatpush1.xpose.msra.mxu0 0.0
    %3882 = vmatprep.subr.mxu0 0.0
    %3883 = vmatpush1.xpose.msra.mxu0 0.0
    %3884 = vmatprep.subr.mxu0 0.0
    %3885 = vmatpush1.xpose.msra.mxu0 0.0
    %3886 = vmatprep.subr.mxu0 0.0
    %3887 = vmatpush1.xpose.msra.mxu0 0.0
    %3888 = vmatprep.subr.mxu0 0.0
    %3889 = vmatpush1.xpose.msra.mxu0 0.0
    %3890 = vmatprep.subr.mxu0 0.0
    %3891 = vmatpush1.xpose.msra.mxu0 0.0
    %3892 = vmatprep.subr.mxu0 0.0
    %3893 = vmatpush1.xpose.msra.mxu0 0.0
    %3894 = vmatprep.subr.mxu0 0.0
    %3895 = vmatpush1.xpose.msra.mxu0 0.0
    %3896 = vmatprep.subr.mxu0 0.0
    %3897 = vmatpush1.xpose.msra.mxu0 0.0
    %3898 = vmatprep.subr.mxu0 0.0
    %3899 = vmatpush1.xpose.msra.mxu0 0.0
    %3900 = vmatprep.subr.mxu0 0.0
    %3901 = vmatpush1.xpose.msra.mxu0 0.0
    %3902 = vmatprep.subr.mxu0 0.0
    %3903 = vmatpush1.xpose.msra.mxu0 0.0
    %3904 = vmatprep.subr.mxu0 0.0
    %3905 = vmatpush1.xpose.msra.mxu0 0.0
    %3906 = vmatprep.subr.mxu0 0.0
    %3907 = vmatpush1.xpose.msra.mxu0 0.0
    %3908 = vmatprep.subr.mxu0 0.0
    %3909 = vmatpush1.xpose.msra.mxu0 0.0
    %3910 = vmatprep.subr.mxu0 0.0
    %3911 = vmatpush1.xpose.msra.mxu0 0.0
    %3912 = vmatprep.subr.mxu0 0.0
    %3913 = vmatpush1.xpose.msra.mxu0 0.0
    %3914 = vmatprep.subr.mxu0 0.0
    %3915 = vmatpush1.xpose.msra.mxu0 0.0
    %3916 = vmatprep.subr.mxu0 0.0
    %3917 = vmatpush1.xpose.msra.mxu0 0.0
    %3918 = vmatprep.subr.mxu0 0.0
    %3919 = vmatpush1.xpose.msra.mxu0 0.0
    %3920 = vmatprep.subr.mxu0 0.0
    %3921 = vmatpush1.xpose.msra.mxu0 0.0
    %3922 = vmatprep.subr.mxu0 0.0
    %3923 = vmatpush1.xpose.msra.mxu0 0.0
    %3924 = vmatprep.subr.mxu0 0.0
    %3925 = vmatpush1.xpose.msra.mxu0 0.0
    %3926 = vmatprep.subr.mxu0 0.0
    %3927 = vmatpush1.xpose.msra.mxu0 0.0
    %3928 = vmatprep.subr.mxu0 0.0
    %3929 = vmatpush1.xpose.msra.mxu0 0.0
    %3930 = vmatprep.mubr.f32.mxu0 0.0
    %v3931 = vand.u32 %v3599, 4294901760
    %v3932 = vsub.f32 %v3599, %v3931
    %v3933 = vand.u32 %v3932, 4294901760
    %3934 = vmatmul.mubr.f32.gmra.mrb[0].mxu0 %v3933
    %v3935 = vpop.f32.mrb[0].mxu0
    %v3936 = vadd.f32 %v3854, %v3935
    %v3937 = vpop.f32.mrb[0].mxu0
    %3938 = vmatprep.mubr.f32.mxu0 0.0
    %v3939 = vand.u32 %v3601, 4294901760
    %v3940 = vsub.f32 %v3601, %v3939
    %v3941 = vand.u32 %v3940, 4294901760
    %3942 = vmatmul.mubr.f32.gmra.mrb[0].mxu0 %v3941
    %v3943 = vpop.f32.mrb[0].mxu0
    %v3944 = vadd.f32 %v3861, %v3943
    %v3945 = vpop.f32.mrb[0].mxu0
    %3946 = vdwg.mxu0
    %3947 = vmatprep.subr.mxu0 0.0
    %v3948 = vand.u32 %v3603, 4294901760
    %v3949 = vsub.f32 %v3603, %v3948
    %v3950 = vand.u32 %v3949, 4294901760
    %3951 = vmatpush1.xpose.msra.mxu0 %v3950
    %3952 = vmatprep.subr.mxu0 0.0
    %v3953 = vand.u32 %v3605, 4294901760
    %v3954 = vsub.f32 %v3605, %v3953
    %v3955 = vand.u32 %v3954, 4294901760
    %3956 = vmatpush1.xpose.msra.mxu0 %v3955
    %3957 = vmatprep.subr.mxu0 0.0
    %3958 = vmatpush1.xpose.msra.mxu0 0.0
    %3959 = vmatprep.subr.mxu0 0.0
    %3960 = vmatpush1.xpose.msra.mxu0 0.0
    %3961 = vmatprep.subr.mxu0 0.0
    %3962 = vmatpush1.xpose.msra.mxu0 0.0
    %3963 = vmatprep.subr.mxu0 0.0
    %3964 = vmatpush1.xpose.msra.mxu0 0.0
    %3965 = vmatprep.subr.mxu0 0.0
    %3966 = vmatpush1.xpose.msra.mxu0 0.0
    %3967 = vmatprep.subr.mxu0 0.0
    %3968 = vmatpush1.xpose.msra.mxu0 0.0
    %3969 = vmatprep.subr.mxu0 0.0
    %3970 = vmatpush1.xpose.msra.mxu0 0.0
    %3971 = vmatprep.subr.mxu0 0.0
    %3972 = vmatpush1.xpose.msra.mxu0 0.0
    %3973 = vmatprep.subr.mxu0 0.0
    %3974 = vmatpush1.xpose.msra.mxu0 0.0
    %3975 = vmatprep.subr.mxu0 0.0
    %3976 = vmatpush1.xpose.msra.mxu0 0.0
    %3977 = vmatprep.subr.mxu0 0.0
    %3978 = vmatpush1.xpose.msra.mxu0 0.0
    %3979 = vmatprep.subr.mxu0 0.0
    %3980 = vmatpush1.xpose.msra.mxu0 0.0
    %3981 = vmatprep.subr.mxu0 0.0
    %3982 = vmatpush1.xpose.msra.mxu0 0.0
    %3983 = vmatprep.subr.mxu0 0.0
    %3984 = vmatpush1.xpose.msra.mxu0 0.0
    %3985 = vmatprep.subr.mxu0 0.0
    %3986 = vmatpush1.xpose.msra.mxu0 0.0
    %3987 = vmatprep.subr.mxu0 0.0
    %3988 = vmatpush1.xpose.msra.mxu0 0.0
    %3989 = vmatprep.subr.mxu0 0.0
    %3990 = vmatpush1.xpose.msra.mxu0 0.0
    %3991 = vmatprep.subr.mxu0 0.0
    %3992 = vmatpush1.xpose.msra.mxu0 0.0
    %3993 = vmatprep.subr.mxu0 0.0
    %3994 = vmatpush1.xpose.msra.mxu0 0.0
    %3995 = vmatprep.subr.mxu0 0.0
    %3996 = vmatpush1.xpose.msra.mxu0 0.0
    %3997 = vmatprep.subr.mxu0 0.0
    %3998 = vmatpush1.xpose.msra.mxu0 0.0
    %3999 = vmatprep.subr.mxu0 0.0
    %4000 = vmatpush1.xpose.msra.mxu0 0.0
    %4001 = vmatprep.subr.mxu0 0.0
    %4002 = vmatpush1.xpose.msra.mxu0 0.0
    %4003 = vmatprep.subr.mxu0 0.0
    %4004 = vmatpush1.xpose.msra.mxu0 0.0
    %4005 = vmatprep.subr.mxu0 0.0
    %4006 = vmatpush1.xpose.msra.mxu0 0.0
    %4007 = vmatprep.subr.mxu0 0.0
    %4008 = vmatpush1.xpose.msra.mxu0 0.0
    %4009 = vmatprep.subr.mxu0 0.0
    %4010 = vmatpush1.xpose.msra.mxu0 0.0
    %4011 = vmatprep.subr.mxu0 0.0
    %4012 = vmatpush1.xpose.msra.mxu0 0.0
    %4013 = vmatprep.subr.mxu0 0.0
    %4014 = vmatpush1.xpose.msra.mxu0 0.0
    %4015 = vmatprep.subr.mxu0 0.0
    %4016 = vmatpush1.xpose.msra.mxu0 0.0
    %4017 = vmatprep.mubr.f32.mxu0 0.0
    %v4018 = vand.u32 %v3599, 4294901760
    %4019 = vmatmul.mubr.f32.gmra.mrb[0].mxu0 %v4018
    %v4020 = vpop.f32.mrb[0].mxu0
    %v4021 = vadd.f32 %v3936, %v4020
    %v4022 = vpop.f32.mrb[0].mxu0
    %4023 = vmatprep.mubr.f32.mxu0 0.0
    %v4024 = vand.u32 %v3601, 4294901760
    %4025 = vmatmul.mubr.f32.gmra.mrb[0].mxu0 %v4024
    %v4026 = vpop.f32.mrb[0].mxu0
    %v4027 = vadd.f32 %v3944, %v4026
    %v4028 = vpop.f32.mrb[0].mxu0
    %4029 = vdwg.mxu0
    %4030 = vmatprep.subr.mxu0 0.0
    %v4031 = vand.u32 %v3603, 4294901760
    %4032 = vmatpush1.xpose.msra.mxu0 %v4031
    %4033 = vmatprep.subr.mxu0 0.0
    %v4034 = vand.u32 %v3605, 4294901760
    %4035 = vmatpush1.xpose.msra.mxu0 %v4034
    %4036 = vmatprep.subr.mxu0 0.0
    %4037 = vmatpush1.xpose.msra.mxu0 0.0
    %4038 = vmatprep.subr.mxu0 0.0
    %4039 = vmatpush1.xpose.msra.mxu0 0.0
    %4040 = vmatprep.subr.mxu0 0.0
    %4041 = vmatpush1.xpose.msra.mxu0 0.0
    %4042 = vmatprep.subr.mxu0 0.0
    %4043 = vmatpush1.xpose.msra.mxu0 0.0
    %4044 = vmatprep.subr.mxu0 0.0
    %4045 = vmatpush1.xpose.msra.mxu0 0.0
    %4046 = vmatprep.subr.mxu0 0.0
    %4047 = vmatpush1.xpose.msra.mxu0 0.0
    %4048 = vmatprep.subr.mxu0 0.0
    %4049 = vmatpush1.xpose.msra.mxu0 0.0
    %4050 = vmatprep.subr.mxu0 0.0
    %4051 = vmatpush1.xpose.msra.mxu0 0.0
    %4052 = vmatprep.subr.mxu0 0.0
    %4053 = vmatpush1.xpose.msra.mxu0 0.0
    %4054 = vmatprep.subr.mxu0 0.0
    %4055 = vmatpush1.xpose.msra.mxu0 0.0
    %4056 = vmatprep.subr.mxu0 0.0
    %4057 = vmatpush1.xpose.msra.mxu0 0.0
    %4058 = vmatprep.subr.mxu0 0.0
    %4059 = vmatpush1.xpose.msra.mxu0 0.0
    %4060 = vmatprep.subr.mxu0 0.0
    %4061 = vmatpush1.xpose.msra.mxu0 0.0
    %4062 = vmatprep.subr.mxu0 0.0
    %4063 = vmatpush1.xpose.msra.mxu0 0.0
    %4064 = vmatprep.subr.mxu0 0.0
    %4065 = vmatpush1.xpose.msra.mxu0 0.0
    %4066 = vmatprep.subr.mxu0 0.0
    %4067 = vmatpush1.xpose.msra.mxu0 0.0
    %4068 = vmatprep.subr.mxu0 0.0
    %4069 = vmatpush1.xpose.msra.mxu0 0.0
    %4070 = vmatprep.subr.mxu0 0.0
    %4071 = vmatpush1.xpose.msra.mxu0 0.0
    %4072 = vmatprep.subr.mxu0 0.0
    %4073 = vmatpush1.xpose.msra.mxu0 0.0
    %4074 = vmatprep.subr.mxu0 0.0
    %4075 = vmatpush1.xpose.msra.mxu0 0.0
    %4076 = vmatprep.subr.mxu0 0.0
    %4077 = vmatpush1.xpose.msra.mxu0 0.0
    %4078 = vmatprep.subr.mxu0 0.0
    %4079 = vmatpush1.xpose.msra.mxu0 0.0
    %4080 = vmatprep.subr.mxu0 0.0
    %4081 = vmatpush1.xpose.msra.mxu0 0.0
    %4082 = vmatprep.subr.mxu0 0.0
    %4083 = vmatpush1.xpose.msra.mxu0 0.0
    %4084 = vmatprep.subr.mxu0 0.0
    %4085 = vmatpush1.xpose.msra.mxu0 0.0
    %4086 = vmatprep.subr.mxu0 0.0
    %4087 = vmatpush1.xpose.msra.mxu0 0.0
    %4088 = vmatprep.subr.mxu0 0.0
    %4089 = vmatpush1.xpose.msra.mxu0 0.0
    %4090 = vmatprep.subr.mxu0 0.0
    %4091 = vmatpush1.xpose.msra.mxu0 0.0
    %4092 = vmatprep.subr.mxu0 0.0
    %4093 = vmatpush1.xpose.msra.mxu0 0.0
    %4094 = vmatprep.subr.mxu0 0.0
    %4095 = vmatpush1.xpose.msra.mxu0 0.0
    %4096 = vmatprep.mubr.f32.mxu0 0.0
    %v4097 = vand.u32 %v3599, 4294901760
    %4098 = vmatmul.mubr.f32.gmra.mrb[0].mxu0 %v4097
    %v4099 = vpop.f32.mrb[0].mxu0
    %v4100 = vadd.f32 %v4021, %v4099
    %v4101 = vpop.f32.mrb[0].mxu0
    %4102 = vmatprep.mubr.f32.mxu0 0.0
    %v4103 = vand.u32 %v3601, 4294901760
    %4104 = vmatmul.mubr.f32.gmra.mrb[0].mxu0 %v4103
    %v4105 = vpop.f32.mrb[0].mxu0
    %v4106 = vadd.f32 %v4027, %v4105
    %v4107 = vpop.f32.mrb[0].mxu0
    %4108 = vdwg.mxu0
    %v4109 = vmul.f32 %v4100, 0.17677669
    %v4110 = vmul.f32 %v4106, 0.17677669
    %v4111 = vsel %vm3060, %v4109, -inf
    %4112 = vmax.xlane.f32.xlu0 %v4111
    %v4113 = vpop.xlane.xlu0 %4112
    %v4114 = vsel %vm3060, %v4110, -inf
    %4115 = vmax.xlane.f32.xlu0 %v4114
    %v4116 = vpop.xlane.xlu0 %4115
    %v4117 = vsub.f32 %v4109, %v4113
    %v4118 = vsub.f32 %v4110, %v4116
    %v4119 = vmul.f32 %v4117, 1.442695
    %v4120 = vpow.pop %v4119
    %v4121 = vmul.f32 %v4118, 1.442695
    %v4122 = vpow.pop %v4121
    %v4123 = vsel %vm3060, %v4120, 0.0
    %4124 = vadd.xlane.f32.xlu0 %v4123
    %v4125 = vpop.xlane.xlu0 %4124
    %v4126 = vsel %vm3060, %v4122, 0.0
    %4127 = vadd.xlane.f32.xlu0 %v4126
    %v4128 = vpop.xlane.xlu0 %4127
    %v4129 = vrcp.pop %v4125
    %v4130 = vmul.f32 %v4120, %v4129
    %v4131 = vrcp.pop %v4128
    %v4132 = vmul.f32 %v4122, %v4131
    %4135 = vrot.lane.b32.xlu0 %v2534, 96
    %v4136 = vpop.permute.xlu0 %4135
    %4137 = vrot.lane.b32.xlu0 %v2540, 96
    %v4138 = vpop.permute.xlu0 %4137
    %v4142 = vsel %vm3060, %v4130, 0
    %v4145 = vsel %vm3060, %v4132, 0
    %4147 = vmatprep.subr.mxu0 0.0
    %v4148 = vand.u32 %v4136, 4294901760
    %4149 = vmatpush1.msra.mxu0 %v4148
    %4150 = vmatprep.subr.mxu0 0.0
    %v4151 = vand.u32 %v4138, 4294901760
    %4152 = vmatpush1.msra.mxu0 %v4151
    %4153 = vmatprep.subr.mxu0 0.0
    %4154 = vmatpush1.msra.mxu0 0.0
    %4155 = vmatprep.subr.mxu0 0.0
    %4156 = vmatpush1.msra.mxu0 0.0
    %4157 = vmatprep.subr.mxu0 0.0
    %4158 = vmatpush1.msra.mxu0 0.0
    %4159 = vmatprep.subr.mxu0 0.0
    %4160 = vmatpush1.msra.mxu0 0.0
    %4161 = vmatprep.subr.mxu0 0.0
    %4162 = vmatpush1.msra.mxu0 0.0
    %4163 = vmatprep.subr.mxu0 0.0
    %4164 = vmatpush1.msra.mxu0 0.0
    %4165 = vmatprep.subr.mxu0 0.0
    %4166 = vmatpush1.msra.mxu0 0.0
    %4167 = vmatprep.subr.mxu0 0.0
    %4168 = vmatpush1.msra.mxu0 0.0
    %4169 = vmatprep.subr.mxu0 0.0
    %4170 = vmatpush1.msra.mxu0 0.0
    %4171 = vmatprep.subr.mxu0 0.0
    %4172 = vmatpush1.msra.mxu0 0.0
    %4173 = vmatprep.subr.mxu0 0.0
    %4174 = vmatpush1.msra.mxu0 0.0
    %4175 = vmatprep.subr.mxu0 0.0
    %4176 = vmatpush1.msra.mxu0 0.0
    %4177 = vmatprep.subr.mxu0 0.0
    %4178 = vmatpush1.msra.mxu0 0.0
    %4179 = vmatprep.subr.mxu0 0.0
    %4180 = vmatpush1.msra.mxu0 0.0
    %4181 = vmatprep.subr.mxu0 0.0
    %4182 = vmatpush1.msra.mxu0 0.0
    %4183 = vmatprep.subr.mxu0 0.0
    %4184 = vmatpush1.msra.mxu0 0.0
    %4185 = vmatprep.subr.mxu0 0.0
    %4186 = vmatpush1.msra.mxu0 0.0
    %4187 = vmatprep.subr.mxu0 0.0
    %4188 = vmatpush1.msra.mxu0 0.0
    %4189 = vmatprep.subr.mxu0 0.0
    %4190 = vmatpush1.msra.mxu0 0.0
    %4191 = vmatprep.subr.mxu0 0.0
    %4192 = vmatpush1.msra.mxu0 0.0
    %4193 = vmatprep.subr.mxu0 0.0
    %4194 = vmatpush1.msra.mxu0 0.0
    %4195 = vmatprep.subr.mxu0 0.0
    %4196 = vmatpush1.msra.mxu0 0.0
    %4197 = vmatprep.subr.mxu0 0.0
    %4198 = vmatpush1.msra.mxu0 0.0
    %4199 = vmatprep.subr.mxu0 0.0
    %4200 = vmatpush1.msra.mxu0 0.0
    %4201 = vmatprep.subr.mxu0 0.0
    %4202 = vmatpush1.msra.mxu0 0.0
    %4203 = vmatprep.subr.mxu0 0.0
    %4204 = vmatpush1.msra.mxu0 0.0
    %4205 = vmatprep.subr.mxu0 0.0
    %4206 = vmatpush1.msra.mxu0 0.0
    %4207 = vmatprep.subr.mxu0 0.0
    %4208 = vmatpush1.msra.mxu0 0.0
    %4209 = vmatprep.subr.mxu0 0.0
    %4210 = vmatpush1.msra.mxu0 0.0
    %4211 = vmatprep.subr.mxu0 0.0
    %4212 = vmatpush1.msra.mxu0 0.0
    %4213 = vmatprep.mubr.f32.mxu0 0.0
    %v4214 = vand.u32 %v4142, 4294901760
    %v4215 = vsub.f32 %v4142, %v4214
    %v4216 = vand.u32 %v4215, 4294901760
    %v4217 = vsub.f32 %v4215, %v4216
    %v4218 = vand.u32 %v4217, 4294901760
    %4219 = vmatmul.mubr.f32.gmra.mrb[0].mxu0 %v4218
    %v4220 = vpop.f32.mrb[0].mxu0
    %v4221 = vadd.f32 0.0, %v4220
    %v4222 = vpop.f32.mrb[0].mxu0
    %4223 = vmatprep.mubr.f32.mxu0 0.0
    %v4224 = vand.u32 %v4145, 4294901760
    %v4225 = vsub.f32 %v4145, %v4224
    %v4226 = vand.u32 %v4225, 4294901760
    %v4227 = vsub.f32 %v4225, %v4226
    %v4228 = vand.u32 %v4227, 4294901760
    %4229 = vmatmul.mubr.f32.gmra.mrb[0].mxu0 %v4228
    %v4230 = vpop.f32.mrb[0].mxu0
    %v4231 = vadd.f32 0.0, %v4230
    %v4232 = vpop.f32.mrb[0].mxu0
    %4233 = vdwg.mxu0
    %4234 = vmatprep.subr.mxu0 0.0
    %v4235 = vand.u32 %v4136, 4294901760
    %v4236 = vsub.f32 %v4136, %v4235
    %v4237 = vand.u32 %v4236, 4294901760
    %v4238 = vsub.f32 %v4236, %v4237
    %v4239 = vand.u32 %v4238, 4294901760
    %4240 = vmatpush1.msra.mxu0 %v4239
    %4241 = vmatprep.subr.mxu0 0.0
    %v4242 = vand.u32 %v4138, 4294901760
    %v4243 = vsub.f32 %v4138, %v4242
    %v4244 = vand.u32 %v4243, 4294901760
    %v4245 = vsub.f32 %v4243, %v4244
    %v4246 = vand.u32 %v4245, 4294901760
    %4247 = vmatpush1.msra.mxu0 %v4246
    %4248 = vmatprep.subr.mxu0 0.0
    %4249 = vmatpush1.msra.mxu0 0.0
    %4250 = vmatprep.subr.mxu0 0.0
    %4251 = vmatpush1.msra.mxu0 0.0
    %4252 = vmatprep.subr.mxu0 0.0
    %4253 = vmatpush1.msra.mxu0 0.0
    %4254 = vmatprep.subr.mxu0 0.0
    %4255 = vmatpush1.msra.mxu0 0.0
    %4256 = vmatprep.subr.mxu0 0.0
    %4257 = vmatpush1.msra.mxu0 0.0
    %4258 = vmatprep.subr.mxu0 0.0
    %4259 = vmatpush1.msra.mxu0 0.0
    %4260 = vmatprep.subr.mxu0 0.0
    %4261 = vmatpush1.msra.mxu0 0.0
    %4262 = vmatprep.subr.mxu0 0.0
    %4263 = vmatpush1.msra.mxu0 0.0
    %4264 = vmatprep.subr.mxu0 0.0
    %4265 = vmatpush1.msra.mxu0 0.0
    %4266 = vmatprep.subr.mxu0 0.0
    %4267 = vmatpush1.msra.mxu0 0.0
    %4268 = vmatprep.subr.mxu0 0.0
    %4269 = vmatpush1.msra.mxu0 0.0
    %4270 = vmatprep.subr.mxu0 0.0
    %4271 = vmatpush1.msra.mxu0 0.0
    %4272 = vmatprep.subr.mxu0 0.0
    %4273 = vmatpush1.msra.mxu0 0.0
    %4274 = vmatprep.subr.mxu0 0.0
    %4275 = vmatpush1.msra.mxu0 0.0
    %4276 = vmatprep.subr.mxu0 0.0
    %4277 = vmatpush1.msra.mxu0 0.0
    %4278 = vmatprep.subr.mxu0 0.0
    %4279 = vmatpush1.msra.mxu0 0.0
    %4280 = vmatprep.subr.mxu0 0.0
    %4281 = vmatpush1.msra.mxu0 0.0
    %4282 = vmatprep.subr.mxu0 0.0
    %4283 = vmatpush1.msra.mxu0 0.0
    %4284 = vmatprep.subr.mxu0 0.0
    %4285 = vmatpush1.msra.mxu0 0.0
    %4286 = vmatprep.subr.mxu0 0.0
    %4287 = vmatpush1.msra.mxu0 0.0
    %4288 = vmatprep.subr.mxu0 0.0
    %4289 = vmatpush1.msra.mxu0 0.0
    %4290 = vmatprep.subr.mxu0 0.0
    %4291 = vmatpush1.msra.mxu0 0.0
    %4292 = vmatprep.subr.mxu0 0.0
    %4293 = vmatpush1.msra.mxu0 0.0
    %4294 = vmatprep.subr.mxu0 0.0
    %4295 = vmatpush1.msra.mxu0 0.0
    %4296 = vmatprep.subr.mxu0 0.0
    %4297 = vmatpush1.msra.mxu0 0.0
    %4298 = vmatprep.subr.mxu0 0.0
    %4299 = vmatpush1.msra.mxu0 0.0
    %4300 = vmatprep.subr.mxu0 0.0
    %4301 = vmatpush1.msra.mxu0 0.0
    %4302 = vmatprep.subr.mxu0 0.0
    %4303 = vmatpush1.msra.mxu0 0.0
    %4304 = vmatprep.subr.mxu0 0.0
    %4305 = vmatpush1.msra.mxu0 0.0
    %4306 = vmatprep.subr.mxu0 0.0
    %4307 = vmatpush1.msra.mxu0 0.0
    %4308 = vmatprep.mubr.f32.mxu0 0.0
    %v4309 = vand.u32 %v4142, 4294901760
    %4310 = vmatmul.mubr.f32.gmra.mrb[0].mxu0 %v4309
    %v4311 = vpop.f32.mrb[0].mxu0
    %v4312 = vadd.f32 %v4221, %v4311
    %v4313 = vpop.f32.mrb[0].mxu0
    %4314 = vmatprep.mubr.f32.mxu0 0.0
    %v4315 = vand.u32 %v4145, 4294901760
    %4316 = vmatmul.mubr.f32.gmra.mrb[0].mxu0 %v4315
    %v4317 = vpop.f32.mrb[0].mxu0
    %v4318 = vadd.f32 %v4231, %v4317
    %v4319 = vpop.f32.mrb[0].mxu0
    %4320 = vdwg.mxu0
    %4321 = vmatprep.subr.mxu0 0.0
    %v4322 = vand.u32 %v4136, 4294901760
    %v4323 = vsub.f32 %v4136, %v4322
    %4324 = vmatpush1.msra.mxu0 %v4323
    %4325 = vmatprep.subr.mxu0 0.0
    %v4326 = vand.u32 %v4138, 4294901760
    %v4327 = vsub.f32 %v4138, %v4326
    %4328 = vmatpush1.msra.mxu0 %v4327
    %4329 = vmatprep.subr.mxu0 0.0
    %4330 = vmatpush1.msra.mxu0 0.0
    %4331 = vmatprep.subr.mxu0 0.0
    %4332 = vmatpush1.msra.mxu0 0.0
    %4333 = vmatprep.subr.mxu0 0.0
    %4334 = vmatpush1.msra.mxu0 0.0
    %4335 = vmatprep.subr.mxu0 0.0
    %4336 = vmatpush1.msra.mxu0 0.0
    %4337 = vmatprep.subr.mxu0 0.0
    %4338 = vmatpush1.msra.mxu0 0.0
    %4339 = vmatprep.subr.mxu0 0.0
    %4340 = vmatpush1.msra.mxu0 0.0
    %4341 = vmatprep.subr.mxu0 0.0
    %4342 = vmatpush1.msra.mxu0 0.0
    %4343 = vmatprep.subr.mxu0 0.0
    %4344 = vmatpush1.msra.mxu0 0.0
    %4345 = vmatprep.subr.mxu0 0.0
    %4346 = vmatpush1.msra.mxu0 0.0
    %4347 = vmatprep.subr.mxu0 0.0
    %4348 = vmatpush1.msra.mxu0 0.0
    %4349 = vmatprep.subr.mxu0 0.0
    %4350 = vmatpush1.msra.mxu0 0.0
    %4351 = vmatprep.subr.mxu0 0.0
    %4352 = vmatpush1.msra.mxu0 0.0
    %4353 = vmatprep.subr.mxu0 0.0
    %4354 = vmatpush1.msra.mxu0 0.0
    %4355 = vmatprep.subr.mxu0 0.0
    %4356 = vmatpush1.msra.mxu0 0.0
    %4357 = vmatprep.subr.mxu0 0.0
    %4358 = vmatpush1.msra.mxu0 0.0
    %4359 = vmatprep.subr.mxu0 0.0
    %4360 = vmatpush1.msra.mxu0 0.0
    %4361 = vmatprep.subr.mxu0 0.0
    %4362 = vmatpush1.msra.mxu0 0.0
    %4363 = vmatprep.subr.mxu0 0.0
    %4364 = vmatpush1.msra.mxu0 0.0
    %4365 = vmatprep.subr.mxu0 0.0
    %4366 = vmatpush1.msra.mxu0 0.0
    %4367 = vmatprep.subr.mxu0 0.0
    %4368 = vmatpush1.msra.mxu0 0.0
    %4369 = vmatprep.subr.mxu0 0.0
    %4370 = vmatpush1.msra.mxu0 0.0
    %4371 = vmatprep.subr.mxu0 0.0
    %4372 = vmatpush1.msra.mxu0 0.0
    %4373 = vmatprep.subr.mxu0 0.0
    %4374 = vmatpush1.msra.mxu0 0.0
    %4375 = vmatprep.subr.mxu0 0.0
    %4376 = vmatpush1.msra.mxu0 0.0
    %4377 = vmatprep.subr.mxu0 0.0
    %4378 = vmatpush1.msra.mxu0 0.0
    %4379 = vmatprep.subr.mxu0 0.0
    %4380 = vmatpush1.msra.mxu0 0.0
    %4381 = vmatprep.subr.mxu0 0.0
    %4382 = vmatpush1.msra.mxu0 0.0
    %4383 = vmatprep.subr.mxu0 0.0
    %4384 = vmatpush1.msra.mxu0 0.0
    %4385 = vmatprep.subr.mxu0 0.0
    %4386 = vmatpush1.msra.mxu0 0.0
    %4387 = vmatprep.subr.mxu0 0.0
    %4388 = vmatpush1.msra.mxu0 0.0
    %4389 = vmatprep.mubr.f32.mxu0 0.0
    %v4390 = vand.u32 %v4142, 4294901760
    %v4391 = vsub.f32 %v4142, %v4390
    %4392 = vmatmul.mubr.f32.gmra.mrb[0].mxu0 %v4391
    %v4393 = vpop.f32.mrb[0].mxu0
    %v4394 = vadd.f32 %v4312, %v4393
    %v4395 = vpop.f32.mrb[0].mxu0
    %4396 = vmatprep.mubr.f32.mxu0 0.0
    %v4397 = vand.u32 %v4145, 4294901760
    %v4398 = vsub.f32 %v4145, %v4397
    %4399 = vmatmul.mubr.f32.gmra.mrb[0].mxu0 %v4398
    %v4400 = vpop.f32.mrb[0].mxu0
    %v4401 = vadd.f32 %v4318, %v4400
    %v4402 = vpop.f32.mrb[0].mxu0
    %4403 = vdwg.mxu0
    %4404 = vmatprep.subr.mxu0 0.0
    %v4405 = vand.u32 %v4136, 4294901760
    %4406 = vmatpush1.msra.mxu0 %v4405
    %4407 = vmatprep.subr.mxu0 0.0
    %v4408 = vand.u32 %v4138, 4294901760
    %4409 = vmatpush1.msra.mxu0 %v4408
    %4410 = vmatprep.subr.mxu0 0.0
    %4411 = vmatpush1.msra.mxu0 0.0
    %4412 = vmatprep.subr.mxu0 0.0
    %4413 = vmatpush1.msra.mxu0 0.0
    %4414 = vmatprep.subr.mxu0 0.0
    %4415 = vmatpush1.msra.mxu0 0.0
    %4416 = vmatprep.subr.mxu0 0.0
    %4417 = vmatpush1.msra.mxu0 0.0
    %4418 = vmatprep.subr.mxu0 0.0
    %4419 = vmatpush1.msra.mxu0 0.0
    %4420 = vmatprep.subr.mxu0 0.0
    %4421 = vmatpush1.msra.mxu0 0.0
    %4422 = vmatprep.subr.mxu0 0.0
    %4423 = vmatpush1.msra.mxu0 0.0
    %4424 = vmatprep.subr.mxu0 0.0
    %4425 = vmatpush1.msra.mxu0 0.0
    %4426 = vmatprep.subr.mxu0 0.0
    %4427 = vmatpush1.msra.mxu0 0.0
    %4428 = vmatprep.subr.mxu0 0.0
    %4429 = vmatpush1.msra.mxu0 0.0
    %4430 = vmatprep.subr.mxu0 0.0
    %4431 = vmatpush1.msra.mxu0 0.0
    %4432 = vmatprep.subr.mxu0 0.0
    %4433 = vmatpush1.msra.mxu0 0.0
    %4434 = vmatprep.subr.mxu0 0.0
    %4435 = vmatpush1.msra.mxu0 0.0
    %4436 = vmatprep.subr.mxu0 0.0
    %4437 = vmatpush1.msra.mxu0 0.0
    %4438 = vmatprep.subr.mxu0 0.0
    %4439 = vmatpush1.msra.mxu0 0.0
    %4440 = vmatprep.subr.mxu0 0.0
    %4441 = vmatpush1.msra.mxu0 0.0
    %4442 = vmatprep.subr.mxu0 0.0
    %4443 = vmatpush1.msra.mxu0 0.0
    %4444 = vmatprep.subr.mxu0 0.0
    %4445 = vmatpush1.msra.mxu0 0.0
    %4446 = vmatprep.subr.mxu0 0.0
    %4447 = vmatpush1.msra.mxu0 0.0
    %4448 = vmatprep.subr.mxu0 0.0
    %4449 = vmatpush1.msra.mxu0 0.0
    %4450 = vmatprep.subr.mxu0 0.0
    %4451 = vmatpush1.msra.mxu0 0.0
    %4452 = vmatprep.subr.mxu0 0.0
    %4453 = vmatpush1.msra.mxu0 0.0
    %4454 = vmatprep.subr.mxu0 0.0
    %4455 = vmatpush1.msra.mxu0 0.0
    %4456 = vmatprep.subr.mxu0 0.0
    %4457 = vmatpush1.msra.mxu0 0.0
    %4458 = vmatprep.subr.mxu0 0.0
    %4459 = vmatpush1.msra.mxu0 0.0
    %4460 = vmatprep.subr.mxu0 0.0
    %4461 = vmatpush1.msra.mxu0 0.0
    %4462 = vmatprep.subr.mxu0 0.0
    %4463 = vmatpush1.msra.mxu0 0.0
    %4464 = vmatprep.subr.mxu0 0.0
    %4465 = vmatpush1.msra.mxu0 0.0
    %4466 = vmatprep.subr.mxu0 0.0
    %4467 = vmatpush1.msra.mxu0 0.0
    %4468 = vmatprep.subr.mxu0 0.0
    %4469 = vmatpush1.msra.mxu0 0.0
    %4470 = vmatprep.mubr.f32.mxu0 0.0
    %v4471 = vand.u32 %v4142, 4294901760
    %v4472 = vsub.f32 %v4142, %v4471
    %v4473 = vand.u32 %v4472, 4294901760
    %4474 = vmatmul.mubr.f32.gmra.mrb[0].mxu0 %v4473
    %v4475 = vpop.f32.mrb[0].mxu0
    %v4476 = vadd.f32 %v4394, %v4475
    %v4477 = vpop.f32.mrb[0].mxu0
    %4478 = vmatprep.mubr.f32.mxu0 0.0
    %v4479 = vand.u32 %v4145, 4294901760
    %v4480 = vsub.f32 %v4145, %v4479
    %v4481 = vand.u32 %v4480, 4294901760
    %4482 = vmatmul.mubr.f32.gmra.mrb[0].mxu0 %v4481
    %v4483 = vpop.f32.mrb[0].mxu0
    %v4484 = vadd.f32 %v4401, %v4483
    %v4485 = vpop.f32.mrb[0].mxu0
    %4486 = vdwg.mxu0
    %4487 = vmatprep.subr.mxu0 0.0
    %v4488 = vand.u32 %v4136, 4294901760
    %v4489 = vsub.f32 %v4136, %v4488
    %v4490 = vand.u32 %v4489, 4294901760
    %4491 = vmatpush1.msra.mxu0 %v4490
    %4492 = vmatprep.subr.mxu0 0.0
    %v4493 = vand.u32 %v4138, 4294901760
    %v4494 = vsub.f32 %v4138, %v4493
    %v4495 = vand.u32 %v4494, 4294901760
    %4496 = vmatpush1.msra.mxu0 %v4495
    %4497 = vmatprep.subr.mxu0 0.0
    %4498 = vmatpush1.msra.mxu0 0.0
    %4499 = vmatprep.subr.mxu0 0.0
    %4500 = vmatpush1.msra.mxu0 0.0
    %4501 = vmatprep.subr.mxu0 0.0
    %4502 = vmatpush1.msra.mxu0 0.0
    %4503 = vmatprep.subr.mxu0 0.0
    %4504 = vmatpush1.msra.mxu0 0.0
    %4505 = vmatprep.subr.mxu0 0.0
    %4506 = vmatpush1.msra.mxu0 0.0
    %4507 = vmatprep.subr.mxu0 0.0
    %4508 = vmatpush1.msra.mxu0 0.0
    %4509 = vmatprep.subr.mxu0 0.0
    %4510 = vmatpush1.msra.mxu0 0.0
    %4511 = vmatprep.subr.mxu0 0.0
    %4512 = vmatpush1.msra.mxu0 0.0
    %4513 = vmatprep.subr.mxu0 0.0
    %4514 = vmatpush1.msra.mxu0 0.0
    %4515 = vmatprep.subr.mxu0 0.0
    %4516 = vmatpush1.msra.mxu0 0.0
    %4517 = vmatprep.subr.mxu0 0.0
    %4518 = vmatpush1.msra.mxu0 0.0
    %4519 = vmatprep.subr.mxu0 0.0
    %4520 = vmatpush1.msra.mxu0 0.0
    %4521 = vmatprep.subr.mxu0 0.0
    %4522 = vmatpush1.msra.mxu0 0.0
    %4523 = vmatprep.subr.mxu0 0.0
    %4524 = vmatpush1.msra.mxu0 0.0
    %4525 = vmatprep.subr.mxu0 0.0
    %4526 = vmatpush1.msra.mxu0 0.0
    %4527 = vmatprep.subr.mxu0 0.0
    %4528 = vmatpush1.msra.mxu0 0.0
    %4529 = vmatprep.subr.mxu0 0.0
    %4530 = vmatpush1.msra.mxu0 0.0
    %4531 = vmatprep.subr.mxu0 0.0
    %4532 = vmatpush1.msra.mxu0 0.0
    %4533 = vmatprep.subr.mxu0 0.0
    %4534 = vmatpush1.msra.mxu0 0.0
    %4535 = vmatprep.subr.mxu0 0.0
    %4536 = vmatpush1.msra.mxu0 0.0
    %4537 = vmatprep.subr.mxu0 0.0
    %4538 = vmatpush1.msra.mxu0 0.0
    %4539 = vmatprep.subr.mxu0 0.0
    %4540 = vmatpush1.msra.mxu0 0.0
    %4541 = vmatprep.subr.mxu0 0.0
    %4542 = vmatpush1.msra.mxu0 0.0
    %4543 = vmatprep.subr.mxu0 0.0
    %4544 = vmatpush1.msra.mxu0 0.0
    %4545 = vmatprep.subr.mxu0 0.0
    %4546 = vmatpush1.msra.mxu0 0.0
    %4547 = vmatprep.subr.mxu0 0.0
    %4548 = vmatpush1.msra.mxu0 0.0
    %4549 = vmatprep.subr.mxu0 0.0
    %4550 = vmatpush1.msra.mxu0 0.0
    %4551 = vmatprep.subr.mxu0 0.0
    %4552 = vmatpush1.msra.mxu0 0.0
    %4553 = vmatprep.subr.mxu0 0.0
    %4554 = vmatpush1.msra.mxu0 0.0
    %4555 = vmatprep.subr.mxu0 0.0
    %4556 = vmatpush1.msra.mxu0 0.0
    %4557 = vmatprep.mubr.f32.mxu0 0.0
    %v4558 = vand.u32 %v4142, 4294901760
    %4559 = vmatmul.mubr.f32.gmra.mrb[0].mxu0 %v4558
    %v4560 = vpop.f32.mrb[0].mxu0
    %v4561 = vadd.f32 %v4476, %v4560
    %v4562 = vpop.f32.mrb[0].mxu0
    %4563 = vmatprep.mubr.f32.mxu0 0.0
    %v4564 = vand.u32 %v4145, 4294901760
    %4565 = vmatmul.mubr.f32.gmra.mrb[0].mxu0 %v4564
    %v4566 = vpop.f32.mrb[0].mxu0
    %v4567 = vadd.f32 %v4484, %v4566
    %v4568 = vpop.f32.mrb[0].mxu0
    %4569 = vdwg.mxu0
    %4570 = vmatprep.subr.mxu0 0.0
    %v4571 = vand.u32 %v4136, 4294901760
    %4572 = vmatpush1.msra.mxu0 %v4571
    %4573 = vmatprep.subr.mxu0 0.0
    %v4574 = vand.u32 %v4138, 4294901760
    %4575 = vmatpush1.msra.mxu0 %v4574
    %4576 = vmatprep.subr.mxu0 0.0
    %4577 = vmatpush1.msra.mxu0 0.0
    %4578 = vmatprep.subr.mxu0 0.0
    %4579 = vmatpush1.msra.mxu0 0.0
    %4580 = vmatprep.subr.mxu0 0.0
    %4581 = vmatpush1.msra.mxu0 0.0
    %4582 = vmatprep.subr.mxu0 0.0
    %4583 = vmatpush1.msra.mxu0 0.0
    %4584 = vmatprep.subr.mxu0 0.0
    %4585 = vmatpush1.msra.mxu0 0.0
    %4586 = vmatprep.subr.mxu0 0.0
    %4587 = vmatpush1.msra.mxu0 0.0
    %4588 = vmatprep.subr.mxu0 0.0
    %4589 = vmatpush1.msra.mxu0 0.0
    %4590 = vmatprep.subr.mxu0 0.0
    %4591 = vmatpush1.msra.mxu0 0.0
    %4592 = vmatprep.subr.mxu0 0.0
    %4593 = vmatpush1.msra.mxu0 0.0
    %4594 = vmatprep.subr.mxu0 0.0
    %4595 = vmatpush1.msra.mxu0 0.0
    %4596 = vmatprep.subr.mxu0 0.0
    %4597 = vmatpush1.msra.mxu0 0.0
    %4598 = vmatprep.subr.mxu0 0.0
    %4599 = vmatpush1.msra.mxu0 0.0
    %4600 = vmatprep.subr.mxu0 0.0
    %4601 = vmatpush1.msra.mxu0 0.0
    %4602 = vmatprep.subr.mxu0 0.0
    %4603 = vmatpush1.msra.mxu0 0.0
    %4604 = vmatprep.subr.mxu0 0.0
    %4605 = vmatpush1.msra.mxu0 0.0
    %4606 = vmatprep.subr.mxu0 0.0
    %4607 = vmatpush1.msra.mxu0 0.0
    %4608 = vmatprep.subr.mxu0 0.0
    %4609 = vmatpush1.msra.mxu0 0.0
    %4610 = vmatprep.subr.mxu0 0.0
    %4611 = vmatpush1.msra.mxu0 0.0
    %4612 = vmatprep.subr.mxu0 0.0
    %4613 = vmatpush1.msra.mxu0 0.0
    %4614 = vmatprep.subr.mxu0 0.0
    %4615 = vmatpush1.msra.mxu0 0.0
    %4616 = vmatprep.subr.mxu0 0.0
    %4617 = vmatpush1.msra.mxu0 0.0
    %4618 = vmatprep.subr.mxu0 0.0
    %4619 = vmatpush1.msra.mxu0 0.0
    %4620 = vmatprep.subr.mxu0 0.0
    %4621 = vmatpush1.msra.mxu0 0.0
    %4622 = vmatprep.subr.mxu0 0.0
    %4623 = vmatpush1.msra.mxu0 0.0
    %4624 = vmatprep.subr.mxu0 0.0
    %4625 = vmatpush1.msra.mxu0 0.0
    %4626 = vmatprep.subr.mxu0 0.0
    %4627 = vmatpush1.msra.mxu0 0.0
    %4628 = vmatprep.subr.mxu0 0.0
    %4629 = vmatpush1.msra.mxu0 0.0
    %4630 = vmatprep.subr.mxu0 0.0
    %4631 = vmatpush1.msra.mxu0 0.0
    %4632 = vmatprep.subr.mxu0 0.0
    %4633 = vmatpush1.msra.mxu0 0.0
    %4634 = vmatprep.subr.mxu0 0.0
    %4635 = vmatpush1.msra.mxu0 0.0
    %4636 = vmatprep.mubr.f32.mxu0 0.0
    %v4637 = vand.u32 %v4142, 4294901760
    %4638 = vmatmul.mubr.f32.gmra.mrb[0].mxu0 %v4637
    %v4639 = vpop.f32.mrb[0].mxu0
    %v4640 = vadd.f32 %v4561, %v4639
    %v4641 = vpop.f32.mrb[0].mxu0
    %4642 = vmatprep.mubr.f32.mxu0 0.0
    %v4643 = vand.u32 %v4145, 4294901760
    %4644 = vmatmul.mubr.f32.gmra.mrb[0].mxu0 %v4643
    %v4645 = vpop.f32.mrb[0].mxu0
    %v4646 = vadd.f32 %v4567, %v4645
    %v4647 = vpop.f32.mrb[0].mxu0
    %4648 = vdwg.mxu0
    %4651 = vrot.lane.b32.xlu0 %v4640, 32
    %v4652 = vpop.permute.xlu0 %4651
    %4653 = vrot.lane.b32.xlu0 %v4646, 32
    %v4654 = vpop.permute.xlu0 %4653
    %v4657 = vsel %vm2543, %v3582, %v4652
    %v4658 = vsel %vm2543, %v3588, %v4654
    %v4659 = vld [vmem:[#allocation11] sm:$0xff]
    %v4660 = vld [vmem:[#allocation11 + $0x8] sm:$0xff]
    %v4661 = vld [vmem:[#allocation11 + $0x10] sm:$0xff]
    %v4662 = vld [vmem:[#allocation11 + $0x18] sm:$0xff]
    %v4663 = vld [vmem:[#allocation11 + $0x20] sm:$0xff]
    %v4664 = vld [vmem:[#allocation11 + $0x28] sm:$0xff]
    %v4665 = vld [vmem:[#allocation11 + $0x30] sm:$0xff]
    %v4666 = vld [vmem:[#allocation11 + $0x38] sm:$0xff]
    %v4667 = vld [vmem:[%s10] sm:$0x1]
    %v4669 = vlaneseq
    %v4670 = vshrl.u32 %v4669, 7
    %v4671 = vsub.s32 0, %v4670
    %v4672 = vrot.slane %v4667, %v4671
    %v4675 = vsel %vm163, %v4657, 0
    %v4678 = vsel %vm163, %v4658, 0
    %4680 = vmatprep.subr.mxu0 0.0
    %v4681 = vand.u32 %v4659, 4294901760
    %4682 = vmatpush1.msra.mxu0 %v4681
    %4683 = vmatprep.subr.mxu0 0.0
    %v4684 = vand.u32 %v4660, 4294901760
    %4685 = vmatpush1.msra.mxu0 %v4684
    %4686 = vmatprep.subr.mxu0 0.0
    %v4687 = vand.u32 %v4661, 4294901760
    %4688 = vmatpush1.msra.mxu0 %v4687
    %4689 = vmatprep.subr.mxu0 0.0
    %v4690 = vand.u32 %v4662, 4294901760
    %4691 = vmatpush1.msra.mxu0 %v4690
    %4692 = vmatprep.subr.mxu0 0.0
    %v4693 = vand.u32 %v4663, 4294901760
    %4694 = vmatpush1.msra.mxu0 %v4693
    %4695 = vmatprep.subr.mxu0 0.0
    %v4696 = vand.u32 %v4664, 4294901760
    %4697 = vmatpush1.msra.mxu0 %v4696
    %4698 = vmatprep.subr.mxu0 0.0
    %v4699 = vand.u32 %v4665, 4294901760
    %4700 = vmatpush1.msra.mxu0 %v4699
    %4701 = vmatprep.subr.mxu0 0.0
    %v4702 = vand.u32 %v4666, 4294901760
    %4703 = vmatpush1.msra.mxu0 %v4702
    %4704 = vmatprep.subr.mxu0 0.0
    %4705 = vmatpush1.msra.mxu0 0.0
    %4706 = vmatprep.subr.mxu0 0.0
    %4707 = vmatpush1.msra.mxu0 0.0
    %4708 = vmatprep.subr.mxu0 0.0
    %4709 = vmatpush1.msra.mxu0 0.0
    %4710 = vmatprep.subr.mxu0 0.0
    %4711 = vmatpush1.msra.mxu0 0.0
    %4712 = vmatprep.subr.mxu0 0.0
    %4713 = vmatpush1.msra.mxu0 0.0
    %4714 = vmatprep.subr.mxu0 0.0
    %4715 = vmatpush1.msra.mxu0 0.0
    %4716 = vmatprep.subr.mxu0 0.0
    %4717 = vmatpush1.msra.mxu0 0.0
    %4718 = vmatprep.subr.mxu0 0.0
    %4719 = vmatpush1.msra.mxu0 0.0
    %4720 = vmatprep.subr.mxu0 0.0
    %4721 = vmatpush1.msra.mxu0 0.0
    %4722 = vmatprep.subr.mxu0 0.0
    %4723 = vmatpush1.msra.mxu0 0.0
    %4724 = vmatprep.subr.mxu0 0.0
    %4725 = vmatpush1.msra.mxu0 0.0
    %4726 = vmatprep.subr.mxu0 0.0
    %4727 = vmatpush1.msra.mxu0 0.0
    %4728 = vmatprep.subr.mxu0 0.0
    %4729 = vmatpush1.msra.mxu0 0.0
    %4730 = vmatprep.subr.mxu0 0.0
    %4731 = vmatpush1.msra.mxu0 0.0
    %4732 = vmatprep.subr.mxu0 0.0
    %4733 = vmatpush1.msra.mxu0 0.0
    %4734 = vmatprep.subr.mxu0 0.0
    %4735 = vmatpush1.msra.mxu0 0.0
    %4736 = vmatprep.subr.mxu0 0.0
    %4737 = vmatpush1.msra.mxu0 0.0
    %4738 = vmatprep.subr.mxu0 0.0
    %4739 = vmatpush1.msra.mxu0 0.0
    %4740 = vmatprep.subr.mxu0 0.0
    %4741 = vmatpush1.msra.mxu0 0.0
    %4742 = vmatprep.subr.mxu0 0.0
    %4743 = vmatpush1.msra.mxu0 0.0
    %4744 = vmatprep.subr.mxu0 0.0
    %4745 = vmatpush1.msra.mxu0 0.0
    %4746 = vmatprep.subr.mxu0 0.0
    %4747 = vmatpush1.msra.mxu0 0.0
    %4748 = vmatprep.subr.mxu0 0.0
    %4749 = vmatpush1.msra.mxu0 0.0
    %4750 = vmatprep.subr.mxu0 0.0
    %4751 = vmatpush1.msra.mxu0 0.0
    %4752 = vmatprep.mubr.f32.mxu0 0.0
    %v4753 = vand.u32 %v4675, 4294901760
    %v4754 = vsub.f32 %v4675, %v4753
    %v4755 = vand.u32 %v4754, 4294901760
    %v4756 = vsub.f32 %v4754, %v4755
    %v4757 = vand.u32 %v4756, 4294901760
    %4758 = vmatmul.mubr.f32.gmra.mrb[0].mxu0 %v4757
    %v4759 = vpop.f32.mrb[0].mxu0
    %v4760 = vadd.f32 %v4672, %v4759
    %v4761 = vpop.f32.mrb[0].mxu0
    %4762 = vmatprep.mubr.f32.mxu0 0.0
    %v4763 = vand.u32 %v4678, 4294901760
    %v4764 = vsub.f32 %v4678, %v4763
    %v4765 = vand.u32 %v4764, 4294901760
    %v4766 = vsub.f32 %v4764, %v4765
    %v4767 = vand.u32 %v4766, 4294901760
    %4768 = vmatmul.mubr.f32.gmra.mrb[0].mxu0 %v4767
    %v4769 = vpop.f32.mrb[0].mxu0
    %v4770 = vadd.f32 %v4672, %v4769
    %v4771 = vpop.f32.mrb[0].mxu0
    %4772 = vdwg.mxu0
    %4773 = vmatprep.subr.mxu0 0.0
    %v4774 = vand.u32 %v4659, 4294901760
    %v4775 = vsub.f32 %v4659, %v4774
    %v4776 = vand.u32 %v4775, 4294901760
    %v4777 = vsub.f32 %v4775, %v4776
    %v4778 = vand.u32 %v4777, 4294901760
    %4779 = vmatpush1.msra.mxu0 %v4778
    %4780 = vmatprep.subr.mxu0 0.0
    %v4781 = vand.u32 %v4660, 4294901760
    %v4782 = vsub.f32 %v4660, %v4781
    %v4783 = vand.u32 %v4782, 4294901760
    %v4784 = vsub.f32 %v4782, %v4783
    %v4785 = vand.u32 %v4784, 4294901760
    %4786 = vmatpush1.msra.mxu0 %v4785
    %4787 = vmatprep.subr.mxu0 0.0
    %v4788 = vand.u32 %v4661, 4294901760
    %v4789 = vsub.f32 %v4661, %v4788
    %v4790 = vand.u32 %v4789, 4294901760
    %v4791 = vsub.f32 %v4789, %v4790
    %v4792 = vand.u32 %v4791, 4294901760
    %4793 = vmatpush1.msra.mxu0 %v4792
    %4794 = vmatprep.subr.mxu0 0.0
    %v4795 = vand.u32 %v4662, 4294901760
    %v4796 = vsub.f32 %v4662, %v4795
    %v4797 = vand.u32 %v4796, 4294901760
    %v4798 = vsub.f32 %v4796, %v4797
    %v4799 = vand.u32 %v4798, 4294901760
    %4800 = vmatpush1.msra.mxu0 %v4799
    %4801 = vmatprep.subr.mxu0 0.0
    %v4802 = vand.u32 %v4663, 4294901760
    %v4803 = vsub.f32 %v4663, %v4802
    %v4804 = vand.u32 %v4803, 4294901760
    %v4805 = vsub.f32 %v4803, %v4804
    %v4806 = vand.u32 %v4805, 4294901760
    %4807 = vmatpush1.msra.mxu0 %v4806
    %4808 = vmatprep.subr.mxu0 0.0
    %v4809 = vand.u32 %v4664, 4294901760
    %v4810 = vsub.f32 %v4664, %v4809
    %v4811 = vand.u32 %v4810, 4294901760
    %v4812 = vsub.f32 %v4810, %v4811
    %v4813 = vand.u32 %v4812, 4294901760
    %4814 = vmatpush1.msra.mxu0 %v4813
    %4815 = vmatprep.subr.mxu0 0.0
    %v4816 = vand.u32 %v4665, 4294901760
    %v4817 = vsub.f32 %v4665, %v4816
    %v4818 = vand.u32 %v4817, 4294901760
    %v4819 = vsub.f32 %v4817, %v4818
    %v4820 = vand.u32 %v4819, 4294901760
    %4821 = vmatpush1.msra.mxu0 %v4820
    %4822 = vmatprep.subr.mxu0 0.0
    %v4823 = vand.u32 %v4666, 4294901760
    %v4824 = vsub.f32 %v4666, %v4823
    %v4825 = vand.u32 %v4824, 4294901760
    %v4826 = vsub.f32 %v4824, %v4825
    %v4827 = vand.u32 %v4826, 4294901760
    %4828 = vmatpush1.msra.mxu0 %v4827
    %4829 = vmatprep.subr.mxu0 0.0
    %4830 = vmatpush1.msra.mxu0 0.0
    %4831 = vmatprep.subr.mxu0 0.0
    %4832 = vmatpush1.msra.mxu0 0.0
    %4833 = vmatprep.subr.mxu0 0.0
    %4834 = vmatpush1.msra.mxu0 0.0
    %4835 = vmatprep.subr.mxu0 0.0
    %4836 = vmatpush1.msra.mxu0 0.0
    %4837 = vmatprep.subr.mxu0 0.0
    %4838 = vmatpush1.msra.mxu0 0.0
    %4839 = vmatprep.subr.mxu0 0.0
    %4840 = vmatpush1.msra.mxu0 0.0
    %4841 = vmatprep.subr.mxu0 0.0
    %4842 = vmatpush1.msra.mxu0 0.0
    %4843 = vmatprep.subr.mxu0 0.0
    %4844 = vmatpush1.msra.mxu0 0.0
    %4845 = vmatprep.subr.mxu0 0.0
    %4846 = vmatpush1.msra.mxu0 0.0
    %4847 = vmatprep.subr.mxu0 0.0
    %4848 = vmatpush1.msra.mxu0 0.0
    %4849 = vmatprep.subr.mxu0 0.0
    %4850 = vmatpush1.msra.mxu0 0.0
    %4851 = vmatprep.subr.mxu0 0.0
    %4852 = vmatpush1.msra.mxu0 0.0
    %4853 = vmatprep.subr.mxu0 0.0
    %4854 = vmatpush1.msra.mxu0 0.0
    %4855 = vmatprep.subr.mxu0 0.0
    %4856 = vmatpush1.msra.mxu0 0.0
    %4857 = vmatprep.subr.mxu0 0.0
    %4858 = vmatpush1.msra.mxu0 0.0
    %4859 = vmatprep.subr.mxu0 0.0
    %4860 = vmatpush1.msra.mxu0 0.0
    %4861 = vmatprep.subr.mxu0 0.0
    %4862 = vmatpush1.msra.mxu0 0.0
    %4863 = vmatprep.subr.mxu0 0.0
    %4864 = vmatpush1.msra.mxu0 0.0
    %4865 = vmatprep.subr.mxu0 0.0
    %4866 = vmatpush1.msra.mxu0 0.0
    %4867 = vmatprep.subr.mxu0 0.0
    %4868 = vmatpush1.msra.mxu0 0.0
    %4869 = vmatprep.subr.mxu0 0.0
    %4870 = vmatpush1.msra.mxu0 0.0
    %4871 = vmatprep.subr.mxu0 0.0
    %4872 = vmatpush1.msra.mxu0 0.0
    %4873 = vmatprep.subr.mxu0 0.0
    %4874 = vmatpush1.msra.mxu0 0.0
    %4875 = vmatprep.subr.mxu0 0.0
    %4876 = vmatpush1.msra.mxu0 0.0
    %4877 = vmatprep.mubr.f32.mxu0 0.0
    %v4878 = vand.u32 %v4675, 4294901760
    %4879 = vmatmul.mubr.f32.gmra.mrb[0].mxu0 %v4878
    %v4880 = vpop.f32.mrb[0].mxu0
    %v4881 = vadd.f32 %v4760, %v4880
    %v4882 = vpop.f32.mrb[0].mxu0
    %4883 = vmatprep.mubr.f32.mxu0 0.0
    %v4884 = vand.u32 %v4678, 4294901760
    %4885 = vmatmul.mubr.f32.gmra.mrb[0].mxu0 %v4884
    %v4886 = vpop.f32.mrb[0].mxu0
    %v4887 = vadd.f32 %v4770, %v4886
    %v4888 = vpop.f32.mrb[0].mxu0
    %4889 = vdwg.mxu0
    %4890 = vmatprep.subr.mxu0 0.0
    %v4891 = vand.u32 %v4659, 4294901760
    %v4892 = vsub.f32 %v4659, %v4891
    %4893 = vmatpush1.msra.mxu0 %v4892
    %4894 = vmatprep.subr.mxu0 0.0
    %v4895 = vand.u32 %v4660, 4294901760
    %v4896 = vsub.f32 %v4660, %v4895
    %4897 = vmatpush1.msra.mxu0 %v4896
    %4898 = vmatprep.subr.mxu0 0.0
    %v4899 = vand.u32 %v4661, 4294901760
    %v4900 = vsub.f32 %v4661, %v4899
    %4901 = vmatpush1.msra.mxu0 %v4900
    %4902 = vmatprep.subr.mxu0 0.0
    %v4903 = vand.u32 %v4662, 4294901760
    %v4904 = vsub.f32 %v4662, %v4903
    %4905 = vmatpush1.msra.mxu0 %v4904
    %4906 = vmatprep.subr.mxu0 0.0
    %v4907 = vand.u32 %v4663, 4294901760
    %v4908 = vsub.f32 %v4663, %v4907
    %4909 = vmatpush1.msra.mxu0 %v4908
    %4910 = vmatprep.subr.mxu0 0.0
    %v4911 = vand.u32 %v4664, 4294901760
    %v4912 = vsub.f32 %v4664, %v4911
    %4913 = vmatpush1.msra.mxu0 %v4912
    %4914 = vmatprep.subr.mxu0 0.0
    %v4915 = vand.u32 %v4665, 4294901760
    %v4916 = vsub.f32 %v4665, %v4915
    %4917 = vmatpush1.msra.mxu0 %v4916
    %4918 = vmatprep.subr.mxu0 0.0
    %v4919 = vand.u32 %v4666, 4294901760
    %v4920 = vsub.f32 %v4666, %v4919
    %4921 = vmatpush1.msra.mxu0 %v4920
    %4922 = vmatprep.subr.mxu0 0.0
    %4923 = vmatpush1.msra.mxu0 0.0
    %4924 = vmatprep.subr.mxu0 0.0
    %4925 = vmatpush1.msra.mxu0 0.0
    %4926 = vmatprep.subr.mxu0 0.0
    %4927 = vmatpush1.msra.mxu0 0.0
    %4928 = vmatprep.subr.mxu0 0.0
    %4929 = vmatpush1.msra.mxu0 0.0
    %4930 = vmatprep.subr.mxu0 0.0
    %4931 = vmatpush1.msra.mxu0 0.0
    %4932 = vmatprep.subr.mxu0 0.0
    %4933 = vmatpush1.msra.mxu0 0.0
    %4934 = vmatprep.subr.mxu0 0.0
    %4935 = vmatpush1.msra.mxu0 0.0
    %4936 = vmatprep.subr.mxu0 0.0
    %4937 = vmatpush1.msra.mxu0 0.0
    %4938 = vmatprep.subr.mxu0 0.0
    %4939 = vmatpush1.msra.mxu0 0.0
    %4940 = vmatprep.subr.mxu0 0.0
    %4941 = vmatpush1.msra.mxu0 0.0
    %4942 = vmatprep.subr.mxu0 0.0
    %4943 = vmatpush1.msra.mxu0 0.0
    %4944 = vmatprep.subr.mxu0 0.0
    %4945 = vmatpush1.msra.mxu0 0.0
    %4946 = vmatprep.subr.mxu0 0.0
    %4947 = vmatpush1.msra.mxu0 0.0
    %4948 = vmatprep.subr.mxu0 0.0
    %4949 = vmatpush1.msra.mxu0 0.0
    %4950 = vmatprep.subr.mxu0 0.0
    %4951 = vmatpush1.msra.mxu0 0.0
    %4952 = vmatprep.subr.mxu0 0.0
    %4953 = vmatpush1.msra.mxu0 0.0
    %4954 = vmatprep.subr.mxu0 0.0
    %4955 = vmatpush1.msra.mxu0 0.0
    %4956 = vmatprep.subr.mxu0 0.0
    %4957 = vmatpush1.msra.mxu0 0.0
    %4958 = vmatprep.subr.mxu0 0.0
    %4959 = vmatpush1.msra.mxu0 0.0
    %4960 = vmatprep.subr.mxu0 0.0
    %4961 = vmatpush1.msra.mxu0 0.0
    %4962 = vmatprep.subr.mxu0 0.0
    %4963 = vmatpush1.msra.mxu0 0.0
    %4964 = vmatprep.subr.mxu0 0.0
    %4965 = vmatpush1.msra.mxu0 0.0
    %4966 = vmatprep.subr.mxu0 0.0
    %4967 = vmatpush1.msra.mxu0 0.0
    %4968 = vmatprep.subr.mxu0 0.0
    %4969 = vmatpush1.msra.mxu0 0.0
    %4970 = vmatprep.mubr.f32.mxu0 0.0
    %v4971 = vand.u32 %v4675, 4294901760
    %v4972 = vsub.f32 %v4675, %v4971
    %4973 = vmatmul.mubr.f32.gmra.mrb[0].mxu0 %v4972
    %v4974 = vpop.f32.mrb[0].mxu0
    %v4975 = vadd.f32 %v4881, %v4974
    %v4976 = vpop.f32.mrb[0].mxu0
    %4977 = vmatprep.mubr.f32.mxu0 0.0
    %v4978 = vand.u32 %v4678, 4294901760
    %v4979 = vsub.f32 %v4678, %v4978
    %4980 = vmatmul.mubr.f32.gmra.mrb[0].mxu0 %v4979
    %v4981 = vpop.f32.mrb[0].mxu0
    %v4982 = vadd.f32 %v4887, %v4981
    %v4983 = vpop.f32.mrb[0].mxu0
    %4984 = vdwg.mxu0
    %4985 = vmatprep.subr.mxu0 0.0
    %v4986 = vand.u32 %v4659, 4294901760
    %4987 = vmatpush1.msra.mxu0 %v4986
    %4988 = vmatprep.subr.mxu0 0.0
    %v4989 = vand.u32 %v4660, 4294901760
    %4990 = vmatpush1.msra.mxu0 %v4989
    %4991 = vmatprep.subr.mxu0 0.0
    %v4992 = vand.u32 %v4661, 4294901760
    %4993 = vmatpush1.msra.mxu0 %v4992
    %4994 = vmatprep.subr.mxu0 0.0
    %v4995 = vand.u32 %v4662, 4294901760
    %4996 = vmatpush1.msra.mxu0 %v4995
    %4997 = vmatprep.subr.mxu0 0.0
    %v4998 = vand.u32 %v4663, 4294901760
    %4999 = vmatpush1.msra.mxu0 %v4998
    %5000 = vmatprep.subr.mxu0 0.0
    %v5001 = vand.u32 %v4664, 4294901760
    %5002 = vmatpush1.msra.mxu0 %v5001
    %5003 = vmatprep.subr.mxu0 0.0
    %v5004 = vand.u32 %v4665, 4294901760
    %5005 = vmatpush1.msra.mxu0 %v5004
    %5006 = vmatprep.subr.mxu0 0.0
    %v5007 = vand.u32 %v4666, 4294901760
    %5008 = vmatpush1.msra.mxu0 %v5007
    %5009 = vmatprep.subr.mxu0 0.0
    %5010 = vmatpush1.msra.mxu0 0.0
    %5011 = vmatprep.subr.mxu0 0.0
    %5012 = vmatpush1.msra.mxu0 0.0
    %5013 = vmatprep.subr.mxu0 0.0
    %5014 = vmatpush1.msra.mxu0 0.0
    %5015 = vmatprep.subr.mxu0 0.0
    %5016 = vmatpush1.msra.mxu0 0.0
    %5017 = vmatprep.subr.mxu0 0.0
    %5018 = vmatpush1.msra.mxu0 0.0
    %5019 = vmatprep.subr.mxu0 0.0
    %5020 = vmatpush1.msra.mxu0 0.0
    %5021 = vmatprep.subr.mxu0 0.0
    %5022 = vmatpush1.msra.mxu0 0.0
    %5023 = vmatprep.subr.mxu0 0.0
    %5024 = vmatpush1.msra.mxu0 0.0
    %5025 = vmatprep.subr.mxu0 0.0
    %5026 = vmatpush1.msra.mxu0 0.0
    %5027 = vmatprep.subr.mxu0 0.0
    %5028 = vmatpush1.msra.mxu0 0.0
    %5029 = vmatprep.subr.mxu0 0.0
    %5030 = vmatpush1.msra.mxu0 0.0
    %5031 = vmatprep.subr.mxu0 0.0
    %5032 = vmatpush1.msra.mxu0 0.0
    %5033 = vmatprep.subr.mxu0 0.0
    %5034 = vmatpush1.msra.mxu0 0.0
    %5035 = vmatprep.subr.mxu0 0.0
    %5036 = vmatpush1.msra.mxu0 0.0
    %5037 = vmatprep.subr.mxu0 0.0
    %5038 = vmatpush1.msra.mxu0 0.0
    %5039 = vmatprep.subr.mxu0 0.0
    %5040 = vmatpush1.msra.mxu0 0.0
    %5041 = vmatprep.subr.mxu0 0.0
    %5042 = vmatpush1.msra.mxu0 0.0
    %5043 = vmatprep.subr.mxu0 0.0
    %5044 = vmatpush1.msra.mxu0 0.0
    %5045 = vmatprep.subr.mxu0 0.0
    %5046 = vmatpush1.msra.mxu0 0.0
    %5047 = vmatprep.subr.mxu0 0.0
    %5048 = vmatpush1.msra.mxu0 0.0
    %5049 = vmatprep.subr.mxu0 0.0
    %5050 = vmatpush1.msra.mxu0 0.0
    %5051 = vmatprep.subr.mxu0 0.0
    %5052 = vmatpush1.msra.mxu0 0.0
    %5053 = vmatprep.subr.mxu0 0.0
    %5054 = vmatpush1.msra.mxu0 0.0
    %5055 = vmatprep.subr.mxu0 0.0
    %5056 = vmatpush1.msra.mxu0 0.0
    %5057 = vmatprep.mubr.f32.mxu0 0.0
    %v5058 = vand.u32 %v4675, 4294901760
    %v5059 = vsub.f32 %v4675, %v5058
    %v5060 = vand.u32 %v5059, 4294901760
    %5061 = vmatmul.mubr.f32.gmra.mrb[0].mxu0 %v5060
    %v5062 = vpop.f32.mrb[0].mxu0
    %v5063 = vadd.f32 %v4975, %v5062
    %v5064 = vpop.f32.mrb[0].mxu0
    %5065 = vmatprep.mubr.f32.mxu0 0.0
    %v5066 = vand.u32 %v4678, 4294901760
    %v5067 = vsub.f32 %v4678, %v5066
    %v5068 = vand.u32 %v5067, 4294901760
    %5069 = vmatmul.mubr.f32.gmra.mrb[0].mxu0 %v5068
    %v5070 = vpop.f32.mrb[0].mxu0
    %v5071 = vadd.f32 %v4982, %v5070
    %v5072 = vpop.f32.mrb[0].mxu0
    %5073 = vdwg.mxu0
    %5074 = vmatprep.subr.mxu0 0.0
    %v5075 = vand.u32 %v4659, 4294901760
    %v5076 = vsub.f32 %v4659, %v5075
    %v5077 = vand.u32 %v5076, 4294901760
    %5078 = vmatpush1.msra.mxu0 %v5077
    %5079 = vmatprep.subr.mxu0 0.0
    %v5080 = vand.u32 %v4660, 4294901760
    %v5081 = vsub.f32 %v4660, %v5080
    %v5082 = vand.u32 %v5081, 4294901760
    %5083 = vmatpush1.msra.mxu0 %v5082
    %5084 = vmatprep.subr.mxu0 0.0
    %v5085 = vand.u32 %v4661, 4294901760
    %v5086 = vsub.f32 %v4661, %v5085
    %v5087 = vand.u32 %v5086, 4294901760
    %5088 = vmatpush1.msra.mxu0 %v5087
    %5089 = vmatprep.subr.mxu0 0.0
    %v5090 = vand.u32 %v4662, 4294901760
    %v5091 = vsub.f32 %v4662, %v5090
    %v5092 = vand.u32 %v5091, 4294901760
    %5093 = vmatpush1.msra.mxu0 %v5092
    %5094 = vmatprep.subr.mxu0 0.0
    %v5095 = vand.u32 %v4663, 4294901760
    %v5096 = vsub.f32 %v4663, %v5095
    %v5097 = vand.u32 %v5096, 4294901760
    %5098 = vmatpush1.msra.mxu0 %v5097
    %5099 = vmatprep.subr.mxu0 0.0
    %v5100 = vand.u32 %v4664, 4294901760
    %v5101 = vsub.f32 %v4664, %v5100
    %v5102 = vand.u32 %v5101, 4294901760
    %5103 = vmatpush1.msra.mxu0 %v5102
    %5104 = vmatprep.subr.mxu0 0.0
    %v5105 = vand.u32 %v4665, 4294901760
    %v5106 = vsub.f32 %v4665, %v5105
    %v5107 = vand.u32 %v5106, 4294901760
    %5108 = vmatpush1.msra.mxu0 %v5107
    %5109 = vmatprep.subr.mxu0 0.0
    %v5110 = vand.u32 %v4666, 4294901760
    %v5111 = vsub.f32 %v4666, %v5110
    %v5112 = vand.u32 %v5111, 4294901760
    %5113 = vmatpush1.msra.mxu0 %v5112
    %5114 = vmatprep.subr.mxu0 0.0
    %5115 = vmatpush1.msra.mxu0 0.0
    %5116 = vmatprep.subr.mxu0 0.0
    %5117 = vmatpush1.msra.mxu0 0.0
    %5118 = vmatprep.subr.mxu0 0.0
    %5119 = vmatpush1.msra.mxu0 0.0
    %5120 = vmatprep.subr.mxu0 0.0
    %5121 = vmatpush1.msra.mxu0 0.0
    %5122 = vmatprep.subr.mxu0 0.0
    %5123 = vmatpush1.msra.mxu0 0.0
    %5124 = vmatprep.subr.mxu0 0.0
    %5125 = vmatpush1.msra.mxu0 0.0
    %5126 = vmatprep.subr.mxu0 0.0
    %5127 = vmatpush1.msra.mxu0 0.0
    %5128 = vmatprep.subr.mxu0 0.0
    %5129 = vmatpush1.msra.mxu0 0.0
    %5130 = vmatprep.subr.mxu0 0.0
    %5131 = vmatpush1.msra.mxu0 0.0
    %5132 = vmatprep.subr.mxu0 0.0
    %5133 = vmatpush1.msra.mxu0 0.0
    %5134 = vmatprep.subr.mxu0 0.0
    %5135 = vmatpush1.msra.mxu0 0.0
    %5136 = vmatprep.subr.mxu0 0.0
    %5137 = vmatpush1.msra.mxu0 0.0
    %5138 = vmatprep.subr.mxu0 0.0
    %5139 = vmatpush1.msra.mxu0 0.0
    %5140 = vmatprep.subr.mxu0 0.0
    %5141 = vmatpush1.msra.mxu0 0.0
    %5142 = vmatprep.subr.mxu0 0.0
    %5143 = vmatpush1.msra.mxu0 0.0
    %5144 = vmatprep.subr.mxu0 0.0
    %5145 = vmatpush1.msra.mxu0 0.0
    %5146 = vmatprep.subr.mxu0 0.0
    %5147 = vmatpush1.msra.mxu0 0.0
    %5148 = vmatprep.subr.mxu0 0.0
    %5149 = vmatpush1.msra.mxu0 0.0
    %5150 = vmatprep.subr.mxu0 0.0
    %5151 = vmatpush1.msra.mxu0 0.0
    %5152 = vmatprep.subr.mxu0 0.0
    %5153 = vmatpush1.msra.mxu0 0.0
    %5154 = vmatprep.subr.mxu0 0.0
    %5155 = vmatpush1.msra.mxu0 0.0
    %5156 = vmatprep.subr.mxu0 0.0
    %5157 = vmatpush1.msra.mxu0 0.0
    %5158 = vmatprep.subr.mxu0 0.0
    %5159 = vmatpush1.msra.mxu0 0.0
    %5160 = vmatprep.subr.mxu0 0.0
    %5161 = vmatpush1.msra.mxu0 0.0
    %5162 = vmatprep.mubr.f32.mxu0 0.0
    %v5163 = vand.u32 %v4675, 4294901760
    %5164 = vmatmul.mubr.f32.gmra.mrb[0].mxu0 %v5163
    %v5165 = vpop.f32.mrb[0].mxu0
    %v5166 = vadd.f32 %v5063, %v5165
    %v5167 = vpop.f32.mrb[0].mxu0
    %5168 = vmatprep.mubr.f32.mxu0 0.0
    %v5169 = vand.u32 %v4678, 4294901760
    %5170 = vmatmul.mubr.f32.gmra.mrb[0].mxu0 %v5169
    %v5171 = vpop.f32.mrb[0].mxu0
    %v5172 = vadd.f32 %v5071, %v5171
    %v5173 = vpop.f32.mrb[0].mxu0
    %5174 = vdwg.mxu0
    %5175 = vmatprep.subr.mxu0 0.0
    %v5176 = vand.u32 %v4659, 4294901760
    %5177 = vmatpush1.msra.mxu0 %v5176
    %5178 = vmatprep.subr.mxu0 0.0
    %v5179 = vand.u32 %v4660, 4294901760
    %5180 = vmatpush1.msra.mxu0 %v5179
    %5181 = vmatprep.subr.mxu0 0.0
    %v5182 = vand.u32 %v4661, 4294901760
    %5183 = vmatpush1.msra.mxu0 %v5182
    %5184 = vmatprep.subr.mxu0 0.0
    %v5185 = vand.u32 %v4662, 4294901760
    %5186 = vmatpush1.msra.mxu0 %v5185
    %5187 = vmatprep.subr.mxu0 0.0
    %v5188 = vand.u32 %v4663, 4294901760
    %5189 = vmatpush1.msra.mxu0 %v5188
    %5190 = vmatprep.subr.mxu0 0.0
    %v5191 = vand.u32 %v4664, 4294901760
    %5192 = vmatpush1.msra.mxu0 %v5191
    %5193 = vmatprep.subr.mxu0 0.0
    %v5194 = vand.u32 %v4665, 4294901760
    %5195 = vmatpush1.msra.mxu0 %v5194
    %5196 = vmatprep.subr.mxu0 0.0
    %v5197 = vand.u32 %v4666, 4294901760
    %5198 = vmatpush1.msra.mxu0 %v5197
    %5199 = vmatprep.subr.mxu0 0.0
    %5200 = vmatpush1.msra.mxu0 0.0
    %5201 = vmatprep.subr.mxu0 0.0
    %5202 = vmatpush1.msra.mxu0 0.0
    %5203 = vmatprep.subr.mxu0 0.0
    %5204 = vmatpush1.msra.mxu0 0.0
    %5205 = vmatprep.subr.mxu0 0.0
    %5206 = vmatpush1.msra.mxu0 0.0
    %5207 = vmatprep.subr.mxu0 0.0
    %5208 = vmatpush1.msra.mxu0 0.0
    %5209 = vmatprep.subr.mxu0 0.0
    %5210 = vmatpush1.msra.mxu0 0.0
    %5211 = vmatprep.subr.mxu0 0.0
    %5212 = vmatpush1.msra.mxu0 0.0
    %5213 = vmatprep.subr.mxu0 0.0
    %5214 = vmatpush1.msra.mxu0 0.0
    %5215 = vmatprep.subr.mxu0 0.0
    %5216 = vmatpush1.msra.mxu0 0.0
    %5217 = vmatprep.subr.mxu0 0.0
    %5218 = vmatpush1.msra.mxu0 0.0
    %5219 = vmatprep.subr.mxu0 0.0
    %5220 = vmatpush1.msra.mxu0 0.0
    %5221 = vmatprep.subr.mxu0 0.0
    %5222 = vmatpush1.msra.mxu0 0.0
    %5223 = vmatprep.subr.mxu0 0.0
    %5224 = vmatpush1.msra.mxu0 0.0
    %5225 = vmatprep.subr.mxu0 0.0
    %5226 = vmatpush1.msra.mxu0 0.0
    %5227 = vmatprep.subr.mxu0 0.0
    %5228 = vmatpush1.msra.mxu0 0.0
    %5229 = vmatprep.subr.mxu0 0.0
    %5230 = vmatpush1.msra.mxu0 0.0
    %5231 = vmatprep.subr.mxu0 0.0
    %5232 = vmatpush1.msra.mxu0 0.0
    %5233 = vmatprep.subr.mxu0 0.0
    %5234 = vmatpush1.msra.mxu0 0.0
    %5235 = vmatprep.subr.mxu0 0.0
    %5236 = vmatpush1.msra.mxu0 0.0
    %5237 = vmatprep.subr.mxu0 0.0
    %5238 = vmatpush1.msra.mxu0 0.0
    %5239 = vmatprep.subr.mxu0 0.0
    %5240 = vmatpush1.msra.mxu0 0.0
    %5241 = vmatprep.subr.mxu0 0.0
    %5242 = vmatpush1.msra.mxu0 0.0
    %5243 = vmatprep.subr.mxu0 0.0
    %5244 = vmatpush1.msra.mxu0 0.0
    %5245 = vmatprep.subr.mxu0 0.0
    %5246 = vmatpush1.msra.mxu0 0.0
    %5247 = vmatprep.mubr.f32.mxu0 0.0
    %v5248 = vand.u32 %v4675, 4294901760
    %5249 = vmatmul.mubr.f32.gmra.mrb[0].mxu0 %v5248
    %v5250 = vpop.f32.mrb[0].mxu0
    %v5251 = vadd.f32 %v5166, %v5250
    %v5252 = vpop.f32.mrb[0].mxu0
    %5253 = vmatprep.mubr.f32.mxu0 0.0
    %v5254 = vand.u32 %v4678, 4294901760
    %5255 = vmatmul.mubr.f32.gmra.mrb[0].mxu0 %v5254
    %v5256 = vpop.f32.mrb[0].mxu0
    %v5257 = vadd.f32 %v5172, %v5256
    %v5258 = vpop.f32.mrb[0].mxu0
    %5259 = vdwg.mxu0
    %v5260 = vld [vmem:[#allocation13] sm:$0xff]
    %v5261 = vld [vmem:[#allocation13 + $0x8] sm:$0xff]
    %v5262 = vld [vmem:[#allocation13 + $0x10] sm:$0xff]
    %v5263 = vld [vmem:[#allocation13 + $0x18] sm:$0xff]
    %v5264 = vld [vmem:[#allocation13 + $0x20] sm:$0xff]
    %v5265 = vld [vmem:[#allocation13 + $0x28] sm:$0xff]
    %v5266 = vld [vmem:[#allocation13 + $0x30] sm:$0xff]
    %v5267 = vld [vmem:[#allocation13 + $0x38] sm:$0xff]
    %v5268 = vld [vmem:[%s12] sm:$0x1]
    %v5270 = vlaneseq
    %v5271 = vshrl.u32 %v5270, 7
    %v5272 = vsub.s32 0, %v5271
    %v5273 = vrot.slane %v5268, %v5272
    %v5276 = vsel %vm163, %v5251, 0
    %v5279 = vsel %vm163, %v5257, 0
    %5281 = vmatprep.subr.mxu0 0.0
    %v5282 = vand.u32 %v5260, 4294901760
    %5283 = vmatpush1.msra.mxu0 %v5282
    %5284 = vmatprep.subr.mxu0 0.0
    %v5285 = vand.u32 %v5261, 4294901760
    %5286 = vmatpush1.msra.mxu0 %v5285
    %5287 = vmatprep.subr.mxu0 0.0
    %v5288 = vand.u32 %v5262, 4294901760
    %5289 = vmatpush1.msra.mxu0 %v5288
    %5290 = vmatprep.subr.mxu0 0.0
    %v5291 = vand.u32 %v5263, 4294901760
    %5292 = vmatpush1.msra.mxu0 %v5291
    %5293 = vmatprep.subr.mxu0 0.0
    %v5294 = vand.u32 %v5264, 4294901760
    %5295 = vmatpush1.msra.mxu0 %v5294
    %5296 = vmatprep.subr.mxu0 0.0
    %v5297 = vand.u32 %v5265, 4294901760
    %5298 = vmatpush1.msra.mxu0 %v5297
    %5299 = vmatprep.subr.mxu0 0.0
    %v5300 = vand.u32 %v5266, 4294901760
    %5301 = vmatpush1.msra.mxu0 %v5300
    %5302 = vmatprep.subr.mxu0 0.0
    %v5303 = vand.u32 %v5267, 4294901760
    %5304 = vmatpush1.msra.mxu0 %v5303
    %5305 = vmatprep.subr.mxu0 0.0
    %5306 = vmatpush1.msra.mxu0 0.0
    %5307 = vmatprep.subr.mxu0 0.0
    %5308 = vmatpush1.msra.mxu0 0.0
    %5309 = vmatprep.subr.mxu0 0.0
    %5310 = vmatpush1.msra.mxu0 0.0
    %5311 = vmatprep.subr.mxu0 0.0
    %5312 = vmatpush1.msra.mxu0 0.0
    %5313 = vmatprep.subr.mxu0 0.0
    %5314 = vmatpush1.msra.mxu0 0.0
    %5315 = vmatprep.subr.mxu0 0.0
    %5316 = vmatpush1.msra.mxu0 0.0
    %5317 = vmatprep.subr.mxu0 0.0
    %5318 = vmatpush1.msra.mxu0 0.0
    %5319 = vmatprep.subr.mxu0 0.0
    %5320 = vmatpush1.msra.mxu0 0.0
    %5321 = vmatprep.subr.mxu0 0.0
    %5322 = vmatpush1.msra.mxu0 0.0
    %5323 = vmatprep.subr.mxu0 0.0
    %5324 = vmatpush1.msra.mxu0 0.0
    %5325 = vmatprep.subr.mxu0 0.0
    %5326 = vmatpush1.msra.mxu0 0.0
    %5327 = vmatprep.subr.mxu0 0.0
    %5328 = vmatpush1.msra.mxu0 0.0
    %5329 = vmatprep.subr.mxu0 0.0
    %5330 = vmatpush1.msra.mxu0 0.0
    %5331 = vmatprep.subr.mxu0 0.0
    %5332 = vmatpush1.msra.mxu0 0.0
    %5333 = vmatprep.subr.mxu0 0.0
    %5334 = vmatpush1.msra.mxu0 0.0
    %5335 = vmatprep.subr.mxu0 0.0
    %5336 = vmatpush1.msra.mxu0 0.0
    %5337 = vmatprep.subr.mxu0 0.0
    %5338 = vmatpush1.msra.mxu0 0.0
    %5339 = vmatprep.subr.mxu0 0.0
    %5340 = vmatpush1.msra.mxu0 0.0
    %5341 = vmatprep.subr.mxu0 0.0
    %5342 = vmatpush1.msra.mxu0 0.0
    %5343 = vmatprep.subr.mxu0 0.0
    %5344 = vmatpush1.msra.mxu0 0.0
    %5345 = vmatprep.subr.mxu0 0.0
    %5346 = vmatpush1.msra.mxu0 0.0
    %5347 = vmatprep.subr.mxu0 0.0
    %5348 = vmatpush1.msra.mxu0 0.0
    %5349 = vmatprep.subr.mxu0 0.0
    %5350 = vmatpush1.msra.mxu0 0.0
    %5351 = vmatprep.subr.mxu0 0.0
    %5352 = vmatpush1.msra.mxu0 0.0
    %5353 = vmatprep.mubr.f32.mxu0 0.0
    %v5354 = vand.u32 %v5276, 4294901760
    %v5355 = vsub.f32 %v5276, %v5354
    %v5356 = vand.u32 %v5355, 4294901760
    %v5357 = vsub.f32 %v5355, %v5356
    %v5358 = vand.u32 %v5357, 4294901760
    %5359 = vmatmul.mubr.f32.gmra.mrb[0].mxu0 %v5358
    %v5360 = vpop.f32.mrb[0].mxu0
    %v5361 = vadd.f32 %v5273, %v5360
    %v5362 = vpop.f32.mrb[0].mxu0
    %5363 = vmatprep.mubr.f32.mxu0 0.0
    %v5364 = vand.u32 %v5279, 4294901760
    %v5365 = vsub.f32 %v5279, %v5364
    %v5366 = vand.u32 %v5365, 4294901760
    %v5367 = vsub.f32 %v5365, %v5366
    %v5368 = vand.u32 %v5367, 4294901760
    %5369 = vmatmul.mubr.f32.gmra.mrb[0].mxu0 %v5368
    %v5370 = vpop.f32.mrb[0].mxu0
    %v5371 = vadd.f32 %v5273, %v5370
    %v5372 = vpop.f32.mrb[0].mxu0
    %5373 = vdwg.mxu0
    %5374 = vmatprep.subr.mxu0 0.0
    %v5375 = vand.u32 %v5260, 4294901760
    %v5376 = vsub.f32 %v5260, %v5375
    %v5377 = vand.u32 %v5376, 4294901760
    %v5378 = vsub.f32 %v5376, %v5377
    %v5379 = vand.u32 %v5378, 4294901760
    %5380 = vmatpush1.msra.mxu0 %v5379
    %5381 = vmatprep.subr.mxu0 0.0
    %v5382 = vand.u32 %v5261, 4294901760
    %v5383 = vsub.f32 %v5261, %v5382
    %v5384 = vand.u32 %v5383, 4294901760
    %v5385 = vsub.f32 %v5383, %v5384
    %v5386 = vand.u32 %v5385, 4294901760
    %5387 = vmatpush1.msra.mxu0 %v5386
    %5388 = vmatprep.subr.mxu0 0.0
    %v5389 = vand.u32 %v5262, 4294901760
    %v5390 = vsub.f32 %v5262, %v5389
    %v5391 = vand.u32 %v5390, 4294901760
    %v5392 = vsub.f32 %v5390, %v5391
    %v5393 = vand.u32 %v5392, 4294901760
    %5394 = vmatpush1.msra.mxu0 %v5393
    %5395 = vmatprep.subr.mxu0 0.0
    %v5396 = vand.u32 %v5263, 4294901760
    %v5397 = vsub.f32 %v5263, %v5396
    %v5398 = vand.u32 %v5397, 4294901760
    %v5399 = vsub.f32 %v5397, %v5398
    %v5400 = vand.u32 %v5399, 4294901760
    %5401 = vmatpush1.msra.mxu0 %v5400
    %5402 = vmatprep.subr.mxu0 0.0
    %v5403 = vand.u32 %v5264, 4294901760
    %v5404 = vsub.f32 %v5264, %v5403
    %v5405 = vand.u32 %v5404, 4294901760
    %v5406 = vsub.f32 %v5404, %v5405
    %v5407 = vand.u32 %v5406, 4294901760
    %5408 = vmatpush1.msra.mxu0 %v5407
    %5409 = vmatprep.subr.mxu0 0.0
    %v5410 = vand.u32 %v5265, 4294901760
    %v5411 = vsub.f32 %v5265, %v5410
    %v5412 = vand.u32 %v5411, 4294901760
    %v5413 = vsub.f32 %v5411, %v5412
    %v5414 = vand.u32 %v5413, 4294901760
    %5415 = vmatpush1.msra.mxu0 %v5414
    %5416 = vmatprep.subr.mxu0 0.0
    %v5417 = vand.u32 %v5266, 4294901760
    %v5418 = vsub.f32 %v5266, %v5417
    %v5419 = vand.u32 %v5418, 4294901760
    %v5420 = vsub.f32 %v5418, %v5419
    %v5421 = vand.u32 %v5420, 4294901760
    %5422 = vmatpush1.msra.mxu0 %v5421
    %5423 = vmatprep.subr.mxu0 0.0
    %v5424 = vand.u32 %v5267, 4294901760
    %v5425 = vsub.f32 %v5267, %v5424
    %v5426 = vand.u32 %v5425, 4294901760
    %v5427 = vsub.f32 %v5425, %v5426
    %v5428 = vand.u32 %v5427, 4294901760
    %5429 = vmatpush1.msra.mxu0 %v5428
    %5430 = vmatprep.subr.mxu0 0.0
    %5431 = vmatpush1.msra.mxu0 0.0
    %5432 = vmatprep.subr.mxu0 0.0
    %5433 = vmatpush1.msra.mxu0 0.0
    %5434 = vmatprep.subr.mxu0 0.0
    %5435 = vmatpush1.msra.mxu0 0.0
    %5436 = vmatprep.subr.mxu0 0.0
    %5437 = vmatpush1.msra.mxu0 0.0
    %5438 = vmatprep.subr.mxu0 0.0
    %5439 = vmatpush1.msra.mxu0 0.0
    %5440 = vmatprep.subr.mxu0 0.0
    %5441 = vmatpush1.msra.mxu0 0.0
    %5442 = vmatprep.subr.mxu0 0.0
    %5443 = vmatpush1.msra.mxu0 0.0
    %5444 = vmatprep.subr.mxu0 0.0
    %5445 = vmatpush1.msra.mxu0 0.0
    %5446 = vmatprep.subr.mxu0 0.0
    %5447 = vmatpush1.msra.mxu0 0.0
    %5448 = vmatprep.subr.mxu0 0.0
    %5449 = vmatpush1.msra.mxu0 0.0
    %5450 = vmatprep.subr.mxu0 0.0
    %5451 = vmatpush1.msra.mxu0 0.0
    %5452 = vmatprep.subr.mxu0 0.0
    %5453 = vmatpush1.msra.mxu0 0.0
    %5454 = vmatprep.subr.mxu0 0.0
    %5455 = vmatpush1.msra.mxu0 0.0
    %5456 = vmatprep.subr.mxu0 0.0
    %5457 = vmatpush1.msra.mxu0 0.0
    %5458 = vmatprep.subr.mxu0 0.0
    %5459 = vmatpush1.msra.mxu0 0.0
    %5460 = vmatprep.subr.mxu0 0.0
    %5461 = vmatpush1.msra.mxu0 0.0
    %5462 = vmatprep.subr.mxu0 0.0
    %5463 = vmatpush1.msra.mxu0 0.0
    %5464 = vmatprep.subr.mxu0 0.0
    %5465 = vmatpush1.msra.mxu0 0.0
    %5466 = vmatprep.subr.mxu0 0.0
    %5467 = vmatpush1.msra.mxu0 0.0
    %5468 = vmatprep.subr.mxu0 0.0
    %5469 = vmatpush1.msra.mxu0 0.0
    %5470 = vmatprep.subr.mxu0 0.0
    %5471 = vmatpush1.msra.mxu0 0.0
    %5472 = vmatprep.subr.mxu0 0.0
    %5473 = vmatpush1.msra.mxu0 0.0
    %5474 = vmatprep.subr.mxu0 0.0
    %5475 = vmatpush1.msra.mxu0 0.0
    %5476 = vmatprep.subr.mxu0 0.0
    %5477 = vmatpush1.msra.mxu0 0.0
    %5478 = vmatprep.mubr.f32.mxu0 0.0
    %v5479 = vand.u32 %v5276, 4294901760
    %5480 = vmatmul.mubr.f32.gmra.mrb[0].mxu0 %v5479
    %v5481 = vpop.f32.mrb[0].mxu0
    %v5482 = vadd.f32 %v5361, %v5481
    %v5483 = vpop.f32.mrb[0].mxu0
    %5484 = vmatprep.mubr.f32.mxu0 0.0
    %v5485 = vand.u32 %v5279, 4294901760
    %5486 = vmatmul.mubr.f32.gmra.mrb[0].mxu0 %v5485
    %v5487 = vpop.f32.mrb[0].mxu0
    %v5488 = vadd.f32 %v5371, %v5487
    %v5489 = vpop.f32.mrb[0].mxu0
    %5490 = vdwg.mxu0
    %5491 = vmatprep.subr.mxu0 0.0
    %v5492 = vand.u32 %v5260, 4294901760
    %v5493 = vsub.f32 %v5260, %v5492
    %5494 = vmatpush1.msra.mxu0 %v5493
    %5495 = vmatprep.subr.mxu0 0.0
    %v5496 = vand.u32 %v5261, 4294901760
    %v5497 = vsub.f32 %v5261, %v5496
    %5498 = vmatpush1.msra.mxu0 %v5497
    %5499 = vmatprep.subr.mxu0 0.0
    %v5500 = vand.u32 %v5262, 4294901760
    %v5501 = vsub.f32 %v5262, %v5500
    %5502 = vmatpush1.msra.mxu0 %v5501
    %5503 = vmatprep.subr.mxu0 0.0
    %v5504 = vand.u32 %v5263, 4294901760
    %v5505 = vsub.f32 %v5263, %v5504
    %5506 = vmatpush1.msra.mxu0 %v5505
    %5507 = vmatprep.subr.mxu0 0.0
    %v5508 = vand.u32 %v5264, 4294901760
    %v5509 = vsub.f32 %v5264, %v5508
    %5510 = vmatpush1.msra.mxu0 %v5509
    %5511 = vmatprep.subr.mxu0 0.0
    %v5512 = vand.u32 %v5265, 4294901760
    %v5513 = vsub.f32 %v5265, %v5512
    %5514 = vmatpush1.msra.mxu0 %v5513
    %5515 = vmatprep.subr.mxu0 0.0
    %v5516 = vand.u32 %v5266, 4294901760
    %v5517 = vsub.f32 %v5266, %v5516
    %5518 = vmatpush1.msra.mxu0 %v5517
    %5519 = vmatprep.subr.mxu0 0.0
    %v5520 = vand.u32 %v5267, 4294901760
    %v5521 = vsub.f32 %v5267, %v5520
    %5522 = vmatpush1.msra.mxu0 %v5521
    %5523 = vmatprep.subr.mxu0 0.0
    %5524 = vmatpush1.msra.mxu0 0.0
    %5525 = vmatprep.subr.mxu0 0.0
    %5526 = vmatpush1.msra.mxu0 0.0
    %5527 = vmatprep.subr.mxu0 0.0
    %5528 = vmatpush1.msra.mxu0 0.0
    %5529 = vmatprep.subr.mxu0 0.0
    %5530 = vmatpush1.msra.mxu0 0.0
    %5531 = vmatprep.subr.mxu0 0.0
    %5532 = vmatpush1.msra.mxu0 0.0
    %5533 = vmatprep.subr.mxu0 0.0
    %5534 = vmatpush1.msra.mxu0 0.0
    %5535 = vmatprep.subr.mxu0 0.0
    %5536 = vmatpush1.msra.mxu0 0.0
    %5537 = vmatprep.subr.mxu0 0.0
    %5538 = vmatpush1.msra.mxu0 0.0
    %5539 = vmatprep.subr.mxu0 0.0
    %5540 = vmatpush1.msra.mxu0 0.0
    %5541 = vmatprep.subr.mxu0 0.0
    %5542 = vmatpush1.msra.mxu0 0.0
    %5543 = vmatprep.subr.mxu0 0.0
    %5544 = vmatpush1.msra.mxu0 0.0
    %5545 = vmatprep.subr.mxu0 0.0
    %5546 = vmatpush1.msra.mxu0 0.0
    %5547 = vmatprep.subr.mxu0 0.0
    %5548 = vmatpush1.msra.mxu0 0.0
    %5549 = vmatprep.subr.mxu0 0.0
    %5550 = vmatpush1.msra.mxu0 0.0
    %5551 = vmatprep.subr.mxu0 0.0
    %5552 = vmatpush1.msra.mxu0 0.0
    %5553 = vmatprep.subr.mxu0 0.0
    %5554 = vmatpush1.msra.mxu0 0.0
    %5555 = vmatprep.subr.mxu0 0.0
    %5556 = vmatpush1.msra.mxu0 0.0
    %5557 = vmatprep.subr.mxu0 0.0
    %5558 = vmatpush1.msra.mxu0 0.0
    %5559 = vmatprep.subr.mxu0 0.0
    %5560 = vmatpush1.msra.mxu0 0.0
    %5561 = vmatprep.subr.mxu0 0.0
    %5562 = vmatpush1.msra.mxu0 0.0
    %5563 = vmatprep.subr.mxu0 0.0
    %5564 = vmatpush1.msra.mxu0 0.0
    %5565 = vmatprep.subr.mxu0 0.0
    %5566 = vmatpush1.msra.mxu0 0.0
    %5567 = vmatprep.subr.mxu0 0.0
    %5568 = vmatpush1.msra.mxu0 0.0
    %5569 = vmatprep.subr.mxu0 0.0
    %5570 = vmatpush1.msra.mxu0 0.0
    %5571 = vmatprep.mubr.f32.mxu0 0.0
    %v5572 = vand.u32 %v5276, 4294901760
    %v5573 = vsub.f32 %v5276, %v5572
    %5574 = vmatmul.mubr.f32.gmra.mrb[0].mxu0 %v5573
    %v5575 = vpop.f32.mrb[0].mxu0
    %v5576 = vadd.f32 %v5482, %v5575
    %v5577 = vpop.f32.mrb[0].mxu0
    %5578 = vmatprep.mubr.f32.mxu0 0.0
    %v5579 = vand.u32 %v5279, 4294901760
    %v5580 = vsub.f32 %v5279, %v5579
    %5581 = vmatmul.mubr.f32.gmra.mrb[0].mxu0 %v5580
    %v5582 = vpop.f32.mrb[0].mxu0
    %v5583 = vadd.f32 %v5488, %v5582
    %v5584 = vpop.f32.mrb[0].mxu0
    %5585 = vdwg.mxu0
    %5586 = vmatprep.subr.mxu0 0.0
    %v5587 = vand.u32 %v5260, 4294901760
    %5588 = vmatpush1.msra.mxu0 %v5587
    %5589 = vmatprep.subr.mxu0 0.0
    %v5590 = vand.u32 %v5261, 4294901760
    %5591 = vmatpush1.msra.mxu0 %v5590
    %5592 = vmatprep.subr.mxu0 0.0
    %v5593 = vand.u32 %v5262, 4294901760
    %5594 = vmatpush1.msra.mxu0 %v5593
    %5595 = vmatprep.subr.mxu0 0.0
    %v5596 = vand.u32 %v5263, 4294901760
    %5597 = vmatpush1.msra.mxu0 %v5596
    %5598 = vmatprep.subr.mxu0 0.0
    %v5599 = vand.u32 %v5264, 4294901760
    %5600 = vmatpush1.msra.mxu0 %v5599
    %5601 = vmatprep.subr.mxu0 0.0
    %v5602 = vand.u32 %v5265, 4294901760
    %5603 = vmatpush1.msra.mxu0 %v5602
    %5604 = vmatprep.subr.mxu0 0.0
    %v5605 = vand.u32 %v5266, 4294901760
    %5606 = vmatpush1.msra.mxu0 %v5605
    %5607 = vmatprep.subr.mxu0 0.0
    %v5608 = vand.u32 %v5267, 4294901760
    %5609 = vmatpush1.msra.mxu0 %v5608
    %5610 = vmatprep.subr.mxu0 0.0
    %5611 = vmatpush1.msra.mxu0 0.0
    %5612 = vmatprep.subr.mxu0 0.0
    %5613 = vmatpush1.msra.mxu0 0.0
    %5614 = vmatprep.subr.mxu0 0.0
    %5615 = vmatpush1.msra.mxu0 0.0
    %5616 = vmatprep.subr.mxu0 0.0
    %5617 = vmatpush1.msra.mxu0 0.0
    %5618 = vmatprep.subr.mxu0 0.0
    %5619 = vmatpush1.msra.mxu0 0.0
    %5620 = vmatprep.subr.mxu0 0.0
    %5621 = vmatpush1.msra.mxu0 0.0
    %5622 = vmatprep.subr.mxu0 0.0
    %5623 = vmatpush1.msra.mxu0 0.0
    %5624 = vmatprep.subr.mxu0 0.0
    %5625 = vmatpush1.msra.mxu0 0.0
    %5626 = vmatprep.subr.mxu0 0.0
    %5627 = vmatpush1.msra.mxu0 0.0
    %5628 = vmatprep.subr.mxu0 0.0
    %5629 = vmatpush1.msra.mxu0 0.0
    %5630 = vmatprep.subr.mxu0 0.0
    %5631 = vmatpush1.msra.mxu0 0.0
    %5632 = vmatprep.subr.mxu0 0.0
    %5633 = vmatpush1.msra.mxu0 0.0
    %5634 = vmatprep.subr.mxu0 0.0
    %5635 = vmatpush1.msra.mxu0 0.0
    %5636 = vmatprep.subr.mxu0 0.0
    %5637 = vmatpush1.msra.mxu0 0.0
    %5638 = vmatprep.subr.mxu0 0.0
    %5639 = vmatpush1.msra.mxu0 0.0
    %5640 = vmatprep.subr.mxu0 0.0
    %5641 = vmatpush1.msra.mxu0 0.0
    %5642 = vmatprep.subr.mxu0 0.0
    %5643 = vmatpush1.msra.mxu0 0.0
    %5644 = vmatprep.subr.mxu0 0.0
    %5645 = vmatpush1.msra.mxu0 0.0
    %5646 = vmatprep.subr.mxu0 0.0
    %5647 = vmatpush1.msra.mxu0 0.0
    %5648 = vmatprep.subr.mxu0 0.0
    %5649 = vmatpush1.msra.mxu0 0.0
    %5650 = vmatprep.subr.mxu0 0.0
    %5651 = vmatpush1.msra.mxu0 0.0
    %5652 = vmatprep.subr.mxu0 0.0
    %5653 = vmatpush1.msra.mxu0 0.0
    %5654 = vmatprep.subr.mxu0 0.0
    %5655 = vmatpush1.msra.mxu0 0.0
    %5656 = vmatprep.subr.mxu0 0.0
    %5657 = vmatpush1.msra.mxu0 0.0
    %5658 = vmatprep.mubr.f32.mxu0 0.0
    %v5659 = vand.u32 %v5276, 4294901760
    %v5660 = vsub.f32 %v5276, %v5659
    %v5661 = vand.u32 %v5660, 4294901760
    %5662 = vmatmul.mubr.f32.gmra.mrb[0].mxu0 %v5661
    %v5663 = vpop.f32.mrb[0].mxu0
    %v5664 = vadd.f32 %v5576, %v5663
    %v5665 = vpop.f32.mrb[0].mxu0
    %5666 = vmatprep.mubr.f32.mxu0 0.0
    %v5667 = vand.u32 %v5279, 4294901760
    %v5668 = vsub.f32 %v5279, %v5667
    %v5669 = vand.u32 %v5668, 4294901760
    %5670 = vmatmul.mubr.f32.gmra.mrb[0].mxu0 %v5669
    %v5671 = vpop.f32.mrb[0].mxu0
    %v5672 = vadd.f32 %v5583, %v5671
    %v5673 = vpop.f32.mrb[0].mxu0
    %5674 = vdwg.mxu0
    %5675 = vmatprep.subr.mxu0 0.0
    %v5676 = vand.u32 %v5260, 4294901760
    %v5677 = vsub.f32 %v5260, %v5676
    %v5678 = vand.u32 %v5677, 4294901760
    %5679 = vmatpush1.msra.mxu0 %v5678
    %5680 = vmatprep.subr.mxu0 0.0
    %v5681 = vand.u32 %v5261, 4294901760
    %v5682 = vsub.f32 %v5261, %v5681
    %v5683 = vand.u32 %v5682, 4294901760
    %5684 = vmatpush1.msra.mxu0 %v5683
    %5685 = vmatprep.subr.mxu0 0.0
    %v5686 = vand.u32 %v5262, 4294901760
    %v5687 = vsub.f32 %v5262, %v5686
    %v5688 = vand.u32 %v5687, 4294901760
    %5689 = vmatpush1.msra.mxu0 %v5688
    %5690 = vmatprep.subr.mxu0 0.0
    %v5691 = vand.u32 %v5263, 4294901760
    %v5692 = vsub.f32 %v5263, %v5691
    %v5693 = vand.u32 %v5692, 4294901760
    %5694 = vmatpush1.msra.mxu0 %v5693
    %5695 = vmatprep.subr.mxu0 0.0
    %v5696 = vand.u32 %v5264, 4294901760
    %v5697 = vsub.f32 %v5264, %v5696
    %v5698 = vand.u32 %v5697, 4294901760
    %5699 = vmatpush1.msra.mxu0 %v5698
    %5700 = vmatprep.subr.mxu0 0.0
    %v5701 = vand.u32 %v5265, 4294901760
    %v5702 = vsub.f32 %v5265, %v5701
    %v5703 = vand.u32 %v5702, 4294901760
    %5704 = vmatpush1.msra.mxu0 %v5703
    %5705 = vmatprep.subr.mxu0 0.0
    %v5706 = vand.u32 %v5266, 4294901760
    %v5707 = vsub.f32 %v5266, %v5706
    %v5708 = vand.u32 %v5707, 4294901760
    %5709 = vmatpush1.msra.mxu0 %v5708
    %5710 = vmatprep.subr.mxu0 0.0
    %v5711 = vand.u32 %v5267, 4294901760
    %v5712 = vsub.f32 %v5267, %v5711
    %v5713 = vand.u32 %v5712, 4294901760
    %5714 = vmatpush1.msra.mxu0 %v5713
    %5715 = vmatprep.subr.mxu0 0.0
    %5716 = vmatpush1.msra.mxu0 0.0
    %5717 = vmatprep.subr.mxu0 0.0
    %5718 = vmatpush1.msra.mxu0 0.0
    %5719 = vmatprep.subr.mxu0 0.0
    %5720 = vmatpush1.msra.mxu0 0.0
    %5721 = vmatprep.subr.mxu0 0.0
    %5722 = vmatpush1.msra.mxu0 0.0
    %5723 = vmatprep.subr.mxu0 0.0
    %5724 = vmatpush1.msra.mxu0 0.0
    %5725 = vmatprep.subr.mxu0 0.0
    %5726 = vmatpush1.msra.mxu0 0.0
    %5727 = vmatprep.subr.mxu0 0.0
    %5728 = vmatpush1.msra.mxu0 0.0
    %5729 = vmatprep.subr.mxu0 0.0
    %5730 = vmatpush1.msra.mxu0 0.0
    %5731 = vmatprep.subr.mxu0 0.0
    %5732 = vmatpush1.msra.mxu0 0.0
    %5733 = vmatprep.subr.mxu0 0.0
    %5734 = vmatpush1.msra.mxu0 0.0
    %5735 = vmatprep.subr.mxu0 0.0
    %5736 = vmatpush1.msra.mxu0 0.0
    %5737 = vmatprep.subr.mxu0 0.0
    %5738 = vmatpush1.msra.mxu0 0.0
    %5739 = vmatprep.subr.mxu0 0.0
    %5740 = vmatpush1.msra.mxu0 0.0
    %5741 = vmatprep.subr.mxu0 0.0
    %5742 = vmatpush1.msra.mxu0 0.0
    %5743 = vmatprep.subr.mxu0 0.0
    %5744 = vmatpush1.msra.mxu0 0.0
    %5745 = vmatprep.subr.mxu0 0.0
    %5746 = vmatpush1.msra.mxu0 0.0
    %5747 = vmatprep.subr.mxu0 0.0
    %5748 = vmatpush1.msra.mxu0 0.0
    %5749 = vmatprep.subr.mxu0 0.0
    %5750 = vmatpush1.msra.mxu0 0.0
    %5751 = vmatprep.subr.mxu0 0.0
    %5752 = vmatpush1.msra.mxu0 0.0
    %5753 = vmatprep.subr.mxu0 0.0
    %5754 = vmatpush1.msra.mxu0 0.0
    %5755 = vmatprep.subr.mxu0 0.0
    %5756 = vmatpush1.msra.mxu0 0.0
    %5757 = vmatprep.subr.mxu0 0.0
    %5758 = vmatpush1.msra.mxu0 0.0
    %5759 = vmatprep.subr.mxu0 0.0
    %5760 = vmatpush1.msra.mxu0 0.0
    %5761 = vmatprep.subr.mxu0 0.0
    %5762 = vmatpush1.msra.mxu0 0.0
    %5763 = vmatprep.mubr.f32.mxu0 0.0
    %v5764 = vand.u32 %v5276, 4294901760
    %5765 = vmatmul.mubr.f32.gmra.mrb[0].mxu0 %v5764
    %v5766 = vpop.f32.mrb[0].mxu0
    %v5767 = vadd.f32 %v5664, %v5766
    %v5768 = vpop.f32.mrb[0].mxu0
    %5769 = vmatprep.mubr.f32.mxu0 0.0
    %v5770 = vand.u32 %v5279, 4294901760
    %5771 = vmatmul.mubr.f32.gmra.mrb[0].mxu0 %v5770
    %v5772 = vpop.f32.mrb[0].mxu0
    %v5773 = vadd.f32 %v5672, %v5772
    %v5774 = vpop.f32.mrb[0].mxu0
    %5775 = vdwg.mxu0
    %5776 = vmatprep.subr.mxu0 0.0
    %v5777 = vand.u32 %v5260, 4294901760
    %5778 = vmatpush1.msra.mxu0 %v5777
    %5779 = vmatprep.subr.mxu0 0.0
    %v5780 = vand.u32 %v5261, 4294901760
    %5781 = vmatpush1.msra.mxu0 %v5780
    %5782 = vmatprep.subr.mxu0 0.0
    %v5783 = vand.u32 %v5262, 4294901760
    %5784 = vmatpush1.msra.mxu0 %v5783
    %5785 = vmatprep.subr.mxu0 0.0
    %v5786 = vand.u32 %v5263, 4294901760
    %5787 = vmatpush1.msra.mxu0 %v5786
    %5788 = vmatprep.subr.mxu0 0.0
    %v5789 = vand.u32 %v5264, 4294901760
    %5790 = vmatpush1.msra.mxu0 %v5789
    %5791 = vmatprep.subr.mxu0 0.0
    %v5792 = vand.u32 %v5265, 4294901760
    %5793 = vmatpush1.msra.mxu0 %v5792
    %5794 = vmatprep.subr.mxu0 0.0
    %v5795 = vand.u32 %v5266, 4294901760
    %5796 = vmatpush1.msra.mxu0 %v5795
    %5797 = vmatprep.subr.mxu0 0.0
    %v5798 = vand.u32 %v5267, 4294901760
    %5799 = vmatpush1.msra.mxu0 %v5798
    %5800 = vmatprep.subr.mxu0 0.0
    %5801 = vmatpush1.msra.mxu0 0.0
    %5802 = vmatprep.subr.mxu0 0.0
    %5803 = vmatpush1.msra.mxu0 0.0
    %5804 = vmatprep.subr.mxu0 0.0
    %5805 = vmatpush1.msra.mxu0 0.0
    %5806 = vmatprep.subr.mxu0 0.0
    %5807 = vmatpush1.msra.mxu0 0.0
    %5808 = vmatprep.subr.mxu0 0.0
    %5809 = vmatpush1.msra.mxu0 0.0
    %5810 = vmatprep.subr.mxu0 0.0
    %5811 = vmatpush1.msra.mxu0 0.0
    %5812 = vmatprep.subr.mxu0 0.0
    %5813 = vmatpush1.msra.mxu0 0.0
    %5814 = vmatprep.subr.mxu0 0.0
    %5815 = vmatpush1.msra.mxu0 0.0
    %5816 = vmatprep.subr.mxu0 0.0
    %5817 = vmatpush1.msra.mxu0 0.0
    %5818 = vmatprep.subr.mxu0 0.0
    %5819 = vmatpush1.msra.mxu0 0.0
    %5820 = vmatprep.subr.mxu0 0.0
    %5821 = vmatpush1.msra.mxu0 0.0
    %5822 = vmatprep.subr.mxu0 0.0
    %5823 = vmatpush1.msra.mxu0 0.0
    %5824 = vmatprep.subr.mxu0 0.0
    %5825 = vmatpush1.msra.mxu0 0.0
    %5826 = vmatprep.subr.mxu0 0.0
    %5827 = vmatpush1.msra.mxu0 0.0
    %5828 = vmatprep.subr.mxu0 0.0
    %5829 = vmatpush1.msra.mxu0 0.0
    %5830 = vmatprep.subr.mxu0 0.0
    %5831 = vmatpush1.msra.mxu0 0.0
    %5832 = vmatprep.subr.mxu0 0.0
    %5833 = vmatpush1.msra.mxu0 0.0
    %5834 = vmatprep.subr.mxu0 0.0
    %5835 = vmatpush1.msra.mxu0 0.0
    %5836 = vmatprep.subr.mxu0 0.0
    %5837 = vmatpush1.msra.mxu0 0.0
    %5838 = vmatprep.subr.mxu0 0.0
    %5839 = vmatpush1.msra.mxu0 0.0
    %5840 = vmatprep.subr.mxu0 0.0
    %5841 = vmatpush1.msra.mxu0 0.0
    %5842 = vmatprep.subr.mxu0 0.0
    %5843 = vmatpush1.msra.mxu0 0.0
    %5844 = vmatprep.subr.mxu0 0.0
    %5845 = vmatpush1.msra.mxu0 0.0
    %5846 = vmatprep.subr.mxu0 0.0
    %5847 = vmatpush1.msra.mxu0 0.0
    %5848 = vmatprep.mubr.f32.mxu0 0.0
    %v5849 = vand.u32 %v5276, 4294901760
    %5850 = vmatmul.mubr.f32.gmra.mrb[0].mxu0 %v5849
    %v5851 = vpop.f32.mrb[0].mxu0
    %v5852 = vadd.f32 %v5767, %v5851
    %v5853 = vpop.f32.mrb[0].mxu0
    %5854 = vmatprep.mubr.f32.mxu0 0.0
    %v5855 = vand.u32 %v5279, 4294901760
    %5856 = vmatmul.mubr.f32.gmra.mrb[0].mxu0 %v5855
    %v5857 = vpop.f32.mrb[0].mxu0
    %v5858 = vadd.f32 %v5773, %v5857
    %v5859 = vpop.f32.mrb[0].mxu0
    %5860 = vdwg.mxu0
    %v5861 = vmax.f32 %v5852, 0.0
    %v5862 = vmax.f32 %v5858, 0.0
    %5865 = vrot.lane.b32.xlu0 %v5861, 64
    %v5866 = vpop.permute.xlu0 %5865
    %5867 = vrot.lane.b32.xlu0 %v5862, 64
    %v5868 = vpop.permute.xlu0 %5867
    %v5871 = vsel %vm163, %v146, %v5866
    %v5872 = vsel %vm163, %v147, %v5868
    %5873 = vadd.xlane.f32.xlu0 %v5871
    %v5874 = vpop.xlane.xlu0 %5873
    %5875 = vadd.xlane.f32.xlu0 %v5872
    %v5876 = vpop.xlane.xlu0 %5875
    %v5877 = vrcp.pop 128.0
    %v5878 = vmul.f32 %v5874, %v5877
    %v5879 = vmul.f32 %v5876, %v5877
    %v5880 = vsub.f32 %v5871, %v5878
    %v5881 = vsub.f32 %v5872, %v5879
    %v5882 = vmul.f32 %v5880, %v5880
    %v5883 = vmul.f32 %v5881, %v5881
    %5884 = vadd.xlane.f32.xlu0 %v5882
    %v5885 = vpop.xlane.xlu0 %5884
    %5886 = vadd.xlane.f32.xlu0 %v5883
    %v5887 = vpop.xlane.xlu0 %5886
    %v5888 = vmul.f32 %v5885, %v5877
    %v5889 = vmul.f32 %v5887, %v5877
    %v5890 = vadd.f32 %v5888, 1e-05
    %v5891 = vadd.f32 %v5889, 1e-05
    %v5892 = vrsqrt.pop %v5890
    %v5893 = vrsqrt.pop %v5891
    %v5894 = vmul.f32 %v5880, %v5892
    %v5895 = vmul.f32 %v5881, %v5893
    %v5896 = vld [vmem:[%s13] sm:$0x1]
    %v5898 = vlaneseq
    %v5899 = vshrl.u32 %v5898, 7
    %v5900 = vsub.s32 0, %v5899
    %v5901 = vrot.slane %v5896, %v5900
    %v5903 = vmul.f32 %v5894, %v5901
    %v5904 = vmul.f32 %v5895, %v5901
    %v5905 = vld [vmem:[%s14] sm:$0x1]
    %v5907 = vlaneseq
    %v5908 = vshrl.u32 %v5907, 7
    %v5909 = vsub.s32 0, %v5908
    %v5910 = vrot.slane %v5905, %v5909
    %v5912 = vadd.f32 %v5903, %v5910
    %v5913 = vadd.f32 %v5904, %v5910
    %5914 = vst [vmem:[#allocation14] sm:$0xff] %v5912
    %5915 = vst [vmem:[#allocation14 + $0x8] sm:$0xff] %v5913
    // Predicated region
    $region90: #{tpu_custom_call.1} parent=1 // pred_check
      _
    $region91: #{tpu_custom_call.1} parent=1 // pred_check_branch
      %5917 = sbr.rel (0) target = $region93
    $region92: #{tpu_custom_call.1} parent=1 // pred_region
      %s5919 = ssub.s32 256, 256
      %5920 = vsyncadd [#allocation4], %s5919
      %s5921 = sshll.u32 [#allocation14], 4
      %s5922 = int_to_ptr.vmem [resolvable:$true] %s5921
      %5927 = dma.vmem_to_hbm [thread:$0]  %s5922, 256, %s15, [#allocation4], 128, 128, 8
    $region93: #{tpu_custom_call.1} parent=1 // pred_fallthru
      _
    // Predicated region
    $region94: #{tpu_custom_call.1} parent=1 // pred_check
      _
    $region95: #{tpu_custom_call.1} parent=1 // pred_check_branch
      %5929 = sbr.rel (0) target = $region97
    $region96: #{tpu_custom_call.1} parent=1 // pred_region
      %5930 = dma.done [#allocation4], 256
    $region97: #{tpu_custom_call.1} parent=1 // pred_fallthru
      _
    %5931 = vsyncpa [#allocation3], 1
    %5932 = vsyncpa [#allocation6], 1
    %5933 = vsyncpa [#allocation9], 1
    %5934 = vsyncpa [#allocation12], 1
    %5935 = vsyncpa [#allocation4], 1

</llo_original>
